<compile_context>
chip_gen: v5e
topology: v5e:2x2
jax: 0.10.0
libtpu: 0.0.40
codegen_flags: <defaults>
</compile_context>

<pallas_src>
import functools

import jax
import jax.numpy as jnp
from jax import lax
from jax.experimental import pallas as pl
from jax.experimental.pallas import tpu as pltpu


def _round_up(x, m):
    return ((x + m - 1) // m) * m


@functools.lru_cache(maxsize=None)
def _default_vmem_limit():
    # Size the scoped-VMEM budget per generation (v5e/v6e: 128 MiB physical,
    # v7x: 64 MiB); leave headroom for double-buffered BlockSpec inputs.
    try:
        info = pltpu.get_tpu_info()
        cap = getattr(info, "vmem_capacity_bytes", None)
        if cap:
            return int(min(cap * 0.85, 112 * 1024 * 1024))
    except Exception:
        pass
    return 48 * 1024 * 1024


# ----------------------------------------------------------------------------
# Kernel 1: fused-gate masked LSTM — hidden state at the last valid timestep.
#   per grid step (s, i):
#     len_ref : (Bt, 1)      i32   per-row valid length (0 for padded rows)
#     x_ref   : (T, Bt, D)   bf16  TIME-MAJOR input tile
#     wx_ref  : (D, 4Hp)     bf16  fused, per-gate lane-padded weights [i|f|g|o]
#     wh_ref  : (Hp, 4Hp)    bf16
#     b_ref   : (1, 4Hp)     f32
#   out:
#     h_out_ref : (Bt, Hp)   f32   h at last valid step (pack_padded semantics)
#   scratch:
#     xp_sc : (T, Bt, 4Hp)   bf16  hoisted input projection (time-major)
#     h_sc, c_sc : (Bt, Hp)  f32   recurrent state
# ----------------------------------------------------------------------------
def _lstm_kernel(len_ref, x_ref, wx_ref, wh_ref, b_ref, h_out_ref,
                 xp_sc, h_sc, c_sc, *, n_steps):
    T, Bt, D = x_ref.shape
    Hp = wh_ref.shape[0]
    H4 = wx_ref.shape[1]

    # ---- hoisted fused input projection: ONE (T*Bt, D) @ (D, 4Hp) matmul -----
    # x is time-major and Bt % 16 == 0, so the leading-dim collapse is
    # layout-free and the per-step read below is a contiguous leading slice.
    x2d = x_ref[...].reshape(T * Bt, D)                             # bf16
    xp = jnp.dot(x2d, wx_ref[...], preferred_element_type=jnp.float32)
    xp_sc[...] = xp.reshape(T, Bt, H4).astype(jnp.bfloat16)         # bf16: half VMEM

    # hoisted loads — never reloaded inside the time loop
    wh = wh_ref[...]                                                # (Hp, 4Hp) bf16
    bias = b_ref[...]                                               # (1, 4Hp)  f32
    lens = len_ref[...]                                             # (Bt, 1)   i32

    h_sc[...] = jnp.zeros_like(h_sc)
    c_sc[...] = jnp.zeros_like(c_sc)

    # ---- serial recurrence: one (Bt,Hp)x(Hp,4Hp) matmul + gate math per step -
    def step(t, carry):
        h = h_sc[...]
        c = c_sc[...]
        g = (xp_sc[t].astype(jnp.float32) + bias
             + jnp.dot(h.astype(jnp.bfloat16), wh,
                       preferred_element_type=jnp.float32))
        i_g = jax.nn.sigmoid(g[:, 0 * Hp:1 * Hp])
        f_g = jax.nn.sigmoid(g[:, 1 * Hp:2 * Hp])
        g_g = jnp.tanh(g[:, 2 * Hp:3 * Hp])
        o_g = jax.nn.sigmoid(g[:, 3 * Hp:4 * Hp])
        c_new = f_g * c + i_g * g_g
        h_new = o_g * jnp.tanh(c_new)
        valid = lens > t                                            # (Bt, 1) bool
        h_sc[...] = jnp.where(valid, h_new, h)
        c_sc[...] = jnp.where(valid, c_new, c)
        return carry

    # Short fixed loops are unrolled (LLO-visible); real-scale T~100 stays
    # rolled so code size / vreg pressure stay bounded.
    lax.fori_loop(0, n_steps, step, 0, unroll=(n_steps <= 16))

    h_out_ref[...] = h_sc[...]


def lstm_last_hidden(x, lengths, wx, wh, b, *, batch_tile=128,
                     vmem_limit_bytes=None):
    """Stacked masked LSTM.

    x       : (S, B, T, D) f32  — S independent (weight-set, batch) problems
    lengths : (S, B) int
    wx      : (S, D, 4H), wh: (S, H, 4H), b: (S, 1, 4H)   (gate order i|f|g|o)
    returns : (S, B, H) f32 — hidden state at the last valid timestep.
    """
    S, B, T, D = x.shape
    H = wh.shape[1]
    Hp = _round_up(H, 128)                  # per-gate lane-aligned width
    H4 = 4 * Hp

    # ---- per-gate lane padding of the fused weights (zero pads are inert) ----
    def pad_gates(w):
        parts = [w[..., k * H:(k + 1) * H] for k in range(4)]
        parts = [jnp.pad(p, [(0, 0)] * (p.ndim - 1) + [(0, Hp - H)]) for p in parts]
        return jnp.concatenate(parts, axis=-1)

    wx_p = pad_gates(wx).astype(jnp.bfloat16)                                # (S, D, 4Hp)
    wh_p = pad_gates(jnp.pad(wh, ((0, 0), (0, Hp - H), (0, 0)))).astype(jnp.bfloat16)
    b_p = pad_gates(b).astype(jnp.float32)                                   # (S, 1, 4Hp)

    # ---- tile / pad sizes (NO full-size fallback: always pad to the tile) ----
    Bt = min(batch_tile, _round_up(B, 16))
    Bt = _round_up(max(Bt, 16), 16)         # bf16 sublane packing => multiple of 16
    Bp = _round_up(B, Bt)

    # time-major bf16 input: halves DMA, makes the per-step xp read contiguous.
    # TODO(synk): feed the gloss-refinement tensors time-major end-to-end to
    # drop this XLA transpose of the activation tensor entirely.
    x_tm = jnp.swapaxes(x, 1, 2).astype(jnp.bfloat16)            # (S, T, B, D)
    x_tm = jnp.pad(x_tm, ((0, 0), (0, 0), (0, Bp - B), (0, 0)))
    lens = jnp.pad(lengths.astype(jnp.int32), ((0, 0), (0, Bp - B)))  # pad rows: len 0
    lens = lens.reshape(S, Bp, 1)

    if vmem_limit_bytes is None:
        vmem_limit_bytes = _default_vmem_limit()

    kernel = functools.partial(_lstm_kernel, n_steps=T)
    out = pl.pallas_call(
        kernel,
        grid=(S, Bp // Bt),
        in_specs=[
            pl.BlockSpec((None, Bt, 1), lambda s, i: (s, i, 0)),
            pl.BlockSpec((None, T, Bt, D), lambda s, i: (s, 0, i, 0)),
            pl.BlockSpec((None, D, H4), lambda s, i: (s, 0, 0)),    # resident per s
            pl.BlockSpec((None, Hp, H4), lambda s, i: (s, 0, 0)),   # resident per s
            pl.BlockSpec((None, 1, H4), lambda s, i: (s, 0, 0)),    # resident per s
        ],
        out_specs=pl.BlockSpec((None, Bt, Hp), lambda s, i: (s, i, 0)),
        out_shape=jax.ShapeDtypeStruct((S, Bp, Hp), jnp.float32),
        scratch_shapes=[pltpu.VMEM((T, Bt, H4), jnp.bfloat16),
                        pltpu.VMEM((Bt, Hp), jnp.float32),
                        pltpu.VMEM((Bt, Hp), jnp.float32)],
        compiler_params=pltpu.CompilerParams(
            dimension_semantics=("parallel", "parallel"),
            vmem_limit_bytes=vmem_limit_bytes),
    )(lens, x_tm, wx_p, wh_p, b_p)
    return out[:, :B, :H]


# ----------------------------------------------------------------------------
# Kernel 2: d[g, p, :] = sum_s c[g, p, s, :] * alpha1[g, p, s]
#   presented as lane/sublane-dense (G*P, H) row tiles (512 rows per step).
# TODO(synk): fuse the jnp.take gather chain into this kernel with
#   PrefetchScalarGridSpec (SMEM index tables + in-kernel row gather) so the
#   (G, P, S, H) intermediate never round-trips HBM.
# ----------------------------------------------------------------------------
def _weighted_sum_kernel(c_ref, a_ref, d_ref):
    d_ref[...] = jnp.sum(c_ref[...] * a_ref[...], axis=1)          # (Rt, H)


def weighted_sum(c, a, *, row_tile=512):
    G, P, S, H = c.shape
    R = G * P
    rt = _round_up(min(row_tile, _round_up(R, 8)), 8)
    Rp = _round_up(R, rt)
    c2 = jnp.pad(c.reshape(R, S, H).astype(jnp.float32),
                 ((0, Rp - R), (0, 0), (0, 0)))
    a2 = jnp.pad(a.reshape(R, S, 1).astype(jnp.float32),
                 ((0, Rp - R), (0, 0), (0, 0)))
    out = pl.pallas_call(
        _weighted_sum_kernel,
        grid=(Rp // rt,),
        in_specs=[pl.BlockSpec((rt, S, H), lambda r: (r, 0, 0)),
                  pl.BlockSpec((rt, S, 1), lambda r: (r, 0, 0))],
        out_specs=pl.BlockSpec((rt, H), lambda r: (r, 0)),
        out_shape=jax.ShapeDtypeStruct((Rp, H), jnp.float32),
        compiler_params=pltpu.CompilerParams(dimension_semantics=("parallel",)),
    )(c2, a2)
    return out[:R].reshape(G, P, H)


# ----------------------------------------------------------------------------
# Kernel 3: exact-row match index (replaces the python loop over all glosses).
#   Chunked over the gloss axis (128 glosses / step); the output block is a
#   resident running-max accumulator.  The W reduction is STREAMED: only an
#   (R, Gt) count tensor stays live, never (R, Gt, W).
#   index[r] = (i + 1) of the LAST gloss_id row equal to glosses[r], else 0.
# ----------------------------------------------------------------------------
def _gloss_match_kernel(gl_ref, gidT_ref, idx_ref, *, n_words):
    gc = pl.program_id(0)

    @pl.when(gc == 0)
    def _():
        idx_ref[...] = jnp.zeros_like(idx_ref)

    gl = gl_ref[...]                                   # (R, W)  i32, resident
    gidT = gidT_ref[...]                               # (W, Gt) i32 chunk
    R = gl.shape[0]
    Gt = gidT.shape[1]

    counts = jnp.zeros((R, Gt), jnp.int32)
    for w in range(n_words):                           # streamed W reduction
        counts = counts + (gl[:, w:w + 1] == gidT[w:w + 1, :]).astype(jnp.int32)

    ids = lax.broadcasted_iota(jnp.int32, (R, Gt), 1) + gc * Gt + 1
    matched = jnp.where(counts == n_words, ids, 0)
    idx_ref[...] = jnp.maximum(idx_ref[...],
                               jnp.max(matched, axis=-1, keepdims=True))


def gloss_match_index(glosses_flat, gloss_id, *, g_tile=128):
    R, W = glosses_flat.shape
    G = gloss_id.shape[0]
    if G > g_tile:
        gt = _round_up(g_tile, 128)
        Gp = _round_up(G, gt)
    else:
        gt, Gp = G, G
    # Transposed gloss table (W, Gp); padded glosses get a -1 sentinel so they
    # can never produce a spurious full-row match.
    gidT = jnp.pad(gloss_id.astype(jnp.int32).T, ((0, 0), (0, Gp - G)),
                   constant_values=-1)
    out = pl.pallas_call(
        functools.partial(_gloss_match_kernel, n_words=W),
        grid=(Gp // gt,),
        in_specs=[pl.BlockSpec((R, W), lambda g: (0, 0)),      # resident
                  pl.BlockSpec((W, gt), lambda g: (0, g))],
        out_specs=pl.BlockSpec((R, 1), lambda g: (0, 0)),      # resident accumulator
        out_shape=jax.ShapeDtypeStruct((R, 1), jnp.int32),
        compiler_params=pltpu.CompilerParams(dimension_semantics=("arbitrary",)),
    )(glosses_flat.astype(jnp.int32), gidT)
    return out[:, 0]


# ----------------------------------------------------------------------------
# Parameter construction (deterministic, synthetic) — fused-gate layout.
# ----------------------------------------------------------------------------
def init_lstm(key, in_dim, hid):
    ks = jax.random.split(key, 3)
    w = lambda k, shp: (0.1 * jax.random.normal(k, shp)).astype(jnp.float32)
    # Single fused bias; PyTorch nn.LSTM has b_ih + b_hh which simply add, so
    # real checkpoints must be imported as their sum.
    return {"wx": w(ks[0], (in_dim, 4 * hid)),     # [i | f | g | o]
            "wh": w(ks[1], (hid, 4 * hid)),
            "b": w(ks[2], (1, 4 * hid))}


# ----------------------------------------------------------------------------
# Forward pass (mode == 'train' branch of Modelmy.forward)
# ----------------------------------------------------------------------------
def modelmy_forward(params, aux, batch):
    inputs_f, inputs_b, sense_ids, glosses, sense_masks, pos_f, pos_b = batch
    B = inputs_f.shape[0]
    H = params["lstm2"]["wh"].shape[0]

    # sequence lengths
    f_len = jnp.maximum(jnp.sum(inputs_f != 0, axis=-1), 1)
    b_len = jnp.maximum(jnp.sum(inputs_b != 0, axis=-1), 1)

    # embeddings (dropout == identity: deterministic / inference)
    f_emb = jnp.take(params["glove"], inputs_f, axis=0)
    b_emb = jnp.take(params["glove"], inputs_b, axis=0)
    pf_emb = jnp.take(params["pos_emb"], pos_f, axis=0)
    pb_emb = jnp.take(params["pos_emb"], pos_b, axis=0)
    f_cat = jnp.concatenate([f_emb, pf_emb], axis=-1)
    b_cat = jnp.concatenate([b_emb, pb_emb], axis=-1)

    # forward + backward sentence LSTMs fused into ONE pallas_call (stacked on
    # a leading "parallel" grid axis that also selects the weight set).
    if f_cat.shape == b_cat.shape:
        x_fb = jnp.stack([f_cat, b_cat], axis=0)               # (2, B, T, D)
        len_fb = jnp.stack([f_len, b_len], axis=0)             # (2, B)
        wx_fb = jnp.stack([params["lstm0"]["wx"], params["lstm1"]["wx"]])
        wh_fb = jnp.stack([params["lstm0"]["wh"], params["lstm1"]["wh"]])
        b_fb = jnp.stack([params["lstm0"]["b"], params["lstm1"]["b"]])
        h_fb = lstm_last_hidden(x_fb, len_fb, wx_fb, wh_fb, b_fb,
                                batch_tile=params["sent_tile"])
        fwd_t, bwd_t = h_fb[0], h_fb[1]
    else:  # n_step_f != n_step_b: fall back to two calls
        p0, p1 = params["lstm0"], params["lstm1"]
        fwd_t = lstm_last_hidden(f_cat[None], f_len[None],
                                 p0["wx"][None], p0["wh"][None], p0["b"][None],
                                 batch_tile=params["sent_tile"])[0]
        bwd_t = lstm_last_hidden(b_cat[None], b_len[None],
                                 p1["wx"][None], p1["wh"][None], p1["b"][None],
                                 batch_tile=params["sent_tile"])[0]
    sentence = jnp.maximum(fwd_t, bwd_t)

    # --------- gloss compression (train branch) ---------
    gloss_id = aux["gloss_id"]                                 # (G, MW)
    G, MW = gloss_id.shape
    S = aux["word_to_sense_id"].shape[1]
    p2 = params["lstm2"]

    def gloss_lstm(inp, lens):
        return lstm_last_hidden(inp[None], lens[None],
                                p2["wx"][None], p2["wh"][None], p2["b"][None],
                                batch_tile=params["gloss_tile"])[0]

    all_gloss_len = jnp.sum(gloss_id != 0, axis=-1)
    input_g = jnp.take(params["glove"], gloss_id, axis=0)      # (G, MW, H)
    g2w_mask = aux["gloss_to_word_mask"]                       # (G, MW) i32

    alpha = jnp.where(aux["sense_mask"] == 0, 0.0, aux["init_alpha"])  # (G,P,S)
    mask = jnp.broadcast_to(jnp.sum(alpha, axis=-1, keepdims=True), alpha.shape)
    zeros_a = jnp.zeros_like(alpha)
    ones_a = jnp.ones_like(alpha)

    # alpha1 is loop-invariant in the original (self.alpha never changes inside
    # forward), so it is hoisted out of the 3-iteration loop.
    temp = jnp.where(mask == 0, ones_a, alpha)
    alpha1 = jnp.where(mask == 0, zeros_a,
                       temp / jnp.sum(temp, axis=-1, keepdims=True))

    for _ in range(3):
        g = gloss_lstm(input_g, all_gloss_len)                          # (G, H)
        g_pad = jnp.concatenate([jnp.zeros((1, H), jnp.float32), g], axis=0)
        a = jnp.take(g_pad, aux["sense_to_gloss_id"], axis=0)           # (NS, H)
        a_pad = jnp.concatenate([jnp.zeros((1, H), jnp.float32), a], axis=0)
        b = jnp.take(a_pad, aux["word_to_sense_id"], axis=0)            # (Wd, S, H)
        b_pad = jnp.concatenate([jnp.zeros((1, S, H), jnp.float32), b], axis=0)
        c = jnp.take(b_pad, aux["gloss_to_word_id"], axis=0)            # (G, P, S, H)

        d = weighted_sum(c, alpha1)                                     # (G, P, H)
        d_pad = jnp.concatenate([jnp.zeros((G, 1, H), jnp.float32), d], axis=1)
        idx3 = jnp.broadcast_to(g2w_mask[:, :, None], (G, MW, H))
        f = jnp.take_along_axis(d_pad, idx3, axis=1)                    # (G, MW, H)
        input_g = jnp.where(g2w_mask[:, :, None] == 0, input_g, f)

    alpha2 = jnp.where(mask == 0, zeros_a,
                       alpha1 / jnp.sum(alpha1, axis=-1, keepdims=True))
    output_g = gloss_lstm(input_g, all_gloss_len)                       # (G, H)

    # --------- exact gloss matching + gather ---------
    glosses_flat = glosses.reshape(B * S, MW)
    index = gloss_match_index(glosses_flat, gloss_id)                   # (B*S,)
    og_pad = jnp.concatenate([jnp.zeros((1, H), jnp.float32), output_g], axis=0)
    all_gloss = jnp.take(og_pad, index, axis=0).reshape(B, S, H)

    return sentence, sense_ids, all_gloss, sense_masks, output_g, alpha2


# ----------------------------------------------------------------------------
# main
# ----------------------------------------------------------------------------
if __name__ == "__main__":
    key = jax.random.PRNGKey(0)

    # small config (original hard-coded values in parentheses)
    B = 2          # batch
    Tf = Tb = 8    # n_step_f / n_step_b
    V = 50         # glove vocab
    EMB = 32       # embedding_size (300)
    HD = 32        # LSTMHD (300) — must equal EMB, as in the original
    G = 16         # number of glosses (2700)
    MW = 8         # max_gloss_words (100)
    S = 4          # max_n_sense
    P = 6          # word-slots per gloss (hard-coded 6)
    Wd = 10        # number of words (654)
    NS = 20        # total number of senses

    keys = jax.random.split(key, 20)

    glove = (0.1 * jax.random.normal(keys[0], (V, EMB))).astype(jnp.float32)
    glove = glove.at[0].set(0.0)
    pos_emb = (0.1 * jax.random.normal(keys[1], (16, 8))).astype(jnp.float32)
    pos_emb = pos_emb.at[0].set(0.0)        # padding_idx=0

    params = {
        "HD": HD,
        "sent_tile": 128,                   # sentence-LSTM batch tile
        "gloss_tile": 128,                  # gloss-LSTM gloss-axis tile
        "glove": glove,
        "pos_emb": pos_emb,
        "lstm0": init_lstm(keys[2], EMB + 8, HD),
        "lstm1": init_lstm(keys[3], EMB + 8, HD),
        "lstm2": init_lstm(keys[4], EMB, HD),
    }

    # auxiliary matrices
    gl_full = jax.random.randint(keys[5], (G, MW), 1, V)
    lens_g = 3 + (jnp.arange(G) % (MW - 3))
    gloss_id = jnp.where(jnp.arange(MW)[None, :] < lens_g[:, None],
                         gl_full, 0).astype(jnp.int32)

    aux = {
        "gloss_id": gloss_id,                                               # (G, MW)
        "sense_to_gloss_id": ((jnp.arange(NS) % G) + 1).astype(jnp.int32),  # (NS,)
        "word_to_sense_id": jax.random.randint(keys[6], (Wd, S), 0, NS + 1).astype(jnp.int32),
        "gloss_to_word_id": jax.random.randint(keys[7], (G, P), 0, Wd + 1).astype(jnp.int32),
        "gloss_to_word_mask": jax.random.randint(keys[8], (G, MW), 0, P + 1).astype(jnp.int32),
        "sense_mask": (jax.random.uniform(keys[9], (G, P, S)) > 0.3).astype(jnp.float32),
        "init_alpha": jax.random.uniform(keys[10], (G, P, S),
                                         minval=0.1, maxval=1.0).astype(jnp.float32),
    }

    # batch data
    inputs_f = jax.random.randint(keys[11], (B, Tf), 1, V).astype(jnp.int32)
    inputs_f = inputs_f.at[0, 6:].set(0)    # some padding
    inputs_b = jax.random.randint(keys[12], (B, Tb), 1, V).astype(jnp.int32)
    inputs_b = inputs_b.at[1, 5:].set(0)
    pos_f = jax.random.randint(keys[13], (B, Tf), 1, 16).astype(jnp.int32)
    pos_b = jax.random.randint(keys[14], (B, Tb), 1, 16).astype(jnp.int32)
    sense_ids = jnp.arange(B, dtype=jnp.int32)
    sense_masks = jnp.ones((B, S), jnp.float32)
    glosses = jnp.take(gloss_id, jnp.arange(B * S) % G, axis=0).reshape(B, S, MW)
    glosses = glosses.at[0, 0].set(0)       # one non-matching row -> index 0

    batch = (inputs_f, inputs_b, sense_ids, glosses, sense_masks, pos_f, pos_b)

    outs = modelmy_forward(params, aux, batch)
    outs = jax.block_until_ready(outs)

    sentence, sids, all_gloss, smask, output_g, alpha2 = outs
    assert sentence.shape == (B, HD)
    assert all_gloss.shape == (B, S, HD)
    assert output_g.shape == (G, HD)
    assert alpha2.shape == (G, P, S)
    print("KERNEL_OK")
</pallas_src>

<mosaic_0001>
module attributes {stable_mosaic.version = 11 : i64} {
  func.func @_lstm_kernel(%arg0: i32, %arg1: i32, %arg2: memref<1x16x1xi32, #tpu.memory_space<vmem>>, %arg3: memref<1x8x16x40xbf16, #tpu.memory_space<vmem>>, %arg4: memref<1x40x512xbf16, #tpu.memory_space<vmem>>, %arg5: memref<1x128x512xbf16, #tpu.memory_space<vmem>>, %arg6: memref<1x1x512xf32, #tpu.memory_space<vmem>>, %arg7: memref<1x16x128xf32, #tpu.memory_space<vmem>>, %arg8: memref<8x16x512xbf16, #tpu.memory_space<vmem>>, %arg9: memref<16x128xf32, #tpu.memory_space<vmem>>, %arg10: memref<16x128xf32, #tpu.memory_space<vmem>>) attributes {dimension_semantics = [#tpu.dimension_semantics<parallel>, #tpu.dimension_semantics<parallel>], iteration_bounds = array<i64: 2, 1>, scalar_prefetch = 0 : i64, scratch_operands = 3 : i64, tpu.core_type = #tpu.core_type<tc>, window_params = [{transform_indices = @transform_0, window_bounds = array<i64: 1, 16, 1>}, {transform_indices = @transform_1, window_bounds = array<i64: 1, 8, 16, 40>}, {transform_indices = @transform_2, window_bounds = array<i64: 1, 40, 512>}, {transform_indices = @transform_3, window_bounds = array<i64: 1, 128, 512>}, {transform_indices = @transform_4, window_bounds = array<i64: 1, 1, 512>}, {transform_indices = @transform_5, window_bounds = array<i64: 1, 16, 128>}]} {
    %c0 = arith.constant 0 : index
    %c0_0 = arith.constant 0 : index
    %c0_1 = arith.constant 0 : index
    %c0_2 = arith.constant 0 : index
    %0 = vector.load %arg3[%c0, %c0_0, %c0_1, %c0_2] : memref<1x8x16x40xbf16, #tpu.memory_space<vmem>>, vector<1x8x16x40xbf16>
    %1 = vector.shape_cast %0 : vector<1x8x16x40xbf16> to vector<8x16x40xbf16>
    %2 = vector.shape_cast %1 : vector<8x16x40xbf16> to vector<128x40xbf16>
    %c0_3 = arith.constant 0 : index
    %c0_4 = arith.constant 0 : index
    %c0_5 = arith.constant 0 : index
    %3 = vector.load %arg4[%c0_3, %c0_4, %c0_5] : memref<1x40x512xbf16, #tpu.memory_space<vmem>>, vector<1x40x512xbf16>
    %4 = vector.shape_cast %3 : vector<1x40x512xbf16> to vector<40x512xbf16>
    %cst = arith.constant dense<0.000000e+00> : vector<128x512xf32>
    %5 = tpu.matmul %2, %4, %cst {dimension_numbers = #tpu.dot_dimension_numbers<[1], [0], [0], [1], [0, 0, 1, 1], [], []>} : vector<128x40xbf16>, vector<40x512xbf16>, vector<128x512xf32> -> vector<128x512xf32>
    %6 = vector.shape_cast %5 : vector<128x512xf32> to vector<8x16x512xf32>
    %7 = arith.truncf %6 : vector<8x16x512xf32> to vector<8x16x512xbf16>
    %c0_6 = arith.constant 0 : index
    %c0_7 = arith.constant 0 : index
    %c0_8 = arith.constant 0 : index
    %8 = vector.load %arg8[%c0_6, %c0_7, %c0_8] : memref<8x16x512xbf16, #tpu.memory_space<vmem>>, vector<8x16x512xbf16>
    tpu.vector_store %arg8[%c0_6, %c0_7, %c0_8], %7 {strides = array<i32>} : memref<8x16x512xbf16, #tpu.memory_space<vmem>>, vector<8x16x512xbf16>,
    %c0_9 = arith.constant 0 : index
    %c0_10 = arith.constant 0 : index
    %c0_11 = arith.constant 0 : index
    %9 = vector.load %arg5[%c0_9, %c0_10, %c0_11] : memref<1x128x512xbf16, #tpu.memory_space<vmem>>, vector<1x128x512xbf16>
    %10 = vector.shape_cast %9 : vector<1x128x512xbf16> to vector<128x512xbf16>
    %c0_12 = arith.constant 0 : index
    %c0_13 = arith.constant 0 : index
    %c0_14 = arith.constant 0 : index
    %11 = vector.load %arg6[%c0_12, %c0_13, %c0_14] : memref<1x1x512xf32, #tpu.memory_space<vmem>>, vector<1x1x512xf32>
    %12 = vector.shape_cast %11 : vector<1x1x512xf32> to vector<1x512xf32>
    %c0_15 = arith.constant 0 : index
    %c0_16 = arith.constant 0 : index
    %c0_17 = arith.constant 0 : index
    %13 = vector.load %arg2[%c0_15, %c0_16, %c0_17] : memref<1x16x1xi32, #tpu.memory_space<vmem>>, vector<1x16x1xi32>
    %14 = vector.shape_cast %13 : vector<1x16x1xi32> to vector<16x1xi32>
    %cst_18 = arith.constant 0.000000e+00 : f32
    %15 = vector.broadcast %cst_18 : f32 to vector<16x128xf32>
    %c0_19 = arith.constant 0 : index
    %c0_20 = arith.constant 0 : index
    %16 = vector.load %arg9[%c0_19, %c0_20] : memref<16x128xf32, #tpu.memory_space<vmem>>, vector<16x128xf32>
    tpu.vector_store %arg9[%c0_19, %c0_20], %15 {strides = array<i32>} : memref<16x128xf32, #tpu.memory_space<vmem>>, vector<16x128xf32>,
    %cst_21 = arith.constant 0.000000e+00 : f32
    %17 = vector.broadcast %cst_21 : f32 to vector<16x128xf32>
    %c0_22 = arith.constant 0 : index
    %c0_23 = arith.constant 0 : index
    %18 = vector.load %arg10[%c0_22, %c0_23] : memref<16x128xf32, #tpu.memory_space<vmem>>, vector<16x128xf32>
    tpu.vector_store %arg10[%c0_22, %c0_23], %17 {strides = array<i32>} : memref<16x128xf32, #tpu.memory_space<vmem>>, vector<16x128xf32>,
    %c0_i32 = arith.constant 0 : i32
    %c0_24 = arith.constant 0 : index
    %c0_25 = arith.constant 0 : index
    %19 = vector.load %arg9[%c0_24, %c0_25] : memref<16x128xf32, #tpu.memory_space<vmem>>, vector<16x128xf32>
    %c0_26 = arith.constant 0 : index
    %c0_27 = arith.constant 0 : index
    %20 = vector.load %arg10[%c0_26, %c0_27] : memref<16x128xf32, #tpu.memory_space<vmem>>, vector<16x128xf32>
    %21 = arith.index_cast %c0_i32 : i32 to index
    %c0_28 = arith.constant 0 : index
    %c0_29 = arith.constant 0 : index
    %22 = vector.load %arg8[%21, %c0_28, %c0_29] : memref<8x16x512xbf16, #tpu.memory_space<vmem>>, vector<1x16x512xbf16>
    %23 = vector.shape_cast %22 : vector<1x16x512xbf16> to vector<16x512xbf16>
    %24 = arith.extf %23 : vector<16x512xbf16> to vector<16x512xf32>
    %25 = vector.broadcast %12 : vector<1x512xf32> to vector<16x512xf32>
    %26 = arith.addf %24, %25 : vector<16x512xf32>
    %27 = arith.truncf %19 : vector<16x128xf32> to vector<16x128xbf16>
    %cst_30 = arith.constant dense<0.000000e+00> : vector<16x512xf32>
    %28 = tpu.matmul %27, %10, %cst_30 {dimension_numbers = #tpu.dot_dimension_numbers<[1], [0], [0], [1], [0, 0, 1, 1], [], []>} : vector<16x128xbf16>, vector<128x512xbf16>, vector<16x512xf32> -> vector<16x512xf32>
    %29 = arith.addf %26, %28 : vector<16x512xf32>
    %30 = vector.extract_strided_slice %29 {offsets = [0, 0], sizes = [16, 128], strides = [1, 1]} : vector<16x512xf32> to vector<16x128xf32>
    %31 = arith.negf %30 : vector<16x128xf32>
    %32 = math.exp %31 : vector<16x128xf32>
    %cst_31 = arith.constant 1.000000e+00 : f32
    %33 = vector.broadcast %cst_31 : f32 to vector<16x128xf32>
    %34 = arith.addf %33, %32 : vector<16x128xf32>
    %35 = arith.divf %33, %34 : vector<16x128xf32>
    %36 = vector.extract_strided_slice %29 {offsets = [0, 128], sizes = [16, 128], strides = [1, 1]} : vector<16x512xf32> to vector<16x128xf32>
    %37 = arith.negf %36 : vector<16x128xf32>
    %38 = math.exp %37 : vector<16x128xf32>
    %cst_32 = arith.constant 1.000000e+00 : f32
    %39 = vector.broadcast %cst_32 : f32 to vector<16x128xf32>
    %40 = arith.addf %39, %38 : vector<16x128xf32>
    %41 = arith.divf %39, %40 : vector<16x128xf32>
    %42 = vector.extract_strided_slice %29 {offsets = [0, 256], sizes = [16, 128], strides = [1, 1]} : vector<16x512xf32> to vector<16x128xf32>
    %43 = math.tanh %42 : vector<16x128xf32>
    %44 = vector.extract_strided_slice %29 {offsets = [0, 384], sizes = [16, 128], strides = [1, 1]} : vector<16x512xf32> to vector<16x128xf32>
    %45 = arith.negf %44 : vector<16x128xf32>
    %46 = math.exp %45 : vector<16x128xf32>
    %cst_33 = arith.constant 1.000000e+00 : f32
    %47 = vector.broadcast %cst_33 : f32 to vector<16x128xf32>
    %48 = arith.addf %47, %46 : vector<16x128xf32>
    %49 = arith.divf %47, %48 : vector<16x128xf32>
    %50 = arith.mulf %41, %20 : vector<16x128xf32>
    %51 = arith.mulf %35, %43 : vector<16x128xf32>
    %52 = arith.addf %50, %51 : vector<16x128xf32>
    %53 = math.tanh %52 : vector<16x128xf32>
    %54 = arith.mulf %49, %53 : vector<16x128xf32>
    %55 = vector.broadcast %c0_i32 : i32 to vector<16x1xi32>
    %56 = arith.cmpi sgt, %14, %55 : vector<16x1xi32>
    %57 = vector.shape_cast %56 : vector<16x1xi1> to vector<16x1xi1>
    %58 = vector.broadcast %57 : vector<16x1xi1> to vector<16x128xi1>
    %59 = arith.select %58, %54, %19 : vector<16x128xi1>, vector<16x128xf32>
    %c0_34 = arith.constant 0 : index
    %c0_35 = arith.constant 0 : index
    %60 = vector.load %arg9[%c0_34, %c0_35] : memref<16x128xf32, #tpu.memory_space<vmem>>, vector<16x128xf32>
    tpu.vector_store %arg9[%c0_34, %c0_35], %59 {strides = array<i32>} : memref<16x128xf32, #tpu.memory_space<vmem>>, vector<16x128xf32>,
    %61 = vector.shape_cast %56 : vector<16x1xi1> to vector<16x1xi1>
    %62 = vector.broadcast %61 : vector<16x1xi1> to vector<16x128xi1>
    %63 = arith.select %62, %52, %20 : vector<16x128xi1>, vector<16x128xf32>
    %c0_36 = arith.constant 0 : index
    %c0_37 = arith.constant 0 : index
    %64 = vector.load %arg10[%c0_36, %c0_37] : memref<16x128xf32, #tpu.memory_space<vmem>>, vector<16x128xf32>
    tpu.vector_store %arg10[%c0_36, %c0_37], %63 {strides = array<i32>} : memref<16x128xf32, #tpu.memory_space<vmem>>, vector<16x128xf32>,
    %c1_i32 = arith.constant 1 : i32
    %c0_38 = arith.constant 0 : index
    %c0_39 = arith.constant 0 : index
    %65 = vector.load %arg9[%c0_38, %c0_39] : memref<16x128xf32, #tpu.memory_space<vmem>>, vector<16x128xf32>
    %c0_40 = arith.constant 0 : index
    %c0_41 = arith.constant 0 : index
    %66 = vector.load %arg10[%c0_40, %c0_41] : memref<16x128xf32, #tpu.memory_space<vmem>>, vector<16x128xf32>
    %67 = arith.index_cast %c1_i32 : i32 to index
    %c0_42 = arith.constant 0 : index
    %c0_43 = arith.constant 0 : index
    %68 = vector.load %arg8[%67, %c0_42, %c0_43] : memref<8x16x512xbf16, #tpu.memory_space<vmem>>, vector<1x16x512xbf16>
    %69 = vector.shape_cast %68 : vector<1x16x512xbf16> to vector<16x512xbf16>
    %70 = arith.extf %69 : vector<16x512xbf16> to vector<16x512xf32>
    %71 = vector.broadcast %12 : vector<1x512xf32> to vector<16x512xf32>
    %72 = arith.addf %70, %71 : vector<16x512xf32>
    %73 = arith.truncf %65 : vector<16x128xf32> to vector<16x128xbf16>
    %cst_44 = arith.constant dense<0.000000e+00> : vector<16x512xf32>
    %74 = tpu.matmul %73, %10, %cst_44 {dimension_numbers = #tpu.dot_dimension_numbers<[1], [0], [0], [1], [0, 0, 1, 1], [], []>} : vector<16x128xbf16>, vector<128x512xbf16>, vector<16x512xf32> -> vector<16x512xf32>
    %75 = arith.addf %72, %74 : vector<16x512xf32>
    %76 = vector.extract_strided_slice %75 {offsets = [0, 0], sizes = [16, 128], strides = [1, 1]} : vector<16x512xf32> to vector<16x128xf32>
    %77 = arith.negf %76 : vector<16x128xf32>
    %78 = math.exp %77 : vector<16x128xf32>
    %cst_45 = arith.constant 1.000000e+00 : f32
    %79 = vector.broadcast %cst_45 : f32 to vector<16x128xf32>
    %80 = arith.addf %79, %78 : vector<16x128xf32>
    %81 = arith.divf %79, %80 : vector<16x128xf32>
    %82 = vector.extract_strided_slice %75 {offsets = [0, 128], sizes = [16, 128], strides = [1, 1]} : vector<16x512xf32> to vector<16x128xf32>
    %83 = arith.negf %82 : vector<16x128xf32>
    %84 = math.exp %83 : vector<16x128xf32>
    %cst_46 = arith.constant 1.000000e+00 : f32
    %85 = vector.broadcast %cst_46 : f32 to vector<16x128xf32>
    %86 = arith.addf %85, %84 : vector<16x128xf32>
    %87 = arith.divf %85, %86 : vector<16x128xf32>
    %88 = vector.extract_strided_slice %75 {offsets = [0, 256], sizes = [16, 128], strides = [1, 1]} : vector<16x512xf32> to vector<16x128xf32>
    %89 = math.tanh %88 : vector<16x128xf32>
    %90 = vector.extract_strided_slice %75 {offsets = [0, 384], sizes = [16, 128], strides = [1, 1]} : vector<16x512xf32> to vector<16x128xf32>
    %91 = arith.negf %90 : vector<16x128xf32>
    %92 = math.exp %91 : vector<16x128xf32>
    %cst_47 = arith.constant 1.000000e+00 : f32
    %93 = vector.broadcast %cst_47 : f32 to vector<16x128xf32>
    %94 = arith.addf %93, %92 : vector<16x128xf32>
    %95 = arith.divf %93, %94 : vector<16x128xf32>
    %96 = arith.mulf %87, %66 : vector<16x128xf32>
    %97 = arith.mulf %81, %89 : vector<16x128xf32>
    %98 = arith.addf %96, %97 : vector<16x128xf32>
    %99 = math.tanh %98 : vector<16x128xf32>
    %100 = arith.mulf %95, %99 : vector<16x128xf32>
    %101 = vector.broadcast %c1_i32 : i32 to vector<16x1xi32>
    %102 = arith.cmpi sgt, %14, %101 : vector<16x1xi32>
    %103 = vector.shape_cast %102 : vector<16x1xi1> to vector<16x1xi1>
    %104 = vector.broadcast %103 : vector<16x1xi1> to vector<16x128xi1>
    %105 = arith.select %104, %100, %65 : vector<16x128xi1>, vector<16x128xf32>
    %c0_48 = arith.constant 0 : index
    %c0_49 = arith.constant 0 : index
    %106 = vector.load %arg9[%c0_48, %c0_49] : memref<16x128xf32, #tpu.memory_space<vmem>>, vector<16x128xf32>
    tpu.vector_store %arg9[%c0_48, %c0_49], %105 {strides = array<i32>} : memref<16x128xf32, #tpu.memory_space<vmem>>, vector<16x128xf32>,
    %107 = vector.shape_cast %102 : vector<16x1xi1> to vector<16x1xi1>
    %108 = vector.broadcast %107 : vector<16x1xi1> to vector<16x128xi1>
    %109 = arith.select %108, %98, %66 : vector<16x128xi1>, vector<16x128xf32>
    %c0_50 = arith.constant 0 : index
    %c0_51 = arith.constant 0 : index
    %110 = vector.load %arg10[%c0_50, %c0_51] : memref<16x128xf32, #tpu.memory_space<vmem>>, vector<16x128xf32>
    tpu.vector_store %arg10[%c0_50, %c0_51], %109 {strides = array<i32>} : memref<16x128xf32, #tpu.memory_space<vmem>>, vector<16x128xf32>,
    %c2_i32 = arith.constant 2 : i32
    %c0_52 = arith.constant 0 : index
    %c0_53 = arith.constant 0 : index
    %111 = vector.load %arg9[%c0_52, %c0_53] : memref<16x128xf32, #tpu.memory_space<vmem>>, vector<16x128xf32>
    %c0_54 = arith.constant 0 : index
    %c0_55 = arith.constant 0 : index
    %112 = vector.load %arg10[%c0_54, %c0_55] : memref<16x128xf32, #tpu.memory_space<vmem>>, vector<16x128xf32>
    %113 = arith.index_cast %c2_i32 : i32 to index
    %c0_56 = arith.constant 0 : index
    %c0_57 = arith.constant 0 : index
    %114 = vector.load %arg8[%113, %c0_56, %c0_57] : memref<8x16x512xbf16, #tpu.memory_space<vmem>>, vector<1x16x512xbf16>
    %115 = vector.shape_cast %114 : vector<1x16x512xbf16> to vector<16x512xbf16>
    %116 = arith.extf %115 : vector<16x512xbf16> to vector<16x512xf32>
    %117 = vector.broadcast %12 : vector<1x512xf32> to vector<16x512xf32>
    %118 = arith.addf %116, %117 : vector<16x512xf32>
    %119 = arith.truncf %111 : vector<16x128xf32> to vector<16x128xbf16>
    %cst_58 = arith.constant dense<0.000000e+00> : vector<16x512xf32>
    %120 = tpu.matmul %119, %10, %cst_58 {dimension_numbers = #tpu.dot_dimension_numbers<[1], [0], [0], [1], [0, 0, 1, 1], [], []>} : vector<16x128xbf16>, vector<128x512xbf16>, vector<16x512xf32> -> vector<16x512xf32>
    %121 = arith.addf %118, %120 : vector<16x512xf32>
    %122 = vector.extract_strided_slice %121 {offsets = [0, 0], sizes = [16, 128], strides = [1, 1]} : vector<16x512xf32> to vector<16x128xf32>
    %123 = arith.negf %122 : vector<16x128xf32>
    %124 = math.exp %123 : vector<16x128xf32>
    %cst_59 = arith.constant 1.000000e+00 : f32
    %125 = vector.broadcast %cst_59 : f32 to vector<16x128xf32>
    %126 = arith.addf %125, %124 : vector<16x128xf32>
    %127 = arith.divf %125, %126 : vector<16x128xf32>
    %128 = vector.extract_strided_slice %121 {offsets = [0, 128], sizes = [16, 128], strides = [1, 1]} : vector<16x512xf32> to vector<16x128xf32>
    %129 = arith.negf %128 : vector<16x128xf32>
    %130 = math.exp %129 : vector<16x128xf32>
    %cst_60 = arith.constant 1.000000e+00 : f32
    %131 = vector.broadcast %cst_60 : f32 to vector<16x128xf32>
    %132 = arith.addf %131, %130 : vector<16x128xf32>
    %133 = arith.divf %131, %132 : vector<16x128xf32>
    %134 = vector.extract_strided_slice %121 {offsets = [0, 256], sizes = [16, 128], strides = [1, 1]} : vector<16x512xf32> to vector<16x128xf32>
    %135 = math.tanh %134 : vector<16x128xf32>
    %136 = vector.extract_strided_slice %121 {offsets = [0, 384], sizes = [16, 128], strides = [1, 1]} : vector<16x512xf32> to vector<16x128xf32>
    %137 = arith.negf %136 : vector<16x128xf32>
    %138 = math.exp %137 : vector<16x128xf32>
    %cst_61 = arith.constant 1.000000e+00 : f32
    %139 = vector.broadcast %cst_61 : f32 to vector<16x128xf32>
    %140 = arith.addf %139, %138 : vector<16x128xf32>
    %141 = arith.divf %139, %140 : vector<16x128xf32>
    %142 = arith.mulf %133, %112 : vector<16x128xf32>
    %143 = arith.mulf %127, %135 : vector<16x128xf32>
    %144 = arith.addf %142, %143 : vector<16x128xf32>
    %145 = math.tanh %144 : vector<16x128xf32>
    %146 = arith.mulf %141, %145 : vector<16x128xf32>
    %147 = vector.broadcast %c2_i32 : i32 to vector<16x1xi32>
    %148 = arith.cmpi sgt, %14, %147 : vector<16x1xi32>
    %149 = vector.shape_cast %148 : vector<16x1xi1> to vector<16x1xi1>
    %150 = vector.broadcast %149 : vector<16x1xi1> to vector<16x128xi1>
    %151 = arith.select %150, %146, %111 : vector<16x128xi1>, vector<16x128xf32>
    %c0_62 = arith.constant 0 : index
    %c0_63 = arith.constant 0 : index
    %152 = vector.load %arg9[%c0_62, %c0_63] : memref<16x128xf32, #tpu.memory_space<vmem>>, vector<16x128xf32>
    tpu.vector_store %arg9[%c0_62, %c0_63], %151 {strides = array<i32>} : memref<16x128xf32, #tpu.memory_space<vmem>>, vector<16x128xf32>,
    %153 = vector.shape_cast %148 : vector<16x1xi1> to vector<16x1xi1>
    %154 = vector.broadcast %153 : vector<16x1xi1> to vector<16x128xi1>
    %155 = arith.select %154, %144, %112 : vector<16x128xi1>, vector<16x128xf32>
    %c0_64 = arith.constant 0 : index
    %c0_65 = arith.constant 0 : index
    %156 = vector.load %arg10[%c0_64, %c0_65] : memref<16x128xf32, #tpu.memory_space<vmem>>, vector<16x128xf32>
    tpu.vector_store %arg10[%c0_64, %c0_65], %155 {strides = array<i32>} : memref<16x128xf32, #tpu.memory_space<vmem>>, vector<16x128xf32>,
    %c3_i32 = arith.constant 3 : i32
    %c0_66 = arith.constant 0 : index
    %c0_67 = arith.constant 0 : index
    %157 = vector.load %arg9[%c0_66, %c0_67] : memref<16x128xf32, #tpu.memory_space<vmem>>, vector<16x128xf32>
    %c0_68 = arith.constant 0 : index
    %c0_69 = arith.constant 0 : index
    %158 = vector.load %arg10[%c0_68, %c0_69] : memref<16x128xf32, #tpu.memory_space<vmem>>, vector<16x128xf32>
    %159 = arith.index_cast %c3_i32 : i32 to index
    %c0_70 = arith.constant 0 : index
    %c0_71 = arith.constant 0 : index
    %160 = vector.load %arg8[%159, %c0_70, %c0_71] : memref<8x16x512xbf16, #tpu.memory_space<vmem>>, vector<1x16x512xbf16>
    %161 = vector.shape_cast %160 : vector<1x16x512xbf16> to vector<16x512xbf16>
    %162 = arith.extf %161 : vector<16x512xbf16> to vector<16x512xf32>
    %163 = vector.broadcast %12 : vector<1x512xf32> to vector<16x512xf32>
    %164 = arith.addf %162, %163 : vector<16x512xf32>
    %165 = arith.truncf %157 : vector<16x128xf32> to vector<16x128xbf16>
    %cst_72 = arith.constant dense<0.000000e+00> : vector<16x512xf32>
    %166 = tpu.matmul %165, %10, %cst_72 {dimension_numbers = #tpu.dot_dimension_numbers<[1], [0], [0], [1], [0, 0, 1, 1], [], []>} : vector<16x128xbf16>, vector<128x512xbf16>, vector<16x512xf32> -> vector<16x512xf32>
    %167 = arith.addf %164, %166 : vector<16x512xf32>
    %168 = vector.extract_strided_slice %167 {offsets = [0, 0], sizes = [16, 128], strides = [1, 1]} : vector<16x512xf32> to vector<16x128xf32>
    %169 = arith.negf %168 : vector<16x128xf32>
    %170 = math.exp %169 : vector<16x128xf32>
    %cst_73 = arith.constant 1.000000e+00 : f32
    %171 = vector.broadcast %cst_73 : f32 to vector<16x128xf32>
    %172 = arith.addf %171, %170 : vector<16x128xf32>
    %173 = arith.divf %171, %172 : vector<16x128xf32>
    %174 = vector.extract_strided_slice %167 {offsets = [0, 128], sizes = [16, 128], strides = [1, 1]} : vector<16x512xf32> to vector<16x128xf32>
    %175 = arith.negf %174 : vector<16x128xf32>
    %176 = math.exp %175 : vector<16x128xf32>
    %cst_74 = arith.constant 1.000000e+00 : f32
    %177 = vector.broadcast %cst_74 : f32 to vector<16x128xf32>
    %178 = arith.addf %177, %176 : vector<16x128xf32>
    %179 = arith.divf %177, %178 : vector<16x128xf32>
    %180 = vector.extract_strided_slice %167 {offsets = [0, 256], sizes = [16, 128], strides = [1, 1]} : vector<16x512xf32> to vector<16x128xf32>
    %181 = math.tanh %180 : vector<16x128xf32>
    %182 = vector.extract_strided_slice %167 {offsets = [0, 384], sizes = [16, 128], strides = [1, 1]} : vector<16x512xf32> to vector<16x128xf32>
    %183 = arith.negf %182 : vector<16x128xf32>
    %184 = math.exp %183 : vector<16x128xf32>
    %cst_75 = arith.constant 1.000000e+00 : f32
    %185 = vector.broadcast %cst_75 : f32 to vector<16x128xf32>
    %186 = arith.addf %185, %184 : vector<16x128xf32>
    %187 = arith.divf %185, %186 : vector<16x128xf32>
    %188 = arith.mulf %179, %158 : vector<16x128xf32>
    %189 = arith.mulf %173, %181 : vector<16x128xf32>
    %190 = arith.addf %188, %189 : vector<16x128xf32>
    %191 = math.tanh %190 : vector<16x128xf32>
    %192 = arith.mulf %187, %191 : vector<16x128xf32>
    %193 = vector.broadcast %c3_i32 : i32 to vector<16x1xi32>
    %194 = arith.cmpi sgt, %14, %193 : vector<16x1xi32>
    %195 = vector.shape_cast %194 : vector<16x1xi1> to vector<16x1xi1>
    %196 = vector.broadcast %195 : vector<16x1xi1> to vector<16x128xi1>
    %197 = arith.select %196, %192, %157 : vector<16x128xi1>, vector<16x128xf32>
    %c0_76 = arith.constant 0 : index
    %c0_77 = arith.constant 0 : index
    %198 = vector.load %arg9[%c0_76, %c0_77] : memref<16x128xf32, #tpu.memory_space<vmem>>, vector<16x128xf32>
    tpu.vector_store %arg9[%c0_76, %c0_77], %197 {strides = array<i32>} : memref<16x128xf32, #tpu.memory_space<vmem>>, vector<16x128xf32>,
    %199 = vector.shape_cast %194 : vector<16x1xi1> to vector<16x1xi1>
    %200 = vector.broadcast %199 : vector<16x1xi1> to vector<16x128xi1>
    %201 = arith.select %200, %190, %158 : vector<16x128xi1>, vector<16x128xf32>
    %c0_78 = arith.constant 0 : index
    %c0_79 = arith.constant 0 : index
    %202 = vector.load %arg10[%c0_78, %c0_79] : memref<16x128xf32, #tpu.memory_space<vmem>>, vector<16x128xf32>
    tpu.vector_store %arg10[%c0_78, %c0_79], %201 {strides = array<i32>} : memref<16x128xf32, #tpu.memory_space<vmem>>, vector<16x128xf32>,
    %c4_i32 = arith.constant 4 : i32
    %c0_80 = arith.constant 0 : index
    %c0_81 = arith.constant 0 : index
    %203 = vector.load %arg9[%c0_80, %c0_81] : memref<16x128xf32, #tpu.memory_space<vmem>>, vector<16x128xf32>
    %c0_82 = arith.constant 0 : index
    %c0_83 = arith.constant 0 : index
    %204 = vector.load %arg10[%c0_82, %c0_83] : memref<16x128xf32, #tpu.memory_space<vmem>>, vector<16x128xf32>
    %205 = arith.index_cast %c4_i32 : i32 to index
    %c0_84 = arith.constant 0 : index
    %c0_85 = arith.constant 0 : index
    %206 = vector.load %arg8[%205, %c0_84, %c0_85] : memref<8x16x512xbf16, #tpu.memory_space<vmem>>, vector<1x16x512xbf16>
    %207 = vector.shape_cast %206 : vector<1x16x512xbf16> to vector<16x512xbf16>
    %208 = arith.extf %207 : vector<16x512xbf16> to vector<16x512xf32>
    %209 = vector.broadcast %12 : vector<1x512xf32> to vector<16x512xf32>
    %210 = arith.addf %208, %209 : vector<16x512xf32>
    %211 = arith.truncf %203 : vector<16x128xf32> to vector<16x128xbf16>
    %cst_86 = arith.constant dense<0.000000e+00> : vector<16x512xf32>
    %212 = tpu.matmul %211, %10, %cst_86 {dimension_numbers = #tpu.dot_dimension_numbers<[1], [0], [0], [1], [0, 0, 1, 1], [], []>} : vector<16x128xbf16>, vector<128x512xbf16>, vector<16x512xf32> -> vector<16x512xf32>
    %213 = arith.addf %210, %212 : vector<16x512xf32>
    %214 = vector.extract_strided_slice %213 {offsets = [0, 0], sizes = [16, 128], strides = [1, 1]} : vector<16x512xf32> to vector<16x128xf32>
    %215 = arith.negf %214 : vector<16x128xf32>
    %216 = math.exp %215 : vector<16x128xf32>
    %cst_87 = arith.constant 1.000000e+00 : f32
    %217 = vector.broadcast %cst_87 : f32 to vector<16x128xf32>
    %218 = arith.addf %217, %216 : vector<16x128xf32>
    %219 = arith.divf %217, %218 : vector<16x128xf32>
    %220 = vector.extract_strided_slice %213 {offsets = [0, 128], sizes = [16, 128], strides = [1, 1]} : vector<16x512xf32> to vector<16x128xf32>
    %221 = arith.negf %220 : vector<16x128xf32>
    %222 = math.exp %221 : vector<16x128xf32>
    %cst_88 = arith.constant 1.000000e+00 : f32
    %223 = vector.broadcast %cst_88 : f32 to vector<16x128xf32>
    %224 = arith.addf %223, %222 : vector<16x128xf32>
    %225 = arith.divf %223, %224 : vector<16x128xf32>
    %226 = vector.extract_strided_slice %213 {offsets = [0, 256], sizes = [16, 128], strides = [1, 1]} : vector<16x512xf32> to vector<16x128xf32>
    %227 = math.tanh %226 : vector<16x128xf32>
    %228 = vector.extract_strided_slice %213 {offsets = [0, 384], sizes = [16, 128], strides = [1, 1]} : vector<16x512xf32> to vector<16x128xf32>
    %229 = arith.negf %228 : vector<16x128xf32>
    %230 = math.exp %229 : vector<16x128xf32>
    %cst_89 = arith.constant 1.000000e+00 : f32
    %231 = vector.broadcast %cst_89 : f32 to vector<16x128xf32>
    %232 = arith.addf %231, %230 : vector<16x128xf32>
    %233 = arith.divf %231, %232 : vector<16x128xf32>
    %234 = arith.mulf %225, %204 : vector<16x128xf32>
    %235 = arith.mulf %219, %227 : vector<16x128xf32>
    %236 = arith.addf %234, %235 : vector<16x128xf32>
    %237 = math.tanh %236 : vector<16x128xf32>
    %238 = arith.mulf %233, %237 : vector<16x128xf32>
    %239 = vector.broadcast %c4_i32 : i32 to vector<16x1xi32>
    %240 = arith.cmpi sgt, %14, %239 : vector<16x1xi32>
    %241 = vector.shape_cast %240 : vector<16x1xi1> to vector<16x1xi1>
    %242 = vector.broadcast %241 : vector<16x1xi1> to vector<16x128xi1>
    %243 = arith.select %242, %238, %203 : vector<16x128xi1>, vector<16x128xf32>
    %c0_90 = arith.constant 0 : index
    %c0_91 = arith.constant 0 : index
    %244 = vector.load %arg9[%c0_90, %c0_91] : memref<16x128xf32, #tpu.memory_space<vmem>>, vector<16x128xf32>
    tpu.vector_store %arg9[%c0_90, %c0_91], %243 {strides = array<i32>} : memref<16x128xf32, #tpu.memory_space<vmem>>, vector<16x128xf32>,
    %245 = vector.shape_cast %240 : vector<16x1xi1> to vector<16x1xi1>
    %246 = vector.broadcast %245 : vector<16x1xi1> to vector<16x128xi1>
    %247 = arith.select %246, %236, %204 : vector<16x128xi1>, vector<16x128xf32>
    %c0_92 = arith.constant 0 : index
    %c0_93 = arith.constant 0 : index
    %248 = vector.load %arg10[%c0_92, %c0_93] : memref<16x128xf32, #tpu.memory_space<vmem>>, vector<16x128xf32>
    tpu.vector_store %arg10[%c0_92, %c0_93], %247 {strides = array<i32>} : memref<16x128xf32, #tpu.memory_space<vmem>>, vector<16x128xf32>,
    %c5_i32 = arith.constant 5 : i32
    %c0_94 = arith.constant 0 : index
    %c0_95 = arith.constant 0 : index
    %249 = vector.load %arg9[%c0_94, %c0_95] : memref<16x128xf32, #tpu.memory_space<vmem>>, vector<16x128xf32>
    %c0_96 = arith.constant 0 : index
    %c0_97 = arith.constant 0 : index
    %250 = vector.load %arg10[%c0_96, %c0_97] : memref<16x128xf32, #tpu.memory_space<vmem>>, vector<16x128xf32>
    %251 = arith.index_cast %c5_i32 : i32 to index
    %c0_98 = arith.constant 0 : index
    %c0_99 = arith.constant 0 : index
    %252 = vector.load %arg8[%251, %c0_98, %c0_99] : memref<8x16x512xbf16, #tpu.memory_space<vmem>>, vector<1x16x512xbf16>
    %253 = vector.shape_cast %252 : vector<1x16x512xbf16> to vector<16x512xbf16>
    %254 = arith.extf %253 : vector<16x512xbf16> to vector<16x512xf32>
    %255 = vector.broadcast %12 : vector<1x512xf32> to vector<16x512xf32>
    %256 = arith.addf %254, %255 : vector<16x512xf32>
    %257 = arith.truncf %249 : vector<16x128xf32> to vector<16x128xbf16>
    %cst_100 = arith.constant dense<0.000000e+00> : vector<16x512xf32>
    %258 = tpu.matmul %257, %10, %cst_100 {dimension_numbers = #tpu.dot_dimension_numbers<[1], [0], [0], [1], [0, 0, 1, 1], [], []>} : vector<16x128xbf16>, vector<128x512xbf16>, vector<16x512xf32> -> vector<16x512xf32>
    %259 = arith.addf %256, %258 : vector<16x512xf32>
    %260 = vector.extract_strided_slice %259 {offsets = [0, 0], sizes = [16, 128], strides = [1, 1]} : vector<16x512xf32> to vector<16x128xf32>
    %261 = arith.negf %260 : vector<16x128xf32>
    %262 = math.exp %261 : vector<16x128xf32>
    %cst_101 = arith.constant 1.000000e+00 : f32
    %263 = vector.broadcast %cst_101 : f32 to vector<16x128xf32>
    %264 = arith.addf %263, %262 : vector<16x128xf32>
    %265 = arith.divf %263, %264 : vector<16x128xf32>
    %266 = vector.extract_strided_slice %259 {offsets = [0, 128], sizes = [16, 128], strides = [1, 1]} : vector<16x512xf32> to vector<16x128xf32>
    %267 = arith.negf %266 : vector<16x128xf32>
    %268 = math.exp %267 : vector<16x128xf32>
    %cst_102 = arith.constant 1.000000e+00 : f32
    %269 = vector.broadcast %cst_102 : f32 to vector<16x128xf32>
    %270 = arith.addf %269, %268 : vector<16x128xf32>
    %271 = arith.divf %269, %270 : vector<16x128xf32>
    %272 = vector.extract_strided_slice %259 {offsets = [0, 256], sizes = [16, 128], strides = [1, 1]} : vector<16x512xf32> to vector<16x128xf32>
    %273 = math.tanh %272 : vector<16x128xf32>
    %274 = vector.extract_strided_slice %259 {offsets = [0, 384], sizes = [16, 128], strides = [1, 1]} : vector<16x512xf32> to vector<16x128xf32>
    %275 = arith.negf %274 : vector<16x128xf32>
    %276 = math.exp %275 : vector<16x128xf32>
    %cst_103 = arith.constant 1.000000e+00 : f32
    %277 = vector.broadcast %cst_103 : f32 to vector<16x128xf32>
    %278 = arith.addf %277, %276 : vector<16x128xf32>
    %279 = arith.divf %277, %278 : vector<16x128xf32>
    %280 = arith.mulf %271, %250 : vector<16x128xf32>
    %281 = arith.mulf %265, %273 : vector<16x128xf32>
    %282 = arith.addf %280, %281 : vector<16x128xf32>
    %283 = math.tanh %282 : vector<16x128xf32>
    %284 = arith.mulf %279, %283 : vector<16x128xf32>
    %285 = vector.broadcast %c5_i32 : i32 to vector<16x1xi32>
    %286 = arith.cmpi sgt, %14, %285 : vector<16x1xi32>
    %287 = vector.shape_cast %286 : vector<16x1xi1> to vector<16x1xi1>
    %288 = vector.broadcast %287 : vector<16x1xi1> to vector<16x128xi1>
    %289 = arith.select %288, %284, %249 : vector<16x128xi1>, vector<16x128xf32>
    %c0_104 = arith.constant 0 : index
    %c0_105 = arith.constant 0 : index
    %290 = vector.load %arg9[%c0_104, %c0_105] : memref<16x128xf32, #tpu.memory_space<vmem>>, vector<16x128xf32>
    tpu.vector_store %arg9[%c0_104, %c0_105], %289 {strides = array<i32>} : memref<16x128xf32, #tpu.memory_space<vmem>>, vector<16x128xf32>,
    %291 = vector.shape_cast %286 : vector<16x1xi1> to vector<16x1xi1>
    %292 = vector.broadcast %291 : vector<16x1xi1> to vector<16x128xi1>
    %293 = arith.select %292, %282, %250 : vector<16x128xi1>, vector<16x128xf32>
    %c0_106 = arith.constant 0 : index
    %c0_107 = arith.constant 0 : index
    %294 = vector.load %arg10[%c0_106, %c0_107] : memref<16x128xf32, #tpu.memory_space<vmem>>, vector<16x128xf32>
    tpu.vector_store %arg10[%c0_106, %c0_107], %293 {strides = array<i32>} : memref<16x128xf32, #tpu.memory_space<vmem>>, vector<16x128xf32>,
    %c6_i32 = arith.constant 6 : i32
    %c0_108 = arith.constant 0 : index
    %c0_109 = arith.constant 0 : index
    %295 = vector.load %arg9[%c0_108, %c0_109] : memref<16x128xf32, #tpu.memory_space<vmem>>, vector<16x128xf32>
    %c0_110 = arith.constant 0 : index
    %c0_111 = arith.constant 0 : index
    %296 = vector.load %arg10[%c0_110, %c0_111] : memref<16x128xf32, #tpu.memory_space<vmem>>, vector<16x128xf32>
    %297 = arith.index_cast %c6_i32 : i32 to index
    %c0_112 = arith.constant 0 : index
    %c0_113 = arith.constant 0 : index
    %298 = vector.load %arg8[%297, %c0_112, %c0_113] : memref<8x16x512xbf16, #tpu.memory_space<vmem>>, vector<1x16x512xbf16>
    %299 = vector.shape_cast %298 : vector<1x16x512xbf16> to vector<16x512xbf16>
    %300 = arith.extf %299 : vector<16x512xbf16> to vector<16x512xf32>
    %301 = vector.broadcast %12 : vector<1x512xf32> to vector<16x512xf32>
    %302 = arith.addf %300, %301 : vector<16x512xf32>
    %303 = arith.truncf %295 : vector<16x128xf32> to vector<16x128xbf16>
    %cst_114 = arith.constant dense<0.000000e+00> : vector<16x512xf32>
    %304 = tpu.matmul %303, %10, %cst_114 {dimension_numbers = #tpu.dot_dimension_numbers<[1], [0], [0], [1], [0, 0, 1, 1], [], []>} : vector<16x128xbf16>, vector<128x512xbf16>, vector<16x512xf32> -> vector<16x512xf32>
    %305 = arith.addf %302, %304 : vector<16x512xf32>
    %306 = vector.extract_strided_slice %305 {offsets = [0, 0], sizes = [16, 128], strides = [1, 1]} : vector<16x512xf32> to vector<16x128xf32>
    %307 = arith.negf %306 : vector<16x128xf32>
    %308 = math.exp %307 : vector<16x128xf32>
    %cst_115 = arith.constant 1.000000e+00 : f32
    %309 = vector.broadcast %cst_115 : f32 to vector<16x128xf32>
    %310 = arith.addf %309, %308 : vector<16x128xf32>
    %311 = arith.divf %309, %310 : vector<16x128xf32>
    %312 = vector.extract_strided_slice %305 {offsets = [0, 128], sizes = [16, 128], strides = [1, 1]} : vector<16x512xf32> to vector<16x128xf32>
    %313 = arith.negf %312 : vector<16x128xf32>
    %314 = math.exp %313 : vector<16x128xf32>
    %cst_116 = arith.constant 1.000000e+00 : f32
    %315 = vector.broadcast %cst_116 : f32 to vector<16x128xf32>
    %316 = arith.addf %315, %314 : vector<16x128xf32>
    %317 = arith.divf %315, %316 : vector<16x128xf32>
    %318 = vector.extract_strided_slice %305 {offsets = [0, 256], sizes = [16, 128], strides = [1, 1]} : vector<16x512xf32> to vector<16x128xf32>
    %319 = math.tanh %318 : vector<16x128xf32>
    %320 = vector.extract_strided_slice %305 {offsets = [0, 384], sizes = [16, 128], strides = [1, 1]} : vector<16x512xf32> to vector<16x128xf32>
    %321 = arith.negf %320 : vector<16x128xf32>
    %322 = math.exp %321 : vector<16x128xf32>
    %cst_117 = arith.constant 1.000000e+00 : f32
    %323 = vector.broadcast %cst_117 : f32 to vector<16x128xf32>
    %324 = arith.addf %323, %322 : vector<16x128xf32>
    %325 = arith.divf %323, %324 : vector<16x128xf32>
    %326 = arith.mulf %317, %296 : vector<16x128xf32>
    %327 = arith.mulf %311, %319 : vector<16x128xf32>
    %328 = arith.addf %326, %327 : vector<16x128xf32>
    %329 = math.tanh %328 : vector<16x128xf32>
    %330 = arith.mulf %325, %329 : vector<16x128xf32>
    %331 = vector.broadcast %c6_i32 : i32 to vector<16x1xi32>
    %332 = arith.cmpi sgt, %14, %331 : vector<16x1xi32>
    %333 = vector.shape_cast %332 : vector<16x1xi1> to vector<16x1xi1>
    %334 = vector.broadcast %333 : vector<16x1xi1> to vector<16x128xi1>
    %335 = arith.select %334, %330, %295 : vector<16x128xi1>, vector<16x128xf32>
    %c0_118 = arith.constant 0 : index
    %c0_119 = arith.constant 0 : index
    %336 = vector.load %arg9[%c0_118, %c0_119] : memref<16x128xf32, #tpu.memory_space<vmem>>, vector<16x128xf32>
    tpu.vector_store %arg9[%c0_118, %c0_119], %335 {strides = array<i32>} : memref<16x128xf32, #tpu.memory_space<vmem>>, vector<16x128xf32>,
    %337 = vector.shape_cast %332 : vector<16x1xi1> to vector<16x1xi1>
    %338 = vector.broadcast %337 : vector<16x1xi1> to vector<16x128xi1>
    %339 = arith.select %338, %328, %296 : vector<16x128xi1>, vector<16x128xf32>
    %c0_120 = arith.constant 0 : index
    %c0_121 = arith.constant 0 : index
    %340 = vector.load %arg10[%c0_120, %c0_121] : memref<16x128xf32, #tpu.memory_space<vmem>>, vector<16x128xf32>
    tpu.vector_store %arg10[%c0_120, %c0_121], %339 {strides = array<i32>} : memref<16x128xf32, #tpu.memory_space<vmem>>, vector<16x128xf32>,
    %c7_i32 = arith.constant 7 : i32
    %c0_122 = arith.constant 0 : index
    %c0_123 = arith.constant 0 : index
    %341 = vector.load %arg9[%c0_122, %c0_123] : memref<16x128xf32, #tpu.memory_space<vmem>>, vector<16x128xf32>
    %c0_124 = arith.constant 0 : index
    %c0_125 = arith.constant 0 : index
    %342 = vector.load %arg10[%c0_124, %c0_125] : memref<16x128xf32, #tpu.memory_space<vmem>>, vector<16x128xf32>
    %343 = arith.index_cast %c7_i32 : i32 to index
    %c0_126 = arith.constant 0 : index
    %c0_127 = arith.constant 0 : index
    %344 = vector.load %arg8[%343, %c0_126, %c0_127] : memref<8x16x512xbf16, #tpu.memory_space<vmem>>, vector<1x16x512xbf16>
    %345 = vector.shape_cast %344 : vector<1x16x512xbf16> to vector<16x512xbf16>
    %346 = arith.extf %345 : vector<16x512xbf16> to vector<16x512xf32>
    %347 = vector.broadcast %12 : vector<1x512xf32> to vector<16x512xf32>
    %348 = arith.addf %346, %347 : vector<16x512xf32>
    %349 = arith.truncf %341 : vector<16x128xf32> to vector<16x128xbf16>
    %cst_128 = arith.constant dense<0.000000e+00> : vector<16x512xf32>
    %350 = tpu.matmul %349, %10, %cst_128 {dimension_numbers = #tpu.dot_dimension_numbers<[1], [0], [0], [1], [0, 0, 1, 1], [], []>} : vector<16x128xbf16>, vector<128x512xbf16>, vector<16x512xf32> -> vector<16x512xf32>
    %351 = arith.addf %348, %350 : vector<16x512xf32>
    %352 = vector.extract_strided_slice %351 {offsets = [0, 0], sizes = [16, 128], strides = [1, 1]} : vector<16x512xf32> to vector<16x128xf32>
    %353 = arith.negf %352 : vector<16x128xf32>
    %354 = math.exp %353 : vector<16x128xf32>
    %cst_129 = arith.constant 1.000000e+00 : f32
    %355 = vector.broadcast %cst_129 : f32 to vector<16x128xf32>
    %356 = arith.addf %355, %354 : vector<16x128xf32>
    %357 = arith.divf %355, %356 : vector<16x128xf32>
    %358 = vector.extract_strided_slice %351 {offsets = [0, 128], sizes = [16, 128], strides = [1, 1]} : vector<16x512xf32> to vector<16x128xf32>
    %359 = arith.negf %358 : vector<16x128xf32>
    %360 = math.exp %359 : vector<16x128xf32>
    %cst_130 = arith.constant 1.000000e+00 : f32
    %361 = vector.broadcast %cst_130 : f32 to vector<16x128xf32>
    %362 = arith.addf %361, %360 : vector<16x128xf32>
    %363 = arith.divf %361, %362 : vector<16x128xf32>
    %364 = vector.extract_strided_slice %351 {offsets = [0, 256], sizes = [16, 128], strides = [1, 1]} : vector<16x512xf32> to vector<16x128xf32>
    %365 = math.tanh %364 : vector<16x128xf32>
    %366 = vector.extract_strided_slice %351 {offsets = [0, 384], sizes = [16, 128], strides = [1, 1]} : vector<16x512xf32> to vector<16x128xf32>
    %367 = arith.negf %366 : vector<16x128xf32>
    %368 = math.exp %367 : vector<16x128xf32>
    %cst_131 = arith.constant 1.000000e+00 : f32
    %369 = vector.broadcast %cst_131 : f32 to vector<16x128xf32>
    %370 = arith.addf %369, %368 : vector<16x128xf32>
    %371 = arith.divf %369, %370 : vector<16x128xf32>
    %372 = arith.mulf %363, %342 : vector<16x128xf32>
    %373 = arith.mulf %357, %365 : vector<16x128xf32>
    %374 = arith.addf %372, %373 : vector<16x128xf32>
    %375 = math.tanh %374 : vector<16x128xf32>
    %376 = arith.mulf %371, %375 : vector<16x128xf32>
    %377 = vector.broadcast %c7_i32 : i32 to vector<16x1xi32>
    %378 = arith.cmpi sgt, %14, %377 : vector<16x1xi32>
    %379 = vector.shape_cast %378 : vector<16x1xi1> to vector<16x1xi1>
    %380 = vector.broadcast %379 : vector<16x1xi1> to vector<16x128xi1>
    %381 = arith.select %380, %376, %341 : vector<16x128xi1>, vector<16x128xf32>
    %c0_132 = arith.constant 0 : index
    %c0_133 = arith.constant 0 : index
    %382 = vector.load %arg9[%c0_132, %c0_133] : memref<16x128xf32, #tpu.memory_space<vmem>>, vector<16x128xf32>
    tpu.vector_store %arg9[%c0_132, %c0_133], %381 {strides = array<i32>} : memref<16x128xf32, #tpu.memory_space<vmem>>, vector<16x128xf32>,
    %383 = vector.shape_cast %378 : vector<16x1xi1> to vector<16x1xi1>
    %384 = vector.broadcast %383 : vector<16x1xi1> to vector<16x128xi1>
    %385 = arith.select %384, %374, %342 : vector<16x128xi1>, vector<16x128xf32>
    %c0_134 = arith.constant 0 : index
    %c0_135 = arith.constant 0 : index
    %386 = vector.load %arg10[%c0_134, %c0_135] : memref<16x128xf32, #tpu.memory_space<vmem>>, vector<16x128xf32>
    tpu.vector_store %arg10[%c0_134, %c0_135], %385 {strides = array<i32>} : memref<16x128xf32, #tpu.memory_space<vmem>>, vector<16x128xf32>,
    %c8_i32 = arith.constant 8 : i32
    %c0_136 = arith.constant 0 : index
    %c0_137 = arith.constant 0 : index
    %387 = vector.load %arg9[%c0_136, %c0_137] : memref<16x128xf32, #tpu.memory_space<vmem>>, vector<16x128xf32>
    %c0_138 = arith.constant 0 : index
    %c0_139 = arith.constant 0 : index
    %c0_140 = arith.constant 0 : index
    %388 = vector.load %arg7[%c0_138, %c0_139, %c0_140] : memref<1x16x128xf32, #tpu.memory_space<vmem>>, vector<1x16x128xf32>
    %389 = vector.shape_cast %388 : vector<1x16x128xf32> to vector<16x128xf32>
    %390 = vector.shape_cast %387 : vector<16x128xf32> to vector<1x16x128xf32>
    tpu.vector_store %arg7[%c0_138, %c0_139, %c0_140], %390 {strides = array<i32>} : memref<1x16x128xf32, #tpu.memory_space<vmem>>, vector<1x16x128xf32>,
    return
  }
  func.func @transform_0(%arg0: i32, %arg1: i32) -> (i32, i32, i32) {
    %c0_i32 = arith.constant 0 : i32
    %c0_i32_0 = arith.constant 0 : i32
    return %arg0, %arg1, %c0_i32 : i32, i32, i32
  }
  func.func @transform_1(%arg0: i32, %arg1: i32) -> (i32, i32, i32, i32) {
    %c0_i32 = arith.constant 0 : i32
    %c0_i32_0 = arith.constant 0 : i32
    %c0_i32_1 = arith.constant 0 : i32
    return %arg0, %c0_i32, %arg1, %c0_i32_0 : i32, i32, i32, i32
  }
  func.func @transform_2(%arg0: i32, %arg1: i32) -> (i32, i32, i32) {
    %c0_i32 = arith.constant 0 : i32
    %c0_i32_0 = arith.constant 0 : i32
    %c0_i32_1 = arith.constant 0 : i32
    return %arg0, %c0_i32, %c0_i32_0 : i32, i32, i32
  }
  func.func @transform_3(%arg0: i32, %arg1: i32) -> (i32, i32, i32) {
    %c0_i32 = arith.constant 0 : i32
    %c0_i32_0 = arith.constant 0 : i32
    %c0_i32_1 = arith.constant 0 : i32
    return %arg0, %c0_i32, %c0_i32_0 : i32, i32, i32
  }
  func.func @transform_4(%arg0: i32, %arg1: i32) -> (i32, i32, i32) {
    %c0_i32 = arith.constant 0 : i32
    %c0_i32_0 = arith.constant 0 : i32
    %c0_i32_1 = arith.constant 0 : i32
    return %arg0, %c0_i32, %c0_i32_0 : i32, i32, i32
  }
  func.func @transform_5(%arg0: i32, %arg1: i32) -> (i32, i32, i32) {
    %c0_i32 = arith.constant 0 : i32
    %c0_i32_0 = arith.constant 0 : i32
    return %arg0, %arg1, %c0_i32 : i32, i32, i32
  }
}

</mosaic_0001>

<llo_original>
// kernel: tpu_custom_call.1
$region0: #{tpu_custom_call.1}
  #allocation0 [shape = 'u32[]', space=smem, size = 0x4, offset = 0x4, fixed_abs, tag = 'smem constant byte address 0x4 - core index']
  #allocation1 [shape = 'u32[72,128]{1,0:T(1,128)}', space=vmem, size = 0x9000, scoped, tag = 'internal scratch']
  #allocation2 [shape = 'bf16[8,16,512]{2,1,0:T(8,128)(2,1)}', space=vmem, size = 0x20000, scoped, tag = 'scratch operand']
  #allocation3 [shape = 'f32[16,128]{1,0:T(8,128)}', space=vmem, size = 0x2000, scoped, tag = 'scratch operand']
  #allocation4 [shape = 'f32[16,128]{1,0:T(8,128)}', space=vmem, size = 0x2000, scoped, tag = 'scratch operand']
  %s0 = inlined_call_operand.vmem [shape: s32[2,16,1], index: 0, kind: input, shape index: {}]
  %s1 = inlined_call_operand.hbm [shape: bf16[2,8,16,40], index: 1, kind: input, shape index: {}]
  %s2 = inlined_call_operand.hbm [shape: bf16[2,40,512], index: 2, kind: input, shape index: {}]
  %s3 = inlined_call_operand.hbm [shape: bf16[2,128,512], index: 3, kind: input, shape index: {}]
  %s4 = inlined_call_operand.vmem [shape: f32[2,1,512], index: 4, kind: input, shape index: {}]
  %s5 = inlined_call_operand.hbm [shape: f32[2,16,128], index: 5, kind: output, shape index: {}]
  %s6 = sld [smem:[#allocation0]]
  $region65: #{tpu_custom_call.1} parent=0
    _
  %s8 = ssub.s32 1, %s6
  %s9 = scalar_select 0, %s8, %s6
  $region1: #{tpu_custom_call.1} parent=0
    #allocation5 [shape = 'u8[65536]{0}', space=vmem, size = 0x10000, scoped, tag = 'input window, operand 1']
    #allocation6 [shape = 's32[2]{0}', space=sflag, size = 0x8, scoped, tag = 'scoped memory for tpu_custom_call.1']
    #allocation7 [shape = 's32[2]{0}', space=sflag, size = 0x8, scoped, tag = 'scoped memory for tpu_custom_call.1']
    #allocation8 [shape = 'u8[81920]{0}', space=vmem, size = 0x14000, scoped, tag = 'input window, operand 2']
    #allocation9 [shape = 's32[2]{0}', space=sflag, size = 0x8, scoped, tag = 'scoped memory for tpu_custom_call.1']
    #allocation10 [shape = 'u8[262144]{0}', space=vmem, size = 0x40000, scoped, tag = 'input window, operand 3']
    #allocation11 [shape = 'u8[16384]{0}', space=vmem, size = 0x4000, scoped, tag = 'output window, operand 0']
    %10 = vsyncpa [#allocation6], 0
    %s11 = scalar_lea.sflag [#allocation6], 1
    %12 = vsyncpa %s11, 0
    %13 = vsyncpa [#allocation9], 0
    %s14 = scalar_lea.sflag [#allocation9], 1
    %15 = vsyncpa %s14, 0
    %16 = vsyncpa [#allocation7], 0
    %s17 = scalar_lea.sflag [#allocation7], 1
    %18 = vsyncpa %s17, 0
    loop: start=0, step=1, limit=4
    $region2: #{tpu_custom_call.1} parent=1 // loop_pre_header
      _
    $region3: #{tpu_custom_call.1} parent=1 // loop_header
      %s20 = sphi 0, %s24
      %p21 = scmp.ge.s32.totalorder %s20, 4
      %s27 = sphi 0, %s39
      %s28 = sphi 0, %s35
      %s29 = sphi 0, %s27
      %s30 = sphi 0, %s28
      %s31 = sphi 0, %s29
      %s32 = sphi 0, %s30
      %s44 = sphi 0, %s46
      %s47 = sphi 0, %s44
      %s48 = sphi 0, %s47
      %s64 = sphi 0, %s48
      %s72 = sphi 0, %s74
      %s75 = sphi 0, %s72
      %s76 = sphi 0, %s75
      %s92 = sphi 0, %s76
      %s98 = sphi 0, %s100
      %s101 = sphi 0, %s98
      %s102 = sphi 0, %s101
      %s118 = sphi 0, %s102
      %s124 = sphi 0, %s126
      %s127 = sphi 0, %s124
      %s128 = sphi 0, %s127
      %s144 = sphi 0, %s128
      %s150 = sphi 0, %s152
      %s153 = sphi 0, %s150
      %s154 = sphi 0, %s153
      %s170 = sphi 0, %s154
      %s178 = sphi 0, %s180
      %s181 = sphi 0, %s178
      %s182 = sphi 0, %s181
      %s198 = sphi 0, %s182
    $region4: #{tpu_custom_call.1} parent=1 // loop_header_branch
      %23 = sbr.rel (%p21) target = $region8
    $region5: #{tpu_custom_call.1} parent=1 // loop_body
      %s25 = ssub.s32 %s20, 1
      %s26 = ssub.s32 %s20, 2
      %s33 = sadd.s32 1, %s28
      %p34 = scmp.ge.s32.totalorder %s33, 1
      %s35 = scalar_select %p34, 0, %s33
      %s36 = sadd.s32 1, %s27
      %s37 = scalar_select %p34, %s36, %s27
      %p38 = scmp.ge.s32.totalorder %s37, 2
      %s39 = scalar_select %p38, 0, %s37
      %s40 = ssub.s32 %s27, %s39
      %s41 = ssub.s32 %s28, %s35
      %s42 = sor.u32 %s40, %s41
      %p43 = scmp.eq.s32.totalorder %s42, 0
      %s45 = sadd.s32 %s44, 1
      %s46 = scalar_select %p43, %s44, %s45
      %p49 = pneg %p43
      %p50 = scmp.eq.s32.totalorder %s20, 1
      %p51 = por %p49, %p50
      %p52 = scmp.ne.s32.totalorder %s44, %s47
      %p53 = scmp.eq.s32.totalorder %s20, 0
      %p54 = por %p52, %p53
      %p55 = scmp.ne.s32.totalorder %s44, %s47
      %p56 = scmp.eq.s32.totalorder %s25, 1
      %p57 = por %p55, %p56
      %p58 = scmp.ne.s32.totalorder %s47, %s48
      %p59 = scmp.eq.s32.totalorder %s25, 0
      %p60 = por %p58, %p59
      %p61 = scmp.ne.s32.totalorder %s47, %s48
      %p62 = scmp.eq.s32.totalorder %s26, 1
      %p63 = por %p61, %p62
      %p65 = scmp.ne.s32.totalorder %s48, %s64
      %p66 = scmp.eq.s32.totalorder %s26, 0
      %p67 = por %p65, %p66
      %s68 = ssub.s32 %s27, %s39
      %s69 = ssub.s32 %s28, %s35
      %s70 = sor.u32 %s68, %s69
      %p71 = scmp.eq.s32.totalorder %s70, 0
      %s73 = sadd.s32 %s72, 1
      %s74 = scalar_select %p71, %s72, %s73
      %p77 = pneg %p71
      %p78 = scmp.eq.s32.totalorder %s20, 1
      %p79 = por %p77, %p78
      %p80 = scmp.ne.s32.totalorder %s72, %s75
      %p81 = scmp.eq.s32.totalorder %s20, 0
      %p82 = por %p80, %p81
      %p83 = scmp.ne.s32.totalorder %s72, %s75
      %p84 = scmp.eq.s32.totalorder %s25, 1
      %p85 = por %p83, %p84
      %p86 = scmp.ne.s32.totalorder %s75, %s76
      %p87 = scmp.eq.s32.totalorder %s25, 0
      %p88 = por %p86, %p87
      %p89 = scmp.ne.s32.totalorder %s75, %s76
      %p90 = scmp.eq.s32.totalorder %s26, 1
      %p91 = por %p89, %p90
      %p93 = scmp.ne.s32.totalorder %s76, %s92
      %p94 = scmp.eq.s32.totalorder %s26, 0
      %p95 = por %p93, %p94
      %s96 = ssub.s32 %s27, %s39
      %p97 = scmp.eq.s32.totalorder %s96, 0
      %s99 = sadd.s32 %s98, 1
      %s100 = scalar_select %p97, %s98, %s99
      %p103 = pneg %p97
      %p104 = scmp.eq.s32.totalorder %s20, 1
      %p105 = por %p103, %p104
      %p106 = scmp.ne.s32.totalorder %s98, %s101
      %p107 = scmp.eq.s32.totalorder %s20, 0
      %p108 = por %p106, %p107
      %p109 = scmp.ne.s32.totalorder %s98, %s101
      %p110 = scmp.eq.s32.totalorder %s25, 1
      %p111 = por %p109, %p110
      %p112 = scmp.ne.s32.totalorder %s101, %s102
      %p113 = scmp.eq.s32.totalorder %s25, 0
      %p114 = por %p112, %p113
      %p115 = scmp.ne.s32.totalorder %s101, %s102
      %p116 = scmp.eq.s32.totalorder %s26, 1
      %p117 = por %p115, %p116
      %p119 = scmp.ne.s32.totalorder %s102, %s118
      %p120 = scmp.eq.s32.totalorder %s26, 0
      %p121 = por %p119, %p120
      %s122 = ssub.s32 %s27, %s39
      %p123 = scmp.eq.s32.totalorder %s122, 0
      %s125 = sadd.s32 %s124, 1
      %s126 = scalar_select %p123, %s124, %s125
      %p129 = pneg %p123
      %p130 = scmp.eq.s32.totalorder %s20, 1
      %p131 = por %p129, %p130
      %p132 = scmp.ne.s32.totalorder %s124, %s127
      %p133 = scmp.eq.s32.totalorder %s20, 0
      %p134 = por %p132, %p133
      %p135 = scmp.ne.s32.totalorder %s124, %s127
      %p136 = scmp.eq.s32.totalorder %s25, 1
      %p137 = por %p135, %p136
      %p138 = scmp.ne.s32.totalorder %s127, %s128
      %p139 = scmp.eq.s32.totalorder %s25, 0
      %p140 = por %p138, %p139
      %p141 = scmp.ne.s32.totalorder %s127, %s128
      %p142 = scmp.eq.s32.totalorder %s26, 1
      %p143 = por %p141, %p142
      %p145 = scmp.ne.s32.totalorder %s128, %s144
      %p146 = scmp.eq.s32.totalorder %s26, 0
      %p147 = por %p145, %p146
      %s148 = ssub.s32 %s27, %s39
      %p149 = scmp.eq.s32.totalorder %s148, 0
      %s151 = sadd.s32 %s150, 1
      %s152 = scalar_select %p149, %s150, %s151
      %p155 = pneg %p149
      %p156 = scmp.eq.s32.totalorder %s20, 1
      %p157 = por %p155, %p156
      %p158 = scmp.ne.s32.totalorder %s150, %s153
      %p159 = scmp.eq.s32.totalorder %s20, 0
      %p160 = por %p158, %p159
      %p161 = scmp.ne.s32.totalorder %s150, %s153
      %p162 = scmp.eq.s32.totalorder %s25, 1
      %p163 = por %p161, %p162
      %p164 = scmp.ne.s32.totalorder %s153, %s154
      %p165 = scmp.eq.s32.totalorder %s25, 0
      %p166 = por %p164, %p165
      %p167 = scmp.ne.s32.totalorder %s153, %s154
      %p168 = scmp.eq.s32.totalorder %s26, 1
      %p169 = por %p167, %p168
      %p171 = scmp.ne.s32.totalorder %s154, %s170
      %p172 = scmp.eq.s32.totalorder %s26, 0
      %p173 = por %p171, %p172
      %s174 = ssub.s32 %s27, %s39
      %s175 = ssub.s32 %s28, %s35
      %s176 = sor.u32 %s174, %s175
      %p177 = scmp.eq.s32.totalorder %s176, 0
      %s179 = sadd.s32 %s178, 1
      %s180 = scalar_select %p177, %s178, %s179
      %p183 = pneg %p177
      %p184 = scmp.eq.s32.totalorder %s20, 1
      %p185 = por %p183, %p184
      %p186 = scmp.ne.s32.totalorder %s178, %s181
      %p187 = scmp.eq.s32.totalorder %s20, 0
      %p188 = por %p186, %p187
      %p189 = scmp.ne.s32.totalorder %s178, %s181
      %p190 = scmp.eq.s32.totalorder %s25, 1
      %p191 = por %p189, %p190
      %p192 = scmp.ne.s32.totalorder %s181, %s182
      %p193 = scmp.eq.s32.totalorder %s25, 0
      %p194 = por %p192, %p193
      %p195 = scmp.ne.s32.totalorder %s181, %s182
      %p196 = scmp.eq.s32.totalorder %s26, 1
      %p197 = por %p195, %p196
      %p199 = scmp.ne.s32.totalorder %s182, %s198
      %p200 = scmp.eq.s32.totalorder %s26, 0
      %p201 = por %p199, %p200
      %p202 = scmp.le.s32.totalorder 1, %s20
      %p203 = scmp.lt.s32.totalorder %s20, 3
      %p204 = pnand %p202, %p203
      %p205 = pneg %p204
      // Predicated region
      $region9: #{tpu_custom_call.1} parent=5 // pred_check
        _
      $region10: #{tpu_custom_call.1} parent=5 // pred_check_branch
        %207 = sbr.rel (%p204) target = $region12
      $region11: #{tpu_custom_call.1} parent=5 // pred_region
        %s208 = ssub.s32 %s20, 1
      $region12: #{tpu_custom_call.1} parent=5 // pred_fallthru
        _
      %p209 = scmp.lt.s32.totalorder %s20, 2
      // Predicated region
      $region13: #{tpu_custom_call.1} parent=5 // pred_check
        %p210 = pneg %p209
      $region14: #{tpu_custom_call.1} parent=5 // pred_check_branch
        %212 = sbr.rel (%p210) target = $region16
      $region15: #{tpu_custom_call.1} parent=5 // pred_region
        // Predicated region
        $region17: #{tpu_custom_call.1} parent=15 // pred_check
          %p213 = pneg %p54
        $region18: #{tpu_custom_call.1} parent=15 // pred_check_branch
          %215 = sbr.rel (%p213) target = $region20
        $region19: #{tpu_custom_call.1} parent=15 // pred_region
          %s216 = smul.u32 2, %s28
          %p217 = scmp.lt.s32.totalorder %s27, 1
          %s218 = scalar_select %p217, %s27, 1
          %p219 = scmp.lt.s32.totalorder %s216, 1
          %s220 = scalar_select %p219, %s216, 1
          %s221 = smul.addr %s218, 2
          %s222 = sadd.s32 %s220, %s221
          %s223 = smul.addr %s222, 8
          %s224 = scalar_lea.vmem %s0, %s223
          %s225 = smul.u32 2, %s28
        $region20: #{tpu_custom_call.1} parent=15 // pred_fallthru
          _
        // Predicated region
        $region21: #{tpu_custom_call.1} parent=15 // pred_check
          %p226 = pneg %p82
        $region22: #{tpu_custom_call.1} parent=15 // pred_check_branch
          %228 = sbr.rel (%p226) target = $region24
        $region23: #{tpu_custom_call.1} parent=15 // pred_region
          %s229 = sand.u32 %s72, 1
          %s230 = scalar_lea.sflag [#allocation6], %s229
          %s231 = sand.u32 %s72, 1
          %s232 = smul.addr %s231, 64
          %s233 = scalar_lea.vmem [#allocation5], %s232
          %s234 = smul.u32 2, %s28
          %236 = vsyncadd %s230, 0
          %s237 = smul.addr %s27, 16
          %s238 = sadd.s32 %s234, %s237
          %s239 = smul.addr %s238, 4
          %s240 = scalar_lea.hbm %s1, %s239
          %s241 = sshll.u32 %s240, 4
          %s242 = int_to_ptr.hbm [resolvable:$true] %s241
          %s243 = sshll.u32 %s233, 4
          %s244 = int_to_ptr.vmem [resolvable:$true] %s243
          %249 = dma.hbm_to_vmem [thread:$0]  %s242, 1024, %s244, %s230, 64, 64, 4
        $region24: #{tpu_custom_call.1} parent=15 // pred_fallthru
          _
        // Predicated region
        $region25: #{tpu_custom_call.1} parent=15 // pred_check
          %p250 = pneg %p108
        $region26: #{tpu_custom_call.1} parent=15 // pred_check_branch
          %252 = sbr.rel (%p250) target = $region28
        $region27: #{tpu_custom_call.1} parent=15 // pred_region
          %s253 = sand.u32 %s20, 1
          %s254 = scalar_lea.sflag [#allocation9], %s253
          %s255 = sand.u32 %s98, 1
          %s256 = smul.addr %s255, 80
          %s257 = scalar_lea.vmem [#allocation8], %s256
          %259 = vsyncadd %s254, 0
          %s260 = smul.addr %s27, 20
          %s261 = smul.addr %s260, 4
          %s262 = scalar_lea.hbm %s2, %s261
          %s263 = sshll.u32 %s262, 4
          %s264 = int_to_ptr.hbm [resolvable:$true] %s263
          %s265 = sshll.u32 %s257, 4
          %s266 = int_to_ptr.vmem [resolvable:$true] %s265
          %271 = dma.hbm_to_vmem [thread:$0]  %s264, 1280, %s266, %s254, 256, 256, 16
        $region28: #{tpu_custom_call.1} parent=15 // pred_fallthru
          _
        // Predicated region
        $region29: #{tpu_custom_call.1} parent=15 // pred_check
          %p272 = pneg %p134
        $region30: #{tpu_custom_call.1} parent=15 // pred_check_branch
          %274 = sbr.rel (%p272) target = $region32
        $region31: #{tpu_custom_call.1} parent=15 // pred_region
          %s275 = sand.u32 %s20, 1
          %s276 = scalar_lea.sflag [#allocation9], %s275
          %s277 = sand.u32 %s124, 1
          %s278 = smul.addr %s277, 256
          %s279 = scalar_lea.vmem [#allocation10], %s278
          %281 = vsyncadd %s276, 0
          %s282 = smul.addr %s27, 64
          %s283 = smul.addr %s282, 4
          %s284 = scalar_lea.hbm %s3, %s283
          %s285 = sshll.u32 %s284, 4
          %s286 = int_to_ptr.hbm [resolvable:$true] %s285
          %s287 = sshll.u32 %s279, 4
          %s288 = int_to_ptr.vmem [resolvable:$true] %s287
          %293 = dma.hbm_to_vmem [thread:$0]  %s286, 4096, %s288, %s276, 256, 256, 16
        $region32: #{tpu_custom_call.1} parent=15 // pred_fallthru
          _
        // Predicated region
        $region33: #{tpu_custom_call.1} parent=15 // pred_check
          %p294 = pneg %p160
        $region34: #{tpu_custom_call.1} parent=15 // pred_check_branch
          %296 = sbr.rel (%p294) target = $region36
        $region35: #{tpu_custom_call.1} parent=15 // pred_region
          %p297 = scmp.lt.s32.totalorder %s27, 1
          %s298 = scalar_select %p297, %s27, 1
          %s299 = smul.addr %s298, 4
          %s300 = scalar_lea.vmem %s4, %s299
        $region36: #{tpu_custom_call.1} parent=15 // pred_fallthru
          _
      $region16: #{tpu_custom_call.1} parent=5 // pred_fallthru
        _
      %p301 = scmp.le.s32.totalorder 1, %s20
      %p302 = scmp.lt.s32.totalorder %s20, 3
      %p303 = pnand %p301, %p302
      %p304 = pneg %p303
      // Predicated region
      $region37: #{tpu_custom_call.1} parent=5 // pred_check
        _
      $region38: #{tpu_custom_call.1} parent=5 // pred_check_branch
        %306 = sbr.rel (%p303) target = $region40
      $region39: #{tpu_custom_call.1} parent=5 // pred_region
        %s307 = ssub.s32 %s20, 1
        %s308 = sand.u32 %s75, 1
        %s309 = scalar_lea.sflag [#allocation6], %s308
        %s310 = sand.u32 %s75, 1
        %s311 = smul.addr %s310, 64
        %s312 = scalar_lea.vmem [#allocation5], %s311
        // Predicated region
        $region41: #{tpu_custom_call.1} parent=39 // pred_check
          %p313 = pneg %p88
        $region42: #{tpu_custom_call.1} parent=39 // pred_check_branch
          %315 = sbr.rel (%p313) target = $region44
        $region43: #{tpu_custom_call.1} parent=39 // pred_region
          %317 = dma.done %s309, 1024
        $region44: #{tpu_custom_call.1} parent=39 // pred_fallthru
          _
        %s318 = sand.u32 %s25, 1
        %s319 = scalar_lea.sflag [#allocation9], %s318
        %s320 = sand.u32 %s101, 1
        %s321 = smul.addr %s320, 80
        %s322 = scalar_lea.vmem [#allocation8], %s321
        // Predicated region
        $region45: #{tpu_custom_call.1} parent=39 // pred_check
          %p323 = pneg %p114
        $region46: #{tpu_custom_call.1} parent=39 // pred_check_branch
          %325 = sbr.rel (%p323) target = $region48
        $region47: #{tpu_custom_call.1} parent=39 // pred_region
          %327 = dma.done %s319, 1280
        $region48: #{tpu_custom_call.1} parent=39 // pred_fallthru
          _
        %s328 = sand.u32 %s25, 1
        %s329 = scalar_lea.sflag [#allocation9], %s328
        %s330 = sand.u32 %s127, 1
        %s331 = smul.addr %s330, 256
        %s332 = scalar_lea.vmem [#allocation10], %s331
        // Predicated region
        $region49: #{tpu_custom_call.1} parent=39 // pred_check
          %p333 = pneg %p140
        $region50: #{tpu_custom_call.1} parent=39 // pred_check_branch
          %335 = sbr.rel (%p333) target = $region52
        $region51: #{tpu_custom_call.1} parent=39 // pred_region
          %337 = dma.done %s329, 4096
        $region52: #{tpu_custom_call.1} parent=39 // pred_fallthru
          _
        %s338 = smul.u32 2, %s30
        %p339 = scmp.lt.s32.totalorder %s29, 1
        %s340 = scalar_select %p339, %s29, 1
        %p341 = scmp.lt.s32.totalorder %s338, 1
        %s342 = scalar_select %p341, %s338, 1
        %s343 = smul.addr %s340, 2
        %s344 = sadd.s32 %s342, %s343
        %s345 = smul.addr %s344, 8
        %s346 = scalar_lea.vmem %s0, %s345
        %p347 = pneg %p60
        %p348 = pneg %p57
        %s349 = sand.u32 %s75, 1
        %s350 = scalar_lea.sflag [#allocation6], %s349
        %s351 = sand.u32 %s75, 1
        %s352 = smul.addr %s351, 64
        %s353 = scalar_lea.vmem [#allocation5], %s352
        %p354 = pneg %p88
        %p355 = pneg %p85
        %s356 = sand.u32 %s25, 1
        %s357 = scalar_lea.sflag [#allocation9], %s356
        %s358 = sand.u32 %s101, 1
        %s359 = smul.addr %s358, 80
        %s360 = scalar_lea.vmem [#allocation8], %s359
        %p361 = pneg %p114
        %p362 = pneg %p111
        %s363 = sand.u32 %s25, 1
        %s364 = scalar_lea.sflag [#allocation9], %s363
        %s365 = sand.u32 %s127, 1
        %s366 = smul.addr %s365, 256
        %s367 = scalar_lea.vmem [#allocation10], %s366
        %p368 = pneg %p140
        %p369 = pneg %p137
        %p370 = scmp.lt.s32.totalorder %s29, 1
        %s371 = scalar_select %p370, %s29, 1
        %s372 = smul.addr %s371, 4
        %s373 = scalar_lea.vmem %s4, %s372
        %p374 = pneg %p166
        %p375 = pneg %p163
        %p376 = pneg %p194
        %p377 = pneg %p191
        %s378 = sand.u32 %s181, 1
        %s379 = scalar_lea.sflag [#allocation7], %s378
        %s380 = sand.u32 %s181, 1
        %s381 = smul.addr %s380, 16
        %s382 = scalar_lea.vmem [#allocation11], %s381
        %s383 = smul.u32 2, %s30
        %p384 = scmp.lt.s32.totalorder %s29, 1
        %s385 = scalar_select %p384, %s29, 1
        %p386 = scmp.lt.s32.totalorder %s383, 1
        %s387 = scalar_select %p386, %s383, 1
        %s388 = smul.addr %s385, 2
        %s389 = sadd.s32 %s387, %s388
        %s390 = smul.addr %s389, 8
        %s391 = scalar_lea.vmem %s0, %s390
        %s392 = smul.u32 2, %s30
        %s393 = smul.u32 2, %s30
        %p394 = scmp.lt.s32.totalorder %s29, 1
        %s395 = scalar_select %p394, %s29, 1
        %s396 = smul.addr %s395, 4
        %s397 = scalar_lea.vmem %s4, %s396
        %s398 = smul.u32 2, %s30
        %v400 = vld [vmem:[%s312] sm:$0xf]
        %v401 = vld [vmem:[%s312 + $0x4] sm:$0xf]
        %v402 = vld [vmem:[%s312 + $0x8] sm:$0xf]
        %v403 = vld [vmem:[%s312 + $0xc] sm:$0xf]
        %v404 = vld [vmem:[%s312 + $0x10] sm:$0xf]
        %v405 = vld [vmem:[%s312 + $0x14] sm:$0xf]
        %v406 = vld [vmem:[%s312 + $0x18] sm:$0xf]
        %v407 = vld [vmem:[%s312 + $0x1c] sm:$0xf]
        %v408 = vld [vmem:[%s312 + $0x20] sm:$0xf]
        %v409 = vld [vmem:[%s312 + $0x24] sm:$0xf]
        %v410 = vld [vmem:[%s312 + $0x28] sm:$0xf]
        %v411 = vld [vmem:[%s312 + $0x2c] sm:$0xf]
        %v412 = vld [vmem:[%s312 + $0x30] sm:$0xf]
        %v413 = vld [vmem:[%s312 + $0x34] sm:$0xf]
        %v414 = vld [vmem:[%s312 + $0x38] sm:$0xf]
        %v415 = vld [vmem:[%s312 + $0x3c] sm:$0xf]
        %v416 = vld [vmem:[%s322] sm:$0xff]
        %v417 = vld [vmem:[%s322 + $0x8] sm:$0xff]
        %v418 = vld [vmem:[%s322 + $0x10] sm:$0xff]
        %v419 = vld [vmem:[%s322 + $0x18] sm:$0xff]
        %v420 = vld [vmem:[%s322 + $0x20] sm:$0xff]
        %v421 = vld [vmem:[%s322 + $0x28] sm:$0xff]
        %v422 = vld [vmem:[%s322 + $0x30] sm:$0xff]
        %v423 = vld [vmem:[%s322 + $0x38] sm:$0xff]
        %v424 = vld [vmem:[%s322 + $0x40] sm:$0xff]
        %v425 = vld [vmem:[%s322 + $0x48] sm:$0xff]
        %v442 = vunpack.c.l.b16 %v400
        %v443 = vunpack.c.l.b16 %v401
        %v444 = vunpack.c.l.b16 %v402
        %v445 = vunpack.c.l.b16 %v403
        %v446 = vunpack.c.l.b16 %v404
        %v447 = vunpack.c.l.b16 %v405
        %v448 = vunpack.c.l.b16 %v406
        %v449 = vunpack.c.l.b16 %v407
        %v450 = vunpack.c.l.b16 %v408
        %v451 = vunpack.c.l.b16 %v409
        %v452 = vunpack.c.l.b16 %v410
        %v453 = vunpack.c.l.b16 %v411
        %v454 = vunpack.c.l.b16 %v412
        %v455 = vunpack.c.l.b16 %v413
        %v456 = vunpack.c.l.b16 %v414
        %v457 = vunpack.c.l.b16 %v415
        %v458 = vpack.c.b16 %v443, %v442
        %v459 = vpack.c.b16 %v445, %v444
        %v460 = vpack.c.b16 %v447, %v446
        %v461 = vpack.c.b16 %v449, %v448
        %v462 = vpack.c.b16 %v451, %v450
        %v463 = vpack.c.b16 %v453, %v452
        %v464 = vpack.c.b16 %v455, %v454
        %v465 = vpack.c.b16 %v457, %v456
        %v476 = vunpack.c.l.b16 %v416
        %v477 = vunpack.c.h.b16 %v416
        %v478 = vunpack.c.l.b16 %v417
        %v479 = vunpack.c.h.b16 %v417
        %v480 = vunpack.c.l.b16 %v418
        %v481 = vunpack.c.h.b16 %v418
        %v482 = vunpack.c.l.b16 %v419
        %v483 = vunpack.c.h.b16 %v419
        %v484 = vunpack.c.l.b16 %v420
        %v485 = vunpack.c.h.b16 %v420
        %v486 = vunpack.c.l.b16 %v421
        %v487 = vunpack.c.h.b16 %v421
        %v488 = vunpack.c.l.b16 %v422
        %v489 = vunpack.c.h.b16 %v422
        %v490 = vunpack.c.l.b16 %v423
        %v491 = vunpack.c.h.b16 %v423
        %v492 = vunpack.c.l.b16 %v424
        %v493 = vunpack.c.h.b16 %v424
        %v494 = vunpack.c.l.b16 %v425
        %v495 = vunpack.c.h.b16 %v425
        %v496 = vpack.c.b16 %v480, %v476
        %v497 = vpack.c.b16 %v481, %v477
        %v498 = vpack.c.b16 %v482, %v478
        %v499 = vpack.c.b16 %v483, %v479
        %v500 = vpack.c.b16 %v488, %v484
        %v501 = vpack.c.b16 %v489, %v485
        %v502 = vpack.c.b16 %v490, %v486
        %v503 = vpack.c.b16 %v491, %v487
        %v504 = vpack.c.b16 %v492, %v492
        %v505 = vpack.c.b16 %v493, %v493
        %v506 = vpack.c.b16 %v494, %v494
        %v507 = vpack.c.b16 %v495, %v495
        %vm516 = vcmask 326656
        %v518 = vsel %vm516, %v458, 0
        %v521 = vsel %vm516, %v459, 0
        %v524 = vsel %vm516, %v460, 0
        %v527 = vsel %vm516, %v461, 0
        %v530 = vsel %vm516, %v462, 0
        %v533 = vsel %vm516, %v463, 0
        %v536 = vsel %vm516, %v464, 0
        %v539 = vsel %vm516, %v465, 0
        %vm541 = vcmask 1043456
        %v543 = vsel %vm541, %v504, 0
        %v546 = vsel %vm541, %v505, 0
        %v549 = vsel %vm541, %v506, 0
        %v552 = vsel %vm541, %v507, 0
        %554 = vmatpush.bf16.msra.mxu0 0
        %555 = vmatpush.bf16.msra.mxu0 0
        %556 = vmatpush.bf16.msra.mxu0 0
        %557 = vmatpush.bf16.msra.mxu0 0
        %558 = vmatpush.bf16.msra.mxu0 0
        %559 = vmatpush.bf16.msra.mxu0 %v543
        %560 = vmatpush.bf16.msra.mxu0 %v500
        %561 = vmatpush.bf16.msra.mxu0 %v496
        %562 = vmatmul.bf16.gmra.mxu0 %v518
        %v563 = vpop.f32.mrf.mxu0
        %v564 = vadd.f32 0.0, %v563
        %v565 = vpop.f32.mrf.mxu0
        %v566 = vadd.f32 0.0, %v565
        %567 = vmatmul.bf16.gmra.mxu0 %v521
        %v568 = vpop.f32.mrf.mxu0
        %v569 = vadd.f32 0.0, %v568
        %v570 = vpop.f32.mrf.mxu0
        %v571 = vadd.f32 0.0, %v570
        %572 = vmatmul.bf16.gmra.mxu0 %v524
        %v573 = vpop.f32.mrf.mxu0
        %v574 = vadd.f32 0.0, %v573
        %v575 = vpop.f32.mrf.mxu0
        %v576 = vadd.f32 0.0, %v575
        %577 = vmatmul.bf16.gmra.mxu0 %v527
        %v578 = vpop.f32.mrf.mxu0
        %v579 = vadd.f32 0.0, %v578
        %v580 = vpop.f32.mrf.mxu0
        %v581 = vadd.f32 0.0, %v580
        %582 = vmatmul.bf16.gmra.mxu0 %v530
        %v583 = vpop.f32.mrf.mxu0
        %v584 = vadd.f32 0.0, %v583
        %v585 = vpop.f32.mrf.mxu0
        %v586 = vadd.f32 0.0, %v585
        %587 = vmatmul.bf16.gmra.mxu0 %v533
        %v588 = vpop.f32.mrf.mxu0
        %v589 = vadd.f32 0.0, %v588
        %v590 = vpop.f32.mrf.mxu0
        %v591 = vadd.f32 0.0, %v590
        %592 = vmatmul.bf16.gmra.mxu0 %v536
        %v593 = vpop.f32.mrf.mxu0
        %v594 = vadd.f32 0.0, %v593
        %v595 = vpop.f32.mrf.mxu0
        %v596 = vadd.f32 0.0, %v595
        %597 = vmatmul.bf16.gmra.mxu0 %v539
        %v598 = vpop.f32.mrf.mxu0
        %v599 = vadd.f32 0.0, %v598
        %v600 = vpop.f32.mrf.mxu0
        %v601 = vadd.f32 0.0, %v600
        %602 = vdwg.mxu0
        %603 = vmatpush.bf16.msra.mxu0 0
        %604 = vmatpush.bf16.msra.mxu0 0
        %605 = vmatpush.bf16.msra.mxu0 0
        %606 = vmatpush.bf16.msra.mxu0 0
        %607 = vmatpush.bf16.msra.mxu0 0
        %608 = vmatpush.bf16.msra.mxu0 %v546
        %609 = vmatpush.bf16.msra.mxu0 %v501
        %610 = vmatpush.bf16.msra.mxu0 %v497
        %611 = vmatmul.bf16.gmra.mxu0 %v518
        %v612 = vpop.f32.mrf.mxu0
        %v613 = vadd.f32 0.0, %v612
        %v614 = vpop.f32.mrf.mxu0
        %v615 = vadd.f32 0.0, %v614
        %616 = vmatmul.bf16.gmra.mxu0 %v521
        %v617 = vpop.f32.mrf.mxu0
        %v618 = vadd.f32 0.0, %v617
        %v619 = vpop.f32.mrf.mxu0
        %v620 = vadd.f32 0.0, %v619
        %621 = vmatmul.bf16.gmra.mxu0 %v524
        %v622 = vpop.f32.mrf.mxu0
        %v623 = vadd.f32 0.0, %v622
        %v624 = vpop.f32.mrf.mxu0
        %v625 = vadd.f32 0.0, %v624
        %626 = vmatmul.bf16.gmra.mxu0 %v527
        %v627 = vpop.f32.mrf.mxu0
        %v628 = vadd.f32 0.0, %v627
        %v629 = vpop.f32.mrf.mxu0
        %v630 = vadd.f32 0.0, %v629
        %631 = vmatmul.bf16.gmra.mxu0 %v530
        %v632 = vpop.f32.mrf.mxu0
        %v633 = vadd.f32 0.0, %v632
        %v634 = vpop.f32.mrf.mxu0
        %v635 = vadd.f32 0.0, %v634
        %636 = vmatmul.bf16.gmra.mxu0 %v533
        %v637 = vpop.f32.mrf.mxu0
        %v638 = vadd.f32 0.0, %v637
        %v639 = vpop.f32.mrf.mxu0
        %v640 = vadd.f32 0.0, %v639
        %641 = vmatmul.bf16.gmra.mxu0 %v536
        %v642 = vpop.f32.mrf.mxu0
        %v643 = vadd.f32 0.0, %v642
        %v644 = vpop.f32.mrf.mxu0
        %v645 = vadd.f32 0.0, %v644
        %646 = vmatmul.bf16.gmra.mxu0 %v539
        %v647 = vpop.f32.mrf.mxu0
        %v648 = vadd.f32 0.0, %v647
        %v649 = vpop.f32.mrf.mxu0
        %v650 = vadd.f32 0.0, %v649
        %651 = vdwg.mxu0
        %652 = vmatpush.bf16.msra.mxu0 0
        %653 = vmatpush.bf16.msra.mxu0 0
        %654 = vmatpush.bf16.msra.mxu0 0
        %655 = vmatpush.bf16.msra.mxu0 0
        %656 = vmatpush.bf16.msra.mxu0 0
        %657 = vmatpush.bf16.msra.mxu0 %v549
        %658 = vmatpush.bf16.msra.mxu0 %v502
        %659 = vmatpush.bf16.msra.mxu0 %v498
        %660 = vmatmul.bf16.gmra.mxu0 %v518
        %v661 = vpop.f32.mrf.mxu0
        %v662 = vadd.f32 0.0, %v661
        %v663 = vpop.f32.mrf.mxu0
        %v664 = vadd.f32 0.0, %v663
        %665 = vmatmul.bf16.gmra.mxu0 %v521
        %v666 = vpop.f32.mrf.mxu0
        %v667 = vadd.f32 0.0, %v666
        %v668 = vpop.f32.mrf.mxu0
        %v669 = vadd.f32 0.0, %v668
        %670 = vmatmul.bf16.gmra.mxu0 %v524
        %v671 = vpop.f32.mrf.mxu0
        %v672 = vadd.f32 0.0, %v671
        %v673 = vpop.f32.mrf.mxu0
        %v674 = vadd.f32 0.0, %v673
        %675 = vmatmul.bf16.gmra.mxu0 %v527
        %v676 = vpop.f32.mrf.mxu0
        %v677 = vadd.f32 0.0, %v676
        %v678 = vpop.f32.mrf.mxu0
        %v679 = vadd.f32 0.0, %v678
        %680 = vmatmul.bf16.gmra.mxu0 %v530
        %v681 = vpop.f32.mrf.mxu0
        %v682 = vadd.f32 0.0, %v681
        %v683 = vpop.f32.mrf.mxu0
        %v684 = vadd.f32 0.0, %v683
        %685 = vmatmul.bf16.gmra.mxu0 %v533
        %v686 = vpop.f32.mrf.mxu0
        %v687 = vadd.f32 0.0, %v686
        %v688 = vpop.f32.mrf.mxu0
        %v689 = vadd.f32 0.0, %v688
        %690 = vmatmul.bf16.gmra.mxu0 %v536
        %v691 = vpop.f32.mrf.mxu0
        %v692 = vadd.f32 0.0, %v691
        %v693 = vpop.f32.mrf.mxu0
        %v694 = vadd.f32 0.0, %v693
        %695 = vmatmul.bf16.gmra.mxu0 %v539
        %v696 = vpop.f32.mrf.mxu0
        %v697 = vadd.f32 0.0, %v696
        %v698 = vpop.f32.mrf.mxu0
        %v699 = vadd.f32 0.0, %v698
        %700 = vdwg.mxu0
        %701 = vmatpush.bf16.msra.mxu0 0
        %702 = vmatpush.bf16.msra.mxu0 0
        %703 = vmatpush.bf16.msra.mxu0 0
        %704 = vmatpush.bf16.msra.mxu0 0
        %705 = vmatpush.bf16.msra.mxu0 0
        %706 = vmatpush.bf16.msra.mxu0 %v552
        %707 = vmatpush.bf16.msra.mxu0 %v503
        %708 = vmatpush.bf16.msra.mxu0 %v499
        %709 = vmatmul.bf16.gmra.mxu0 %v518
        %v710 = vpop.f32.mrf.mxu0
        %v711 = vadd.f32 0.0, %v710
        %v712 = vpop.f32.mrf.mxu0
        %v713 = vadd.f32 0.0, %v712
        %714 = vmatmul.bf16.gmra.mxu0 %v521
        %v715 = vpop.f32.mrf.mxu0
        %v716 = vadd.f32 0.0, %v715
        %v717 = vpop.f32.mrf.mxu0
        %v718 = vadd.f32 0.0, %v717
        %719 = vmatmul.bf16.gmra.mxu0 %v524
        %v720 = vpop.f32.mrf.mxu0
        %v721 = vadd.f32 0.0, %v720
        %v722 = vpop.f32.mrf.mxu0
        %v723 = vadd.f32 0.0, %v722
        %724 = vmatmul.bf16.gmra.mxu0 %v527
        %v725 = vpop.f32.mrf.mxu0
        %v726 = vadd.f32 0.0, %v725
        %v727 = vpop.f32.mrf.mxu0
        %v728 = vadd.f32 0.0, %v727
        %729 = vmatmul.bf16.gmra.mxu0 %v530
        %v730 = vpop.f32.mrf.mxu0
        %v731 = vadd.f32 0.0, %v730
        %v732 = vpop.f32.mrf.mxu0
        %v733 = vadd.f32 0.0, %v732
        %734 = vmatmul.bf16.gmra.mxu0 %v533
        %v735 = vpop.f32.mrf.mxu0
        %v736 = vadd.f32 0.0, %v735
        %v737 = vpop.f32.mrf.mxu0
        %v738 = vadd.f32 0.0, %v737
        %739 = vmatmul.bf16.gmra.mxu0 %v536
        %v740 = vpop.f32.mrf.mxu0
        %v741 = vadd.f32 0.0, %v740
        %v742 = vpop.f32.mrf.mxu0
        %v743 = vadd.f32 0.0, %v742
        %744 = vmatmul.bf16.gmra.mxu0 %v539
        %v745 = vpop.f32.mrf.mxu0
        %v746 = vadd.f32 0.0, %v745
        %v747 = vpop.f32.mrf.mxu0
        %v748 = vadd.f32 0.0, %v747
        %749 = vdwg.mxu0
        %v750 = vpack.c.bf16 %v613, %v564
        %v751 = vpack.c.bf16 %v711, %v662
        %v752 = vpack.c.bf16 %v615, %v566
        %v753 = vpack.c.bf16 %v713, %v664
        %v754 = vpack.c.bf16 %v618, %v569
        %v755 = vpack.c.bf16 %v716, %v667
        %v756 = vpack.c.bf16 %v620, %v571
        %v757 = vpack.c.bf16 %v718, %v669
        %v758 = vpack.c.bf16 %v623, %v574
        %v759 = vpack.c.bf16 %v721, %v672
        %v760 = vpack.c.bf16 %v625, %v576
        %v761 = vpack.c.bf16 %v723, %v674
        %v762 = vpack.c.bf16 %v628, %v579
        %v763 = vpack.c.bf16 %v726, %v677
        %v764 = vpack.c.bf16 %v630, %v581
        %v765 = vpack.c.bf16 %v728, %v679
        %v766 = vpack.c.bf16 %v633, %v584
        %v767 = vpack.c.bf16 %v731, %v682
        %v768 = vpack.c.bf16 %v635, %v586
        %v769 = vpack.c.bf16 %v733, %v684
        %v770 = vpack.c.bf16 %v638, %v589
        %v771 = vpack.c.bf16 %v736, %v687
        %v772 = vpack.c.bf16 %v640, %v591
        %v773 = vpack.c.bf16 %v738, %v689
        %v774 = vpack.c.bf16 %v643, %v594
        %v775 = vpack.c.bf16 %v741, %v692
        %v776 = vpack.c.bf16 %v645, %v596
        %v777 = vpack.c.bf16 %v743, %v694
        %v778 = vpack.c.bf16 %v648, %v599
        %v779 = vpack.c.bf16 %v746, %v697
        %v780 = vpack.c.bf16 %v650, %v601
        %v781 = vpack.c.bf16 %v748, %v699
        %782 = vst [vmem:[#allocation2] sm:$0xff] %v750
        %783 = vst [vmem:[#allocation2 + $0x8] sm:$0xff] %v751
        %784 = vst [vmem:[#allocation2 + $0x10] sm:$0xff] %v752
        %785 = vst [vmem:[#allocation2 + $0x18] sm:$0xff] %v753
        %786 = vst [vmem:[#allocation2 + $0x20] sm:$0xff] %v754
        %787 = vst [vmem:[#allocation2 + $0x28] sm:$0xff] %v755
        %788 = vst [vmem:[#allocation2 + $0x30] sm:$0xff] %v756
        %789 = vst [vmem:[#allocation2 + $0x38] sm:$0xff] %v757
        %790 = vst [vmem:[#allocation2 + $0x40] sm:$0xff] %v758
        %791 = vst [vmem:[#allocation2 + $0x48] sm:$0xff] %v759
        %792 = vst [vmem:[#allocation2 + $0x50] sm:$0xff] %v760
        %793 = vst [vmem:[#allocation2 + $0x58] sm:$0xff] %v761
        %794 = vst [vmem:[#allocation2 + $0x60] sm:$0xff] %v762
        %795 = vst [vmem:[#allocation2 + $0x68] sm:$0xff] %v763
        %796 = vst [vmem:[#allocation2 + $0x70] sm:$0xff] %v764
        %797 = vst [vmem:[#allocation2 + $0x78] sm:$0xff] %v765
        %798 = vst [vmem:[#allocation2 + $0x80] sm:$0xff] %v766
        %799 = vst [vmem:[#allocation2 + $0x88] sm:$0xff] %v767
        %800 = vst [vmem:[#allocation2 + $0x90] sm:$0xff] %v768
        %801 = vst [vmem:[#allocation2 + $0x98] sm:$0xff] %v769
        %802 = vst [vmem:[#allocation2 + $0xa0] sm:$0xff] %v770
        %803 = vst [vmem:[#allocation2 + $0xa8] sm:$0xff] %v771
        %804 = vst [vmem:[#allocation2 + $0xb0] sm:$0xff] %v772
        %805 = vst [vmem:[#allocation2 + $0xb8] sm:$0xff] %v773
        %806 = vst [vmem:[#allocation2 + $0xc0] sm:$0xff] %v774
        %807 = vst [vmem:[#allocation2 + $0xc8] sm:$0xff] %v775
        %808 = vst [vmem:[#allocation2 + $0xd0] sm:$0xff] %v776
        %809 = vst [vmem:[#allocation2 + $0xd8] sm:$0xff] %v777
        %810 = vst [vmem:[#allocation2 + $0xe0] sm:$0xff] %v778
        %811 = vst [vmem:[#allocation2 + $0xe8] sm:$0xff] %v779
        %812 = vst [vmem:[#allocation2 + $0xf0] sm:$0xff] %v780
        %813 = vst [vmem:[#allocation2 + $0xf8] sm:$0xff] %v781
        %v814 = vld [vmem:[%s332] sm:$0xff]
        %v815 = vld [vmem:[%s332 + $0x8] sm:$0xff]
        %v816 = vld [vmem:[%s332 + $0x10] sm:$0xff]
        %v817 = vld [vmem:[%s332 + $0x18] sm:$0xff]
        %v818 = vld [vmem:[%s332 + $0x20] sm:$0xff]
        %v819 = vld [vmem:[%s332 + $0x28] sm:$0xff]
        %v820 = vld [vmem:[%s332 + $0x30] sm:$0xff]
        %v821 = vld [vmem:[%s332 + $0x38] sm:$0xff]
        %v822 = vld [vmem:[%s332 + $0x40] sm:$0xff]
        %v823 = vld [vmem:[%s332 + $0x48] sm:$0xff]
        %v824 = vld [vmem:[%s332 + $0x50] sm:$0xff]
        %v825 = vld [vmem:[%s332 + $0x58] sm:$0xff]
        %v826 = vld [vmem:[%s332 + $0x60] sm:$0xff]
        %v827 = vld [vmem:[%s332 + $0x68] sm:$0xff]
        %v828 = vld [vmem:[%s332 + $0x70] sm:$0xff]
        %v829 = vld [vmem:[%s332 + $0x78] sm:$0xff]
        %v830 = vld [vmem:[%s332 + $0x80] sm:$0xff]
        %v831 = vld [vmem:[%s332 + $0x88] sm:$0xff]
        %v832 = vld [vmem:[%s332 + $0x90] sm:$0xff]
        %v833 = vld [vmem:[%s332 + $0x98] sm:$0xff]
        %v834 = vld [vmem:[%s332 + $0xa0] sm:$0xff]
        %v835 = vld [vmem:[%s332 + $0xa8] sm:$0xff]
        %v836 = vld [vmem:[%s332 + $0xb0] sm:$0xff]
        %v837 = vld [vmem:[%s332 + $0xb8] sm:$0xff]
        %v838 = vld [vmem:[%s332 + $0xc0] sm:$0xff]
        %v839 = vld [vmem:[%s332 + $0xc8] sm:$0xff]
        %v840 = vld [vmem:[%s332 + $0xd0] sm:$0xff]
        %v841 = vld [vmem:[%s332 + $0xd8] sm:$0xff]
        %v842 = vld [vmem:[%s332 + $0xe0] sm:$0xff]
        %v843 = vld [vmem:[%s332 + $0xe8] sm:$0xff]
        %v844 = vld [vmem:[%s332 + $0xf0] sm:$0xff]
        %v845 = vld [vmem:[%s332 + $0xf8] sm:$0xff]
        %v846 = vld [vmem:[%s397] sm:$0xf]
        %v847 = vld [vmem:[%s391] sm:$0xff]
        %v848 = vld [vmem:[%s391 + $0x8] sm:$0xff]
        %849 = vst [vmem:[#allocation3] sm:$0xff] 0.0
        %850 = vst [vmem:[#allocation3 + $0x8] sm:$0xff] 0.0
        %851 = vst [vmem:[#allocation4] sm:$0xff] 0.0
        %852 = vst [vmem:[#allocation4 + $0x8] sm:$0xff] 0.0
        %v853 = vld [vmem:[#allocation3] sm:$0xff]
        %v854 = vld [vmem:[#allocation3 + $0x8] sm:$0xff]
        %v855 = vld [vmem:[#allocation4] sm:$0xff]
        %v856 = vld [vmem:[#allocation4 + $0x8] sm:$0xff]
        %v857 = vld [vmem:[#allocation2] sm:$0xff]
        %v858 = vld [vmem:[#allocation2 + $0x8] sm:$0xff]
        %v859 = vld [vmem:[#allocation2 + $0x10] sm:$0xff]
        %v860 = vld [vmem:[#allocation2 + $0x18] sm:$0xff]
        %v861 = vunpack.c.l.bf16 %v857
        %v862 = vunpack.c.h.bf16 %v857
        %v863 = vunpack.c.l.bf16 %v858
        %v864 = vunpack.c.h.bf16 %v858
        %v865 = vunpack.c.l.bf16 %v859
        %v866 = vunpack.c.h.bf16 %v859
        %v867 = vunpack.c.l.bf16 %v860
        %v868 = vunpack.c.h.bf16 %v860
        %v870 = vperm.slane %v846, 0
        %v871 = vperm.slane %v846, 1
        %v872 = vperm.slane %v846, 2
        %v873 = vperm.slane %v846, 3
        %v878 = vadd.f32 %v861, %v870
        %v879 = vadd.f32 %v862, %v871
        %v880 = vadd.f32 %v863, %v872
        %v881 = vadd.f32 %v864, %v873
        %v882 = vadd.f32 %v865, %v870
        %v883 = vadd.f32 %v866, %v871
        %v884 = vadd.f32 %v867, %v872
        %v885 = vadd.f32 %v868, %v873
        %v886 = vpack.c.bf16 %v854, %v853
        %v919 = vunpack.c.l.b16 %v814
        %v920 = vunpack.c.h.b16 %v814
        %v921 = vunpack.c.l.b16 %v815
        %v922 = vunpack.c.h.b16 %v815
        %v923 = vunpack.c.l.b16 %v816
        %v924 = vunpack.c.h.b16 %v816
        %v925 = vunpack.c.l.b16 %v817
        %v926 = vunpack.c.h.b16 %v817
        %v927 = vunpack.c.l.b16 %v818
        %v928 = vunpack.c.h.b16 %v818
        %v929 = vunpack.c.l.b16 %v819
        %v930 = vunpack.c.h.b16 %v819
        %v931 = vunpack.c.l.b16 %v820
        %v932 = vunpack.c.h.b16 %v820
        %v933 = vunpack.c.l.b16 %v821
        %v934 = vunpack.c.h.b16 %v821
        %v935 = vunpack.c.l.b16 %v822
        %v936 = vunpack.c.h.b16 %v822
        %v937 = vunpack.c.l.b16 %v823
        %v938 = vunpack.c.h.b16 %v823
        %v939 = vunpack.c.l.b16 %v824
        %v940 = vunpack.c.h.b16 %v824
        %v941 = vunpack.c.l.b16 %v825
        %v942 = vunpack.c.h.b16 %v825
        %v943 = vunpack.c.l.b16 %v826
        %v944 = vunpack.c.h.b16 %v826
        %v945 = vunpack.c.l.b16 %v827
        %v946 = vunpack.c.h.b16 %v827
        %v947 = vunpack.c.l.b16 %v828
        %v948 = vunpack.c.h.b16 %v828
        %v949 = vunpack.c.l.b16 %v829
        %v950 = vunpack.c.h.b16 %v829
        %v951 = vunpack.c.l.b16 %v830
        %v952 = vunpack.c.h.b16 %v830
        %v953 = vunpack.c.l.b16 %v831
        %v954 = vunpack.c.h.b16 %v831
        %v955 = vunpack.c.l.b16 %v832
        %v956 = vunpack.c.h.b16 %v832
        %v957 = vunpack.c.l.b16 %v833
        %v958 = vunpack.c.h.b16 %v833
        %v959 = vunpack.c.l.b16 %v834
        %v960 = vunpack.c.h.b16 %v834
        %v961 = vunpack.c.l.b16 %v835
        %v962 = vunpack.c.h.b16 %v835
        %v963 = vunpack.c.l.b16 %v836
        %v964 = vunpack.c.h.b16 %v836
        %v965 = vunpack.c.l.b16 %v837
        %v966 = vunpack.c.h.b16 %v837
        %v967 = vunpack.c.l.b16 %v838
        %v968 = vunpack.c.h.b16 %v838
        %v969 = vunpack.c.l.b16 %v839
        %v970 = vunpack.c.h.b16 %v839
        %v971 = vunpack.c.l.b16 %v840
        %v972 = vunpack.c.h.b16 %v840
        %v973 = vunpack.c.l.b16 %v841
        %v974 = vunpack.c.h.b16 %v841
        %v975 = vunpack.c.l.b16 %v842
        %v976 = vunpack.c.h.b16 %v842
        %v977 = vunpack.c.l.b16 %v843
        %v978 = vunpack.c.h.b16 %v843
        %v979 = vunpack.c.l.b16 %v844
        %v980 = vunpack.c.h.b16 %v844
        %v981 = vunpack.c.l.b16 %v845
        %v982 = vunpack.c.h.b16 %v845
        %v983 = vpack.c.b16 %v923, %v919
        %v984 = vpack.c.b16 %v924, %v920
        %v985 = vpack.c.b16 %v925, %v921
        %v986 = vpack.c.b16 %v926, %v922
        %v987 = vpack.c.b16 %v931, %v927
        %v988 = vpack.c.b16 %v932, %v928
        %v989 = vpack.c.b16 %v933, %v929
        %v990 = vpack.c.b16 %v934, %v930
        %v991 = vpack.c.b16 %v939, %v935
        %v992 = vpack.c.b16 %v940, %v936
        %v993 = vpack.c.b16 %v941, %v937
        %v994 = vpack.c.b16 %v942, %v938
        %v995 = vpack.c.b16 %v947, %v943
        %v996 = vpack.c.b16 %v948, %v944
        %v997 = vpack.c.b16 %v949, %v945
        %v998 = vpack.c.b16 %v950, %v946
        %v999 = vpack.c.b16 %v955, %v951
        %v1000 = vpack.c.b16 %v956, %v952
        %v1001 = vpack.c.b16 %v957, %v953
        %v1002 = vpack.c.b16 %v958, %v954
        %v1003 = vpack.c.b16 %v963, %v959
        %v1004 = vpack.c.b16 %v964, %v960
        %v1005 = vpack.c.b16 %v965, %v961
        %v1006 = vpack.c.b16 %v966, %v962
        %v1007 = vpack.c.b16 %v971, %v967
        %v1008 = vpack.c.b16 %v972, %v968
        %v1009 = vpack.c.b16 %v973, %v969
        %v1010 = vpack.c.b16 %v974, %v970
        %v1011 = vpack.c.b16 %v979, %v975
        %v1012 = vpack.c.b16 %v980, %v976
        %v1013 = vpack.c.b16 %v981, %v977
        %v1014 = vpack.c.b16 %v982, %v978
        %1047 = vmatpush.bf16.msra.mxu0 %v1011
        %1048 = vmatpush.bf16.msra.mxu0 %v1007
        %1049 = vmatpush.bf16.msra.mxu0 %v1003
        %1050 = vmatpush.bf16.msra.mxu0 %v999
        %1051 = vmatpush.bf16.msra.mxu0 %v995
        %1052 = vmatpush.bf16.msra.mxu0 %v991
        %1053 = vmatpush.bf16.msra.mxu0 %v987
        %1054 = vmatpush.bf16.msra.mxu0 %v983
        %1055 = vmatmul.bf16.gmra.mxu0 %v886
        %v1056 = vpop.f32.mrf.mxu0
        %v1057 = vadd.f32 0.0, %v1056
        %v1058 = vpop.f32.mrf.mxu0
        %v1059 = vadd.f32 0.0, %v1058
        %1060 = vdwg.mxu0
        %1061 = vmatpush.bf16.msra.mxu0 %v1012
        %1062 = vmatpush.bf16.msra.mxu0 %v1008
        %1063 = vmatpush.bf16.msra.mxu0 %v1004
        %1064 = vmatpush.bf16.msra.mxu0 %v1000
        %1065 = vmatpush.bf16.msra.mxu0 %v996
        %1066 = vmatpush.bf16.msra.mxu0 %v992
        %1067 = vmatpush.bf16.msra.mxu0 %v988
        %1068 = vmatpush.bf16.msra.mxu0 %v984
        %1069 = vmatmul.bf16.gmra.mxu0 %v886
        %v1070 = vpop.f32.mrf.mxu0
        %v1071 = vadd.f32 0.0, %v1070
        %v1072 = vpop.f32.mrf.mxu0
        %v1073 = vadd.f32 0.0, %v1072
        %1074 = vdwg.mxu0
        %1075 = vmatpush.bf16.msra.mxu0 %v1013
        %1076 = vmatpush.bf16.msra.mxu0 %v1009
        %1077 = vmatpush.bf16.msra.mxu0 %v1005
        %1078 = vmatpush.bf16.msra.mxu0 %v1001
        %1079 = vmatpush.bf16.msra.mxu0 %v997
        %1080 = vmatpush.bf16.msra.mxu0 %v993
        %1081 = vmatpush.bf16.msra.mxu0 %v989
        %1082 = vmatpush.bf16.msra.mxu0 %v985
        %1083 = vmatmul.bf16.gmra.mxu0 %v886
        %v1084 = vpop.f32.mrf.mxu0
        %v1085 = vadd.f32 0.0, %v1084
        %v1086 = vpop.f32.mrf.mxu0
        %v1087 = vadd.f32 0.0, %v1086
        %1088 = vdwg.mxu0
        %1089 = vmatpush.bf16.msra.mxu0 %v1014
        %1090 = vmatpush.bf16.msra.mxu0 %v1010
        %1091 = vmatpush.bf16.msra.mxu0 %v1006
        %1092 = vmatpush.bf16.msra.mxu0 %v1002
        %1093 = vmatpush.bf16.msra.mxu0 %v998
        %1094 = vmatpush.bf16.msra.mxu0 %v994
        %1095 = vmatpush.bf16.msra.mxu0 %v990
        %1096 = vmatpush.bf16.msra.mxu0 %v986
        %1097 = vmatmul.bf16.gmra.mxu0 %v886
        %v1098 = vpop.f32.mrf.mxu0
        %v1099 = vadd.f32 0.0, %v1098
        %v1100 = vpop.f32.mrf.mxu0
        %v1101 = vadd.f32 0.0, %v1100
        %1102 = vdwg.mxu0
        %v1103 = vadd.f32 %v878, %v1057
        %v1104 = vadd.f32 %v879, %v1071
        %v1105 = vadd.f32 %v880, %v1085
        %v1106 = vadd.f32 %v881, %v1099
        %v1107 = vadd.f32 %v882, %v1059
        %v1108 = vadd.f32 %v883, %v1073
        %v1109 = vadd.f32 %v884, %v1087
        %v1110 = vadd.f32 %v885, %v1101
        %v1111 = vxor.u32 %v1103, 2147483648
        %v1112 = vxor.u32 %v1107, 2147483648
        %v1113 = vmul.f32 %v1111, 1.442695
        %v1114 = vpow.pop %v1113
        %v1115 = vmul.f32 %v1112, 1.442695
        %v1116 = vpow.pop %v1115
        %v1117 = vadd.f32 %v1114, 1.0
        %v1118 = vadd.f32 %v1116, 1.0
        %v1119 = vrcp.pop %v1117
        %v1120 = vmul.f32 %v1117, %v1119
        %v1121 = vsub.f32 1.0, %v1120
        %v1122 = vmul.f32 %v1119, %v1121
        %v1123 = vadd.f32 %v1119, %v1122
        %vm1124 = vweird.f32 %v1117
        %vm1125 = vweird.f32 %v1119
        %vm1126 = vmor %vm1124, %vm1125
        %v1127 = vsel %vm1126, %v1119, %v1123
        %v1128 = vand.u32 2147483647, %v1117
        %vm1129 = vcmp.eq.f32.partialorder %v1128, 8.507059e+37
        %v1130 = vand.u32 %v1117, 2147483648
        %v1131 = vor.u32 1.1754944e-38, %v1130
        %v1132 = vsel %vm1129, %v1131, %v1127
        %v1133 = vmul.f32 1.0, %v1132
        %v1134 = vrcp.pop %v1118
        %v1135 = vmul.f32 %v1118, %v1134
        %v1136 = vsub.f32 1.0, %v1135
        %v1137 = vmul.f32 %v1134, %v1136
        %v1138 = vadd.f32 %v1134, %v1137
        %vm1139 = vweird.f32 %v1118
        %vm1140 = vweird.f32 %v1134
        %vm1141 = vmor %vm1139, %vm1140
        %v1142 = vsel %vm1141, %v1134, %v1138
        %v1143 = vand.u32 2147483647, %v1118
        %vm1144 = vcmp.eq.f32.partialorder %v1143, 8.507059e+37
        %v1145 = vand.u32 %v1118, 2147483648
        %v1146 = vor.u32 1.1754944e-38, %v1145
        %v1147 = vsel %vm1144, %v1146, %v1142
        %v1148 = vmul.f32 1.0, %v1147
        %v1149 = vxor.u32 %v1104, 2147483648
        %v1150 = vxor.u32 %v1108, 2147483648
        %v1151 = vmul.f32 %v1149, 1.442695
        %v1152 = vpow.pop %v1151
        %v1153 = vmul.f32 %v1150, 1.442695
        %v1154 = vpow.pop %v1153
        %v1155 = vadd.f32 %v1152, 1.0
        %v1156 = vadd.f32 %v1154, 1.0
        %v1157 = vrcp.pop %v1155
        %v1158 = vmul.f32 %v1155, %v1157
        %v1159 = vsub.f32 1.0, %v1158
        %v1160 = vmul.f32 %v1157, %v1159
        %v1161 = vadd.f32 %v1157, %v1160
        %vm1162 = vweird.f32 %v1155
        %vm1163 = vweird.f32 %v1157
        %vm1164 = vmor %vm1162, %vm1163
        %v1165 = vsel %vm1164, %v1157, %v1161
        %v1166 = vand.u32 2147483647, %v1155
        %vm1167 = vcmp.eq.f32.partialorder %v1166, 8.507059e+37
        %v1168 = vand.u32 %v1155, 2147483648
        %v1169 = vor.u32 1.1754944e-38, %v1168
        %v1170 = vsel %vm1167, %v1169, %v1165
        %v1171 = vmul.f32 1.0, %v1170
        %v1172 = vrcp.pop %v1156
        %v1173 = vmul.f32 %v1156, %v1172
        %v1174 = vsub.f32 1.0, %v1173
        %v1175 = vmul.f32 %v1172, %v1174
        %v1176 = vadd.f32 %v1172, %v1175
        %vm1177 = vweird.f32 %v1156
        %vm1178 = vweird.f32 %v1172
        %vm1179 = vmor %vm1177, %vm1178
        %v1180 = vsel %vm1179, %v1172, %v1176
        %v1181 = vand.u32 2147483647, %v1156
        %vm1182 = vcmp.eq.f32.partialorder %v1181, 8.507059e+37
        %v1183 = vand.u32 %v1156, 2147483648
        %v1184 = vor.u32 1.1754944e-38, %v1183
        %v1185 = vsel %vm1182, %v1184, %v1180
        %v1186 = vmul.f32 1.0, %v1185
        %v1187 = vtanh.pop %v1105
        %v1188 = vtanh.pop %v1109
        %v1189 = vxor.u32 %v1106, 2147483648
        %v1190 = vxor.u32 %v1110, 2147483648
        %v1191 = vmul.f32 %v1189, 1.442695
        %v1192 = vpow.pop %v1191
        %v1193 = vmul.f32 %v1190, 1.442695
        %v1194 = vpow.pop %v1193
        %v1195 = vadd.f32 %v1192, 1.0
        %v1196 = vadd.f32 %v1194, 1.0
        %v1197 = vrcp.pop %v1195
        %v1198 = vmul.f32 %v1195, %v1197
        %v1199 = vsub.f32 1.0, %v1198
        %v1200 = vmul.f32 %v1197, %v1199
        %v1201 = vadd.f32 %v1197, %v1200
        %vm1202 = vweird.f32 %v1195
        %vm1203 = vweird.f32 %v1197
        %vm1204 = vmor %vm1202, %vm1203
        %v1205 = vsel %vm1204, %v1197, %v1201
        %v1206 = vand.u32 2147483647, %v1195
        %vm1207 = vcmp.eq.f32.partialorder %v1206, 8.507059e+37
        %v1208 = vand.u32 %v1195, 2147483648
        %v1209 = vor.u32 1.1754944e-38, %v1208
        %v1210 = vsel %vm1207, %v1209, %v1205
        %v1211 = vmul.f32 1.0, %v1210
        %v1212 = vrcp.pop %v1196
        %v1213 = vmul.f32 %v1196, %v1212
        %v1214 = vsub.f32 1.0, %v1213
        %v1215 = vmul.f32 %v1212, %v1214
        %v1216 = vadd.f32 %v1212, %v1215
        %vm1217 = vweird.f32 %v1196
        %vm1218 = vweird.f32 %v1212
        %vm1219 = vmor %vm1217, %vm1218
        %v1220 = vsel %vm1219, %v1212, %v1216
        %v1221 = vand.u32 2147483647, %v1196
        %vm1222 = vcmp.eq.f32.partialorder %v1221, 8.507059e+37
        %v1223 = vand.u32 %v1196, 2147483648
        %v1224 = vor.u32 1.1754944e-38, %v1223
        %v1225 = vsel %vm1222, %v1224, %v1220
        %v1226 = vmul.f32 1.0, %v1225
        %v1227 = vmul.f32 %v1171, %v855
        %v1228 = vmul.f32 %v1186, %v856
        %v1229 = vmul.f32 %v1133, %v1187
        %v1230 = vmul.f32 %v1148, %v1188
        %v1231 = vadd.f32 %v1227, %v1229
        %v1232 = vadd.f32 %v1228, %v1230
        %v1233 = vtanh.pop %v1231
        %v1234 = vtanh.pop %v1232
        %v1235 = vmul.f32 %v1211, %v1233
        %v1236 = vmul.f32 %v1226, %v1234
        %vm1237 = vcmp.gt.s32.totalorder %v847, 0
        %vm1238 = vcmp.gt.s32.totalorder %v848, 0
        %v1239 = vsel %vm1237, 1, 0
        %v1240 = vsel %vm1238, 1, 0
        %1241 = vset.pattern.permute.xlu0 0
        %1242 = vperm.xlu0 %1241, %v1239
        %v1243 = vpop.permute.xlu0 %1242
        %1244 = vset.pattern.permute.xlu0 0
        %1245 = vperm.xlu0 %1244, %v1240
        %v1246 = vpop.permute.xlu0 %1245
        %vm1247 = vcmp.eq.s32.totalorder %v1243, 1
        %vm1248 = vcmp.eq.s32.totalorder %v1246, 1
        %v1249 = vsel %vm1247, %v1235, %v853
        %v1250 = vsel %vm1248, %v1236, %v854
        %1251 = vst [vmem:[#allocation3] sm:$0xff] %v1249
        %1252 = vst [vmem:[#allocation3 + $0x8] sm:$0xff] %v1250
        %v1253 = vsel %vm1247, %v1231, %v855
        %v1254 = vsel %vm1248, %v1232, %v856
        %1255 = vst [vmem:[#allocation4] sm:$0xff] %v1253
        %1256 = vst [vmem:[#allocation4 + $0x8] sm:$0xff] %v1254
        %v1257 = vld [vmem:[#allocation3] sm:$0xff]
        %v1258 = vld [vmem:[#allocation3 + $0x8] sm:$0xff]
        %v1259 = vld [vmem:[#allocation4] sm:$0xff]
        %v1260 = vld [vmem:[#allocation4 + $0x8] sm:$0xff]
        %s1261 = scalar_lea.vmem [#allocation2], 32
        %v1262 = vld [vmem:[%s1261] sm:$0xff]
        %v1263 = vld [vmem:[%s1261 + $0x8] sm:$0xff]
        %v1264 = vld [vmem:[%s1261 + $0x10] sm:$0xff]
        %v1265 = vld [vmem:[%s1261 + $0x18] sm:$0xff]
        %v1266 = vunpack.c.l.bf16 %v1262
        %v1267 = vunpack.c.h.bf16 %v1262
        %v1268 = vunpack.c.l.bf16 %v1263
        %v1269 = vunpack.c.h.bf16 %v1263
        %v1270 = vunpack.c.l.bf16 %v1264
        %v1271 = vunpack.c.h.bf16 %v1264
        %v1272 = vunpack.c.l.bf16 %v1265
        %v1273 = vunpack.c.h.bf16 %v1265
        %v1274 = vadd.f32 %v1266, %v870
        %v1275 = vadd.f32 %v1267, %v871
        %v1276 = vadd.f32 %v1268, %v872
        %v1277 = vadd.f32 %v1269, %v873
        %v1278 = vadd.f32 %v1270, %v870
        %v1279 = vadd.f32 %v1271, %v871
        %v1280 = vadd.f32 %v1272, %v872
        %v1281 = vadd.f32 %v1273, %v873
        %v1282 = vpack.c.bf16 %v1258, %v1257
        %1283 = vmatpush.bf16.msra.mxu0 %v1011
        %1284 = vmatpush.bf16.msra.mxu0 %v1007
        %1285 = vmatpush.bf16.msra.mxu0 %v1003
        %1286 = vmatpush.bf16.msra.mxu0 %v999
        %1287 = vmatpush.bf16.msra.mxu0 %v995
        %1288 = vmatpush.bf16.msra.mxu0 %v991
        %1289 = vmatpush.bf16.msra.mxu0 %v987
        %1290 = vmatpush.bf16.msra.mxu0 %v983
        %1291 = vmatmul.bf16.gmra.mxu0 %v1282
        %v1292 = vpop.f32.mrf.mxu0
        %v1293 = vadd.f32 0.0, %v1292
        %v1294 = vpop.f32.mrf.mxu0
        %v1295 = vadd.f32 0.0, %v1294
        %1296 = vdwg.mxu0
        %1297 = vmatpush.bf16.msra.mxu0 %v1012
        %1298 = vmatpush.bf16.msra.mxu0 %v1008
        %1299 = vmatpush.bf16.msra.mxu0 %v1004
        %1300 = vmatpush.bf16.msra.mxu0 %v1000
        %1301 = vmatpush.bf16.msra.mxu0 %v996
        %1302 = vmatpush.bf16.msra.mxu0 %v992
        %1303 = vmatpush.bf16.msra.mxu0 %v988
        %1304 = vmatpush.bf16.msra.mxu0 %v984
        %1305 = vmatmul.bf16.gmra.mxu0 %v1282
        %v1306 = vpop.f32.mrf.mxu0
        %v1307 = vadd.f32 0.0, %v1306
        %v1308 = vpop.f32.mrf.mxu0
        %v1309 = vadd.f32 0.0, %v1308
        %1310 = vdwg.mxu0
        %1311 = vmatpush.bf16.msra.mxu0 %v1013
        %1312 = vmatpush.bf16.msra.mxu0 %v1009
        %1313 = vmatpush.bf16.msra.mxu0 %v1005
        %1314 = vmatpush.bf16.msra.mxu0 %v1001
        %1315 = vmatpush.bf16.msra.mxu0 %v997
        %1316 = vmatpush.bf16.msra.mxu0 %v993
        %1317 = vmatpush.bf16.msra.mxu0 %v989
        %1318 = vmatpush.bf16.msra.mxu0 %v985
        %1319 = vmatmul.bf16.gmra.mxu0 %v1282
        %v1320 = vpop.f32.mrf.mxu0
        %v1321 = vadd.f32 0.0, %v1320
        %v1322 = vpop.f32.mrf.mxu0
        %v1323 = vadd.f32 0.0, %v1322
        %1324 = vdwg.mxu0
        %1325 = vmatpush.bf16.msra.mxu0 %v1014
        %1326 = vmatpush.bf16.msra.mxu0 %v1010
        %1327 = vmatpush.bf16.msra.mxu0 %v1006
        %1328 = vmatpush.bf16.msra.mxu0 %v1002
        %1329 = vmatpush.bf16.msra.mxu0 %v998
        %1330 = vmatpush.bf16.msra.mxu0 %v994
        %1331 = vmatpush.bf16.msra.mxu0 %v990
        %1332 = vmatpush.bf16.msra.mxu0 %v986
        %1333 = vmatmul.bf16.gmra.mxu0 %v1282
        %v1334 = vpop.f32.mrf.mxu0
        %v1335 = vadd.f32 0.0, %v1334
        %v1336 = vpop.f32.mrf.mxu0
        %v1337 = vadd.f32 0.0, %v1336
        %1338 = vdwg.mxu0
        %v1339 = vadd.f32 %v1274, %v1293
        %v1340 = vadd.f32 %v1275, %v1307
        %v1341 = vadd.f32 %v1276, %v1321
        %v1342 = vadd.f32 %v1277, %v1335
        %v1343 = vadd.f32 %v1278, %v1295
        %v1344 = vadd.f32 %v1279, %v1309
        %v1345 = vadd.f32 %v1280, %v1323
        %v1346 = vadd.f32 %v1281, %v1337
        %v1347 = vxor.u32 %v1339, 2147483648
        %v1348 = vxor.u32 %v1343, 2147483648
        %v1349 = vmul.f32 %v1347, 1.442695
        %v1350 = vpow.pop %v1349
        %v1351 = vmul.f32 %v1348, 1.442695
        %v1352 = vpow.pop %v1351
        %v1353 = vadd.f32 %v1350, 1.0
        %v1354 = vadd.f32 %v1352, 1.0
        %v1355 = vrcp.pop %v1353
        %v1356 = vmul.f32 %v1353, %v1355
        %v1357 = vsub.f32 1.0, %v1356
        %v1358 = vmul.f32 %v1355, %v1357
        %v1359 = vadd.f32 %v1355, %v1358
        %vm1360 = vweird.f32 %v1353
        %vm1361 = vweird.f32 %v1355
        %vm1362 = vmor %vm1360, %vm1361
        %v1363 = vsel %vm1362, %v1355, %v1359
        %v1364 = vand.u32 2147483647, %v1353
        %vm1365 = vcmp.eq.f32.partialorder %v1364, 8.507059e+37
        %v1366 = vand.u32 %v1353, 2147483648
        %v1367 = vor.u32 1.1754944e-38, %v1366
        %v1368 = vsel %vm1365, %v1367, %v1363
        %v1369 = vmul.f32 1.0, %v1368
        %v1370 = vrcp.pop %v1354
        %v1371 = vmul.f32 %v1354, %v1370
        %v1372 = vsub.f32 1.0, %v1371
        %v1373 = vmul.f32 %v1370, %v1372
        %v1374 = vadd.f32 %v1370, %v1373
        %vm1375 = vweird.f32 %v1354
        %vm1376 = vweird.f32 %v1370
        %vm1377 = vmor %vm1375, %vm1376
        %v1378 = vsel %vm1377, %v1370, %v1374
        %v1379 = vand.u32 2147483647, %v1354
        %vm1380 = vcmp.eq.f32.partialorder %v1379, 8.507059e+37
        %v1381 = vand.u32 %v1354, 2147483648
        %v1382 = vor.u32 1.1754944e-38, %v1381
        %v1383 = vsel %vm1380, %v1382, %v1378
        %v1384 = vmul.f32 1.0, %v1383
        %v1385 = vxor.u32 %v1340, 2147483648
        %v1386 = vxor.u32 %v1344, 2147483648
        %v1387 = vmul.f32 %v1385, 1.442695
        %v1388 = vpow.pop %v1387
        %v1389 = vmul.f32 %v1386, 1.442695
        %v1390 = vpow.pop %v1389
        %v1391 = vadd.f32 %v1388, 1.0
        %v1392 = vadd.f32 %v1390, 1.0
        %v1393 = vrcp.pop %v1391
        %v1394 = vmul.f32 %v1391, %v1393
        %v1395 = vsub.f32 1.0, %v1394
        %v1396 = vmul.f32 %v1393, %v1395
        %v1397 = vadd.f32 %v1393, %v1396
        %vm1398 = vweird.f32 %v1391
        %vm1399 = vweird.f32 %v1393
        %vm1400 = vmor %vm1398, %vm1399
        %v1401 = vsel %vm1400, %v1393, %v1397
        %v1402 = vand.u32 2147483647, %v1391
        %vm1403 = vcmp.eq.f32.partialorder %v1402, 8.507059e+37
        %v1404 = vand.u32 %v1391, 2147483648
        %v1405 = vor.u32 1.1754944e-38, %v1404
        %v1406 = vsel %vm1403, %v1405, %v1401
        %v1407 = vmul.f32 1.0, %v1406
        %v1408 = vrcp.pop %v1392
        %v1409 = vmul.f32 %v1392, %v1408
        %v1410 = vsub.f32 1.0, %v1409
        %v1411 = vmul.f32 %v1408, %v1410
        %v1412 = vadd.f32 %v1408, %v1411
        %vm1413 = vweird.f32 %v1392
        %vm1414 = vweird.f32 %v1408
        %vm1415 = vmor %vm1413, %vm1414
        %v1416 = vsel %vm1415, %v1408, %v1412
        %v1417 = vand.u32 2147483647, %v1392
        %vm1418 = vcmp.eq.f32.partialorder %v1417, 8.507059e+37
        %v1419 = vand.u32 %v1392, 2147483648
        %v1420 = vor.u32 1.1754944e-38, %v1419
        %v1421 = vsel %vm1418, %v1420, %v1416
        %v1422 = vmul.f32 1.0, %v1421
        %v1423 = vtanh.pop %v1341
        %v1424 = vtanh.pop %v1345
        %v1425 = vxor.u32 %v1342, 2147483648
        %v1426 = vxor.u32 %v1346, 2147483648
        %v1427 = vmul.f32 %v1425, 1.442695
        %v1428 = vpow.pop %v1427
        %v1429 = vmul.f32 %v1426, 1.442695
        %v1430 = vpow.pop %v1429
        %v1431 = vadd.f32 %v1428, 1.0
        %v1432 = vadd.f32 %v1430, 1.0
        %v1433 = vrcp.pop %v1431
        %v1434 = vmul.f32 %v1431, %v1433
        %v1435 = vsub.f32 1.0, %v1434
        %v1436 = vmul.f32 %v1433, %v1435
        %v1437 = vadd.f32 %v1433, %v1436
        %vm1438 = vweird.f32 %v1431
        %vm1439 = vweird.f32 %v1433
        %vm1440 = vmor %vm1438, %vm1439
        %v1441 = vsel %vm1440, %v1433, %v1437
        %v1442 = vand.u32 2147483647, %v1431
        %vm1443 = vcmp.eq.f32.partialorder %v1442, 8.507059e+37
        %v1444 = vand.u32 %v1431, 2147483648
        %v1445 = vor.u32 1.1754944e-38, %v1444
        %v1446 = vsel %vm1443, %v1445, %v1441
        %v1447 = vmul.f32 1.0, %v1446
        %v1448 = vrcp.pop %v1432
        %v1449 = vmul.f32 %v1432, %v1448
        %v1450 = vsub.f32 1.0, %v1449
        %v1451 = vmul.f32 %v1448, %v1450
        %v1452 = vadd.f32 %v1448, %v1451
        %vm1453 = vweird.f32 %v1432
        %vm1454 = vweird.f32 %v1448
        %vm1455 = vmor %vm1453, %vm1454
        %v1456 = vsel %vm1455, %v1448, %v1452
        %v1457 = vand.u32 2147483647, %v1432
        %vm1458 = vcmp.eq.f32.partialorder %v1457, 8.507059e+37
        %v1459 = vand.u32 %v1432, 2147483648
        %v1460 = vor.u32 1.1754944e-38, %v1459
        %v1461 = vsel %vm1458, %v1460, %v1456
        %v1462 = vmul.f32 1.0, %v1461
        %v1463 = vmul.f32 %v1407, %v1259
        %v1464 = vmul.f32 %v1422, %v1260
        %v1465 = vmul.f32 %v1369, %v1423
        %v1466 = vmul.f32 %v1384, %v1424
        %v1467 = vadd.f32 %v1463, %v1465
        %v1468 = vadd.f32 %v1464, %v1466
        %v1469 = vtanh.pop %v1467
        %v1470 = vtanh.pop %v1468
        %v1471 = vmul.f32 %v1447, %v1469
        %v1472 = vmul.f32 %v1462, %v1470
        %vm1473 = vcmp.gt.s32.totalorder %v847, 1
        %vm1474 = vcmp.gt.s32.totalorder %v848, 1
        %v1475 = vsel %vm1473, 1, 0
        %v1476 = vsel %vm1474, 1, 0
        %1477 = vset.pattern.permute.xlu0 0
        %1478 = vperm.xlu0 %1477, %v1475
        %v1479 = vpop.permute.xlu0 %1478
        %1480 = vset.pattern.permute.xlu0 0
        %1481 = vperm.xlu0 %1480, %v1476
        %v1482 = vpop.permute.xlu0 %1481
        %vm1483 = vcmp.eq.s32.totalorder %v1479, 1
        %vm1484 = vcmp.eq.s32.totalorder %v1482, 1
        %v1485 = vsel %vm1483, %v1471, %v1257
        %v1486 = vsel %vm1484, %v1472, %v1258
        %1487 = vst [vmem:[#allocation3] sm:$0xff] %v1485
        %1488 = vst [vmem:[#allocation3 + $0x8] sm:$0xff] %v1486
        %v1489 = vsel %vm1483, %v1467, %v1259
        %v1490 = vsel %vm1484, %v1468, %v1260
        %1491 = vst [vmem:[#allocation4] sm:$0xff] %v1489
        %1492 = vst [vmem:[#allocation4 + $0x8] sm:$0xff] %v1490
        %v1493 = vld [vmem:[#allocation3] sm:$0xff]
        %v1494 = vld [vmem:[#allocation3 + $0x8] sm:$0xff]
        %v1495 = vld [vmem:[#allocation4] sm:$0xff]
        %v1496 = vld [vmem:[#allocation4 + $0x8] sm:$0xff]
        %s1497 = scalar_lea.vmem [#allocation2], 64
        %v1498 = vld [vmem:[%s1497] sm:$0xff]
        %v1499 = vld [vmem:[%s1497 + $0x8] sm:$0xff]
        %v1500 = vld [vmem:[%s1497 + $0x10] sm:$0xff]
        %v1501 = vld [vmem:[%s1497 + $0x18] sm:$0xff]
        %v1502 = vunpack.c.l.bf16 %v1498
        %v1503 = vunpack.c.h.bf16 %v1498
        %v1504 = vunpack.c.l.bf16 %v1499
        %v1505 = vunpack.c.h.bf16 %v1499
        %v1506 = vunpack.c.l.bf16 %v1500
        %v1507 = vunpack.c.h.bf16 %v1500
        %v1508 = vunpack.c.l.bf16 %v1501
        %v1509 = vunpack.c.h.bf16 %v1501
        %v1510 = vadd.f32 %v1502, %v870
        %v1511 = vadd.f32 %v1503, %v871
        %v1512 = vadd.f32 %v1504, %v872
        %v1513 = vadd.f32 %v1505, %v873
        %v1514 = vadd.f32 %v1506, %v870
        %v1515 = vadd.f32 %v1507, %v871
        %v1516 = vadd.f32 %v1508, %v872
        %v1517 = vadd.f32 %v1509, %v873
        %v1518 = vpack.c.bf16 %v1494, %v1493
        %1519 = vmatpush.bf16.msra.mxu0 %v1011
        %1520 = vmatpush.bf16.msra.mxu0 %v1007
        %1521 = vmatpush.bf16.msra.mxu0 %v1003
        %1522 = vmatpush.bf16.msra.mxu0 %v999
        %1523 = vmatpush.bf16.msra.mxu0 %v995
        %1524 = vmatpush.bf16.msra.mxu0 %v991
        %1525 = vmatpush.bf16.msra.mxu0 %v987
        %1526 = vmatpush.bf16.msra.mxu0 %v983
        %1527 = vmatmul.bf16.gmra.mxu0 %v1518
        %v1528 = vpop.f32.mrf.mxu0
        %v1529 = vadd.f32 0.0, %v1528
        %v1530 = vpop.f32.mrf.mxu0
        %v1531 = vadd.f32 0.0, %v1530
        %1532 = vdwg.mxu0
        %1533 = vmatpush.bf16.msra.mxu0 %v1012
        %1534 = vmatpush.bf16.msra.mxu0 %v1008
        %1535 = vmatpush.bf16.msra.mxu0 %v1004
        %1536 = vmatpush.bf16.msra.mxu0 %v1000
        %1537 = vmatpush.bf16.msra.mxu0 %v996
        %1538 = vmatpush.bf16.msra.mxu0 %v992
        %1539 = vmatpush.bf16.msra.mxu0 %v988
        %1540 = vmatpush.bf16.msra.mxu0 %v984
        %1541 = vmatmul.bf16.gmra.mxu0 %v1518
        %v1542 = vpop.f32.mrf.mxu0
        %v1543 = vadd.f32 0.0, %v1542
        %v1544 = vpop.f32.mrf.mxu0
        %v1545 = vadd.f32 0.0, %v1544
        %1546 = vdwg.mxu0
        %1547 = vmatpush.bf16.msra.mxu0 %v1013
        %1548 = vmatpush.bf16.msra.mxu0 %v1009
        %1549 = vmatpush.bf16.msra.mxu0 %v1005
        %1550 = vmatpush.bf16.msra.mxu0 %v1001
        %1551 = vmatpush.bf16.msra.mxu0 %v997
        %1552 = vmatpush.bf16.msra.mxu0 %v993
        %1553 = vmatpush.bf16.msra.mxu0 %v989
        %1554 = vmatpush.bf16.msra.mxu0 %v985
        %1555 = vmatmul.bf16.gmra.mxu0 %v1518
        %v1556 = vpop.f32.mrf.mxu0
        %v1557 = vadd.f32 0.0, %v1556
        %v1558 = vpop.f32.mrf.mxu0
        %v1559 = vadd.f32 0.0, %v1558
        %1560 = vdwg.mxu0
        %1561 = vmatpush.bf16.msra.mxu0 %v1014
        %1562 = vmatpush.bf16.msra.mxu0 %v1010
        %1563 = vmatpush.bf16.msra.mxu0 %v1006
        %1564 = vmatpush.bf16.msra.mxu0 %v1002
        %1565 = vmatpush.bf16.msra.mxu0 %v998
        %1566 = vmatpush.bf16.msra.mxu0 %v994
        %1567 = vmatpush.bf16.msra.mxu0 %v990
        %1568 = vmatpush.bf16.msra.mxu0 %v986
        %1569 = vmatmul.bf16.gmra.mxu0 %v1518
        %v1570 = vpop.f32.mrf.mxu0
        %v1571 = vadd.f32 0.0, %v1570
        %v1572 = vpop.f32.mrf.mxu0
        %v1573 = vadd.f32 0.0, %v1572
        %1574 = vdwg.mxu0
        %v1575 = vadd.f32 %v1510, %v1529
        %v1576 = vadd.f32 %v1511, %v1543
        %v1577 = vadd.f32 %v1512, %v1557
        %v1578 = vadd.f32 %v1513, %v1571
        %v1579 = vadd.f32 %v1514, %v1531
        %v1580 = vadd.f32 %v1515, %v1545
        %v1581 = vadd.f32 %v1516, %v1559
        %v1582 = vadd.f32 %v1517, %v1573
        %v1583 = vxor.u32 %v1575, 2147483648
        %v1584 = vxor.u32 %v1579, 2147483648
        %v1585 = vmul.f32 %v1583, 1.442695
        %v1586 = vpow.pop %v1585
        %v1587 = vmul.f32 %v1584, 1.442695
        %v1588 = vpow.pop %v1587
        %v1589 = vadd.f32 %v1586, 1.0
        %v1590 = vadd.f32 %v1588, 1.0
        %v1591 = vrcp.pop %v1589
        %v1592 = vmul.f32 %v1589, %v1591
        %v1593 = vsub.f32 1.0, %v1592
        %v1594 = vmul.f32 %v1591, %v1593
        %v1595 = vadd.f32 %v1591, %v1594
        %vm1596 = vweird.f32 %v1589
        %vm1597 = vweird.f32 %v1591
        %vm1598 = vmor %vm1596, %vm1597
        %v1599 = vsel %vm1598, %v1591, %v1595
        %v1600 = vand.u32 2147483647, %v1589
        %vm1601 = vcmp.eq.f32.partialorder %v1600, 8.507059e+37
        %v1602 = vand.u32 %v1589, 2147483648
        %v1603 = vor.u32 1.1754944e-38, %v1602
        %v1604 = vsel %vm1601, %v1603, %v1599
        %v1605 = vmul.f32 1.0, %v1604
        %v1606 = vrcp.pop %v1590
        %v1607 = vmul.f32 %v1590, %v1606
        %v1608 = vsub.f32 1.0, %v1607
        %v1609 = vmul.f32 %v1606, %v1608
        %v1610 = vadd.f32 %v1606, %v1609
        %vm1611 = vweird.f32 %v1590
        %vm1612 = vweird.f32 %v1606
        %vm1613 = vmor %vm1611, %vm1612
        %v1614 = vsel %vm1613, %v1606, %v1610
        %v1615 = vand.u32 2147483647, %v1590
        %vm1616 = vcmp.eq.f32.partialorder %v1615, 8.507059e+37
        %v1617 = vand.u32 %v1590, 2147483648
        %v1618 = vor.u32 1.1754944e-38, %v1617
        %v1619 = vsel %vm1616, %v1618, %v1614
        %v1620 = vmul.f32 1.0, %v1619
        %v1621 = vxor.u32 %v1576, 2147483648
        %v1622 = vxor.u32 %v1580, 2147483648
        %v1623 = vmul.f32 %v1621, 1.442695
        %v1624 = vpow.pop %v1623
        %v1625 = vmul.f32 %v1622, 1.442695
        %v1626 = vpow.pop %v1625
        %v1627 = vadd.f32 %v1624, 1.0
        %v1628 = vadd.f32 %v1626, 1.0
        %v1629 = vrcp.pop %v1627
        %v1630 = vmul.f32 %v1627, %v1629
        %v1631 = vsub.f32 1.0, %v1630
        %v1632 = vmul.f32 %v1629, %v1631
        %v1633 = vadd.f32 %v1629, %v1632
        %vm1634 = vweird.f32 %v1627
        %vm1635 = vweird.f32 %v1629
        %vm1636 = vmor %vm1634, %vm1635
        %v1637 = vsel %vm1636, %v1629, %v1633
        %v1638 = vand.u32 2147483647, %v1627
        %vm1639 = vcmp.eq.f32.partialorder %v1638, 8.507059e+37
        %v1640 = vand.u32 %v1627, 2147483648
        %v1641 = vor.u32 1.1754944e-38, %v1640
        %v1642 = vsel %vm1639, %v1641, %v1637
        %v1643 = vmul.f32 1.0, %v1642
        %v1644 = vrcp.pop %v1628
        %v1645 = vmul.f32 %v1628, %v1644
        %v1646 = vsub.f32 1.0, %v1645
        %v1647 = vmul.f32 %v1644, %v1646
        %v1648 = vadd.f32 %v1644, %v1647
        %vm1649 = vweird.f32 %v1628
        %vm1650 = vweird.f32 %v1644
        %vm1651 = vmor %vm1649, %vm1650
        %v1652 = vsel %vm1651, %v1644, %v1648
        %v1653 = vand.u32 2147483647, %v1628
        %vm1654 = vcmp.eq.f32.partialorder %v1653, 8.507059e+37
        %v1655 = vand.u32 %v1628, 2147483648
        %v1656 = vor.u32 1.1754944e-38, %v1655
        %v1657 = vsel %vm1654, %v1656, %v1652
        %v1658 = vmul.f32 1.0, %v1657
        %v1659 = vtanh.pop %v1577
        %v1660 = vtanh.pop %v1581
        %v1661 = vxor.u32 %v1578, 2147483648
        %v1662 = vxor.u32 %v1582, 2147483648
        %v1663 = vmul.f32 %v1661, 1.442695
        %v1664 = vpow.pop %v1663
        %v1665 = vmul.f32 %v1662, 1.442695
        %v1666 = vpow.pop %v1665
        %v1667 = vadd.f32 %v1664, 1.0
        %v1668 = vadd.f32 %v1666, 1.0
        %v1669 = vrcp.pop %v1667
        %v1670 = vmul.f32 %v1667, %v1669
        %v1671 = vsub.f32 1.0, %v1670
        %v1672 = vmul.f32 %v1669, %v1671
        %v1673 = vadd.f32 %v1669, %v1672
        %vm1674 = vweird.f32 %v1667
        %vm1675 = vweird.f32 %v1669
        %vm1676 = vmor %vm1674, %vm1675
        %v1677 = vsel %vm1676, %v1669, %v1673
        %v1678 = vand.u32 2147483647, %v1667
        %vm1679 = vcmp.eq.f32.partialorder %v1678, 8.507059e+37
        %v1680 = vand.u32 %v1667, 2147483648
        %v1681 = vor.u32 1.1754944e-38, %v1680
        %v1682 = vsel %vm1679, %v1681, %v1677
        %v1683 = vmul.f32 1.0, %v1682
        %v1684 = vrcp.pop %v1668
        %v1685 = vmul.f32 %v1668, %v1684
        %v1686 = vsub.f32 1.0, %v1685
        %v1687 = vmul.f32 %v1684, %v1686
        %v1688 = vadd.f32 %v1684, %v1687
        %vm1689 = vweird.f32 %v1668
        %vm1690 = vweird.f32 %v1684
        %vm1691 = vmor %vm1689, %vm1690
        %v1692 = vsel %vm1691, %v1684, %v1688
        %v1693 = vand.u32 2147483647, %v1668
        %vm1694 = vcmp.eq.f32.partialorder %v1693, 8.507059e+37
        %v1695 = vand.u32 %v1668, 2147483648
        %v1696 = vor.u32 1.1754944e-38, %v1695
        %v1697 = vsel %vm1694, %v1696, %v1692
        %v1698 = vmul.f32 1.0, %v1697
        %v1699 = vmul.f32 %v1643, %v1495
        %v1700 = vmul.f32 %v1658, %v1496
        %v1701 = vmul.f32 %v1605, %v1659
        %v1702 = vmul.f32 %v1620, %v1660
        %v1703 = vadd.f32 %v1699, %v1701
        %v1704 = vadd.f32 %v1700, %v1702
        %v1705 = vtanh.pop %v1703
        %v1706 = vtanh.pop %v1704
        %v1707 = vmul.f32 %v1683, %v1705
        %v1708 = vmul.f32 %v1698, %v1706
        %vm1709 = vcmp.gt.s32.totalorder %v847, 2
        %vm1710 = vcmp.gt.s32.totalorder %v848, 2
        %v1711 = vsel %vm1709, 1, 0
        %v1712 = vsel %vm1710, 1, 0
        %1713 = vset.pattern.permute.xlu0 0
        %1714 = vperm.xlu0 %1713, %v1711
        %v1715 = vpop.permute.xlu0 %1714
        %1716 = vset.pattern.permute.xlu0 0
        %1717 = vperm.xlu0 %1716, %v1712
        %v1718 = vpop.permute.xlu0 %1717
        %vm1719 = vcmp.eq.s32.totalorder %v1715, 1
        %vm1720 = vcmp.eq.s32.totalorder %v1718, 1
        %v1721 = vsel %vm1719, %v1707, %v1493
        %v1722 = vsel %vm1720, %v1708, %v1494
        %1723 = vst [vmem:[#allocation3] sm:$0xff] %v1721
        %1724 = vst [vmem:[#allocation3 + $0x8] sm:$0xff] %v1722
        %v1725 = vsel %vm1719, %v1703, %v1495
        %v1726 = vsel %vm1720, %v1704, %v1496
        %1727 = vst [vmem:[#allocation4] sm:$0xff] %v1725
        %1728 = vst [vmem:[#allocation4 + $0x8] sm:$0xff] %v1726
        %v1729 = vld [vmem:[#allocation3] sm:$0xff]
        %v1730 = vld [vmem:[#allocation3 + $0x8] sm:$0xff]
        %v1731 = vld [vmem:[#allocation4] sm:$0xff]
        %v1732 = vld [vmem:[#allocation4 + $0x8] sm:$0xff]
        %s1733 = scalar_lea.vmem [#allocation2], 96
        %v1734 = vld [vmem:[%s1733] sm:$0xff]
        %v1735 = vld [vmem:[%s1733 + $0x8] sm:$0xff]
        %v1736 = vld [vmem:[%s1733 + $0x10] sm:$0xff]
        %v1737 = vld [vmem:[%s1733 + $0x18] sm:$0xff]
        %v1738 = vunpack.c.l.bf16 %v1734
        %v1739 = vunpack.c.h.bf16 %v1734
        %v1740 = vunpack.c.l.bf16 %v1735
        %v1741 = vunpack.c.h.bf16 %v1735
        %v1742 = vunpack.c.l.bf16 %v1736
        %v1743 = vunpack.c.h.bf16 %v1736
        %v1744 = vunpack.c.l.bf16 %v1737
        %v1745 = vunpack.c.h.bf16 %v1737
        %v1746 = vadd.f32 %v1738, %v870
        %v1747 = vadd.f32 %v1739, %v871
        %v1748 = vadd.f32 %v1740, %v872
        %v1749 = vadd.f32 %v1741, %v873
        %v1750 = vadd.f32 %v1742, %v870
        %v1751 = vadd.f32 %v1743, %v871
        %v1752 = vadd.f32 %v1744, %v872
        %v1753 = vadd.f32 %v1745, %v873
        %v1754 = vpack.c.bf16 %v1730, %v1729
        %1755 = vmatpush.bf16.msra.mxu0 %v1011
        %1756 = vmatpush.bf16.msra.mxu0 %v1007
        %1757 = vmatpush.bf16.msra.mxu0 %v1003
        %1758 = vmatpush.bf16.msra.mxu0 %v999
        %1759 = vmatpush.bf16.msra.mxu0 %v995
        %1760 = vmatpush.bf16.msra.mxu0 %v991
        %1761 = vmatpush.bf16.msra.mxu0 %v987
        %1762 = vmatpush.bf16.msra.mxu0 %v983
        %1763 = vmatmul.bf16.gmra.mxu0 %v1754
        %v1764 = vpop.f32.mrf.mxu0
        %v1765 = vadd.f32 0.0, %v1764
        %v1766 = vpop.f32.mrf.mxu0
        %v1767 = vadd.f32 0.0, %v1766
        %1768 = vdwg.mxu0
        %1769 = vmatpush.bf16.msra.mxu0 %v1012
        %1770 = vmatpush.bf16.msra.mxu0 %v1008
        %1771 = vmatpush.bf16.msra.mxu0 %v1004
        %1772 = vmatpush.bf16.msra.mxu0 %v1000
        %1773 = vmatpush.bf16.msra.mxu0 %v996
        %1774 = vmatpush.bf16.msra.mxu0 %v992
        %1775 = vmatpush.bf16.msra.mxu0 %v988
        %1776 = vmatpush.bf16.msra.mxu0 %v984
        %1777 = vmatmul.bf16.gmra.mxu0 %v1754
        %v1778 = vpop.f32.mrf.mxu0
        %v1779 = vadd.f32 0.0, %v1778
        %v1780 = vpop.f32.mrf.mxu0
        %v1781 = vadd.f32 0.0, %v1780
        %1782 = vdwg.mxu0
        %1783 = vmatpush.bf16.msra.mxu0 %v1013
        %1784 = vmatpush.bf16.msra.mxu0 %v1009
        %1785 = vmatpush.bf16.msra.mxu0 %v1005
        %1786 = vmatpush.bf16.msra.mxu0 %v1001
        %1787 = vmatpush.bf16.msra.mxu0 %v997
        %1788 = vmatpush.bf16.msra.mxu0 %v993
        %1789 = vmatpush.bf16.msra.mxu0 %v989
        %1790 = vmatpush.bf16.msra.mxu0 %v985
        %1791 = vmatmul.bf16.gmra.mxu0 %v1754
        %v1792 = vpop.f32.mrf.mxu0
        %v1793 = vadd.f32 0.0, %v1792
        %v1794 = vpop.f32.mrf.mxu0
        %v1795 = vadd.f32 0.0, %v1794
        %1796 = vdwg.mxu0
        %1797 = vmatpush.bf16.msra.mxu0 %v1014
        %1798 = vmatpush.bf16.msra.mxu0 %v1010
        %1799 = vmatpush.bf16.msra.mxu0 %v1006
        %1800 = vmatpush.bf16.msra.mxu0 %v1002
        %1801 = vmatpush.bf16.msra.mxu0 %v998
        %1802 = vmatpush.bf16.msra.mxu0 %v994
        %1803 = vmatpush.bf16.msra.mxu0 %v990
        %1804 = vmatpush.bf16.msra.mxu0 %v986
        %1805 = vmatmul.bf16.gmra.mxu0 %v1754
        %v1806 = vpop.f32.mrf.mxu0
        %v1807 = vadd.f32 0.0, %v1806
        %v1808 = vpop.f32.mrf.mxu0
        %v1809 = vadd.f32 0.0, %v1808
        %1810 = vdwg.mxu0
        %v1811 = vadd.f32 %v1746, %v1765
        %v1812 = vadd.f32 %v1747, %v1779
        %v1813 = vadd.f32 %v1748, %v1793
        %v1814 = vadd.f32 %v1749, %v1807
        %v1815 = vadd.f32 %v1750, %v1767
        %v1816 = vadd.f32 %v1751, %v1781
        %v1817 = vadd.f32 %v1752, %v1795
        %v1818 = vadd.f32 %v1753, %v1809
        %v1819 = vxor.u32 %v1811, 2147483648
        %v1820 = vxor.u32 %v1815, 2147483648
        %v1821 = vmul.f32 %v1819, 1.442695
        %v1822 = vpow.pop %v1821
        %v1823 = vmul.f32 %v1820, 1.442695
        %v1824 = vpow.pop %v1823
        %v1825 = vadd.f32 %v1822, 1.0
        %v1826 = vadd.f32 %v1824, 1.0
        %v1827 = vrcp.pop %v1825
        %v1828 = vmul.f32 %v1825, %v1827
        %v1829 = vsub.f32 1.0, %v1828
        %v1830 = vmul.f32 %v1827, %v1829
        %v1831 = vadd.f32 %v1827, %v1830
        %vm1832 = vweird.f32 %v1825
        %vm1833 = vweird.f32 %v1827
        %vm1834 = vmor %vm1832, %vm1833
        %v1835 = vsel %vm1834, %v1827, %v1831
        %v1836 = vand.u32 2147483647, %v1825
        %vm1837 = vcmp.eq.f32.partialorder %v1836, 8.507059e+37
        %v1838 = vand.u32 %v1825, 2147483648
        %v1839 = vor.u32 1.1754944e-38, %v1838
        %v1840 = vsel %vm1837, %v1839, %v1835
        %v1841 = vmul.f32 1.0, %v1840
        %v1842 = vrcp.pop %v1826
        %v1843 = vmul.f32 %v1826, %v1842
        %v1844 = vsub.f32 1.0, %v1843
        %v1845 = vmul.f32 %v1842, %v1844
        %v1846 = vadd.f32 %v1842, %v1845
        %vm1847 = vweird.f32 %v1826
        %vm1848 = vweird.f32 %v1842
        %vm1849 = vmor %vm1847, %vm1848
        %v1850 = vsel %vm1849, %v1842, %v1846
        %v1851 = vand.u32 2147483647, %v1826
        %vm1852 = vcmp.eq.f32.partialorder %v1851, 8.507059e+37
        %v1853 = vand.u32 %v1826, 2147483648
        %v1854 = vor.u32 1.1754944e-38, %v1853
        %v1855 = vsel %vm1852, %v1854, %v1850
        %v1856 = vmul.f32 1.0, %v1855
        %v1857 = vxor.u32 %v1812, 2147483648
        %v1858 = vxor.u32 %v1816, 2147483648
        %v1859 = vmul.f32 %v1857, 1.442695
        %v1860 = vpow.pop %v1859
        %v1861 = vmul.f32 %v1858, 1.442695
        %v1862 = vpow.pop %v1861
        %v1863 = vadd.f32 %v1860, 1.0
        %v1864 = vadd.f32 %v1862, 1.0
        %v1865 = vrcp.pop %v1863
        %v1866 = vmul.f32 %v1863, %v1865
        %v1867 = vsub.f32 1.0, %v1866
        %v1868 = vmul.f32 %v1865, %v1867
        %v1869 = vadd.f32 %v1865, %v1868
        %vm1870 = vweird.f32 %v1863
        %vm1871 = vweird.f32 %v1865
        %vm1872 = vmor %vm1870, %vm1871
        %v1873 = vsel %vm1872, %v1865, %v1869
        %v1874 = vand.u32 2147483647, %v1863
        %vm1875 = vcmp.eq.f32.partialorder %v1874, 8.507059e+37
        %v1876 = vand.u32 %v1863, 2147483648
        %v1877 = vor.u32 1.1754944e-38, %v1876
        %v1878 = vsel %vm1875, %v1877, %v1873
        %v1879 = vmul.f32 1.0, %v1878
        %v1880 = vrcp.pop %v1864
        %v1881 = vmul.f32 %v1864, %v1880
        %v1882 = vsub.f32 1.0, %v1881
        %v1883 = vmul.f32 %v1880, %v1882
        %v1884 = vadd.f32 %v1880, %v1883
        %vm1885 = vweird.f32 %v1864
        %vm1886 = vweird.f32 %v1880
        %vm1887 = vmor %vm1885, %vm1886
        %v1888 = vsel %vm1887, %v1880, %v1884
        %v1889 = vand.u32 2147483647, %v1864
        %vm1890 = vcmp.eq.f32.partialorder %v1889, 8.507059e+37
        %v1891 = vand.u32 %v1864, 2147483648
        %v1892 = vor.u32 1.1754944e-38, %v1891
        %v1893 = vsel %vm1890, %v1892, %v1888
        %v1894 = vmul.f32 1.0, %v1893
        %v1895 = vtanh.pop %v1813
        %v1896 = vtanh.pop %v1817
        %v1897 = vxor.u32 %v1814, 2147483648
        %v1898 = vxor.u32 %v1818, 2147483648
        %v1899 = vmul.f32 %v1897, 1.442695
        %v1900 = vpow.pop %v1899
        %v1901 = vmul.f32 %v1898, 1.442695
        %v1902 = vpow.pop %v1901
        %v1903 = vadd.f32 %v1900, 1.0
        %v1904 = vadd.f32 %v1902, 1.0
        %v1905 = vrcp.pop %v1903
        %v1906 = vmul.f32 %v1903, %v1905
        %v1907 = vsub.f32 1.0, %v1906
        %v1908 = vmul.f32 %v1905, %v1907
        %v1909 = vadd.f32 %v1905, %v1908
        %vm1910 = vweird.f32 %v1903
        %vm1911 = vweird.f32 %v1905
        %vm1912 = vmor %vm1910, %vm1911
        %v1913 = vsel %vm1912, %v1905, %v1909
        %v1914 = vand.u32 2147483647, %v1903
        %vm1915 = vcmp.eq.f32.partialorder %v1914, 8.507059e+37
        %v1916 = vand.u32 %v1903, 2147483648
        %v1917 = vor.u32 1.1754944e-38, %v1916
        %v1918 = vsel %vm1915, %v1917, %v1913
        %v1919 = vmul.f32 1.0, %v1918
        %v1920 = vrcp.pop %v1904
        %v1921 = vmul.f32 %v1904, %v1920
        %v1922 = vsub.f32 1.0, %v1921
        %v1923 = vmul.f32 %v1920, %v1922
        %v1924 = vadd.f32 %v1920, %v1923
        %vm1925 = vweird.f32 %v1904
        %vm1926 = vweird.f32 %v1920
        %vm1927 = vmor %vm1925, %vm1926
        %v1928 = vsel %vm1927, %v1920, %v1924
        %v1929 = vand.u32 2147483647, %v1904
        %vm1930 = vcmp.eq.f32.partialorder %v1929, 8.507059e+37
        %v1931 = vand.u32 %v1904, 2147483648
        %v1932 = vor.u32 1.1754944e-38, %v1931
        %v1933 = vsel %vm1930, %v1932, %v1928
        %v1934 = vmul.f32 1.0, %v1933
        %v1935 = vmul.f32 %v1879, %v1731
        %v1936 = vmul.f32 %v1894, %v1732
        %v1937 = vmul.f32 %v1841, %v1895
        %v1938 = vmul.f32 %v1856, %v1896
        %v1939 = vadd.f32 %v1935, %v1937
        %v1940 = vadd.f32 %v1936, %v1938
        %v1941 = vtanh.pop %v1939
        %v1942 = vtanh.pop %v1940
        %v1943 = vmul.f32 %v1919, %v1941
        %v1944 = vmul.f32 %v1934, %v1942
        %vm1945 = vcmp.gt.s32.totalorder %v847, 3
        %vm1946 = vcmp.gt.s32.totalorder %v848, 3
        %v1947 = vsel %vm1945, 1, 0
        %v1948 = vsel %vm1946, 1, 0
        %1949 = vset.pattern.permute.xlu0 0
        %1950 = vperm.xlu0 %1949, %v1947
        %v1951 = vpop.permute.xlu0 %1950
        %1952 = vset.pattern.permute.xlu0 0
        %1953 = vperm.xlu0 %1952, %v1948
        %v1954 = vpop.permute.xlu0 %1953
        %vm1955 = vcmp.eq.s32.totalorder %v1951, 1
        %vm1956 = vcmp.eq.s32.totalorder %v1954, 1
        %v1957 = vsel %vm1955, %v1943, %v1729
        %v1958 = vsel %vm1956, %v1944, %v1730
        %1959 = vst [vmem:[#allocation3] sm:$0xff] %v1957
        %1960 = vst [vmem:[#allocation3 + $0x8] sm:$0xff] %v1958
        %v1961 = vsel %vm1955, %v1939, %v1731
        %v1962 = vsel %vm1956, %v1940, %v1732
        %1963 = vst [vmem:[#allocation4] sm:$0xff] %v1961
        %1964 = vst [vmem:[#allocation4 + $0x8] sm:$0xff] %v1962
        %v1965 = vld [vmem:[#allocation3] sm:$0xff]
        %v1966 = vld [vmem:[#allocation3 + $0x8] sm:$0xff]
        %v1967 = vld [vmem:[#allocation4] sm:$0xff]
        %v1968 = vld [vmem:[#allocation4 + $0x8] sm:$0xff]
        %s1969 = scalar_lea.vmem [#allocation2], 128
        %v1970 = vld [vmem:[%s1969] sm:$0xff]
        %v1971 = vld [vmem:[%s1969 + $0x8] sm:$0xff]
        %v1972 = vld [vmem:[%s1969 + $0x10] sm:$0xff]
        %v1973 = vld [vmem:[%s1969 + $0x18] sm:$0xff]
        %v1974 = vunpack.c.l.bf16 %v1970
        %v1975 = vunpack.c.h.bf16 %v1970
        %v1976 = vunpack.c.l.bf16 %v1971
        %v1977 = vunpack.c.h.bf16 %v1971
        %v1978 = vunpack.c.l.bf16 %v1972
        %v1979 = vunpack.c.h.bf16 %v1972
        %v1980 = vunpack.c.l.bf16 %v1973
        %v1981 = vunpack.c.h.bf16 %v1973
        %v1982 = vadd.f32 %v1974, %v870
        %v1983 = vadd.f32 %v1975, %v871
        %v1984 = vadd.f32 %v1976, %v872
        %v1985 = vadd.f32 %v1977, %v873
        %v1986 = vadd.f32 %v1978, %v870
        %v1987 = vadd.f32 %v1979, %v871
        %v1988 = vadd.f32 %v1980, %v872
        %v1989 = vadd.f32 %v1981, %v873
        %v1990 = vpack.c.bf16 %v1966, %v1965
        %1991 = vmatpush.bf16.msra.mxu0 %v1011
        %1992 = vmatpush.bf16.msra.mxu0 %v1007
        %1993 = vmatpush.bf16.msra.mxu0 %v1003
        %1994 = vmatpush.bf16.msra.mxu0 %v999
        %1995 = vmatpush.bf16.msra.mxu0 %v995
        %1996 = vmatpush.bf16.msra.mxu0 %v991
        %1997 = vmatpush.bf16.msra.mxu0 %v987
        %1998 = vmatpush.bf16.msra.mxu0 %v983
        %1999 = vmatmul.bf16.gmra.mxu0 %v1990
        %v2000 = vpop.f32.mrf.mxu0
        %v2001 = vadd.f32 0.0, %v2000
        %v2002 = vpop.f32.mrf.mxu0
        %v2003 = vadd.f32 0.0, %v2002
        %2004 = vdwg.mxu0
        %2005 = vmatpush.bf16.msra.mxu0 %v1012
        %2006 = vmatpush.bf16.msra.mxu0 %v1008
        %2007 = vmatpush.bf16.msra.mxu0 %v1004
        %2008 = vmatpush.bf16.msra.mxu0 %v1000
        %2009 = vmatpush.bf16.msra.mxu0 %v996
        %2010 = vmatpush.bf16.msra.mxu0 %v992
        %2011 = vmatpush.bf16.msra.mxu0 %v988
        %2012 = vmatpush.bf16.msra.mxu0 %v984
        %2013 = vmatmul.bf16.gmra.mxu0 %v1990
        %v2014 = vpop.f32.mrf.mxu0
        %v2015 = vadd.f32 0.0, %v2014
        %v2016 = vpop.f32.mrf.mxu0
        %v2017 = vadd.f32 0.0, %v2016
        %2018 = vdwg.mxu0
        %2019 = vmatpush.bf16.msra.mxu0 %v1013
        %2020 = vmatpush.bf16.msra.mxu0 %v1009
        %2021 = vmatpush.bf16.msra.mxu0 %v1005
        %2022 = vmatpush.bf16.msra.mxu0 %v1001
        %2023 = vmatpush.bf16.msra.mxu0 %v997
        %2024 = vmatpush.bf16.msra.mxu0 %v993
        %2025 = vmatpush.bf16.msra.mxu0 %v989
        %2026 = vmatpush.bf16.msra.mxu0 %v985
        %2027 = vmatmul.bf16.gmra.mxu0 %v1990
        %v2028 = vpop.f32.mrf.mxu0
        %v2029 = vadd.f32 0.0, %v2028
        %v2030 = vpop.f32.mrf.mxu0
        %v2031 = vadd.f32 0.0, %v2030
        %2032 = vdwg.mxu0
        %2033 = vmatpush.bf16.msra.mxu0 %v1014
        %2034 = vmatpush.bf16.msra.mxu0 %v1010
        %2035 = vmatpush.bf16.msra.mxu0 %v1006
        %2036 = vmatpush.bf16.msra.mxu0 %v1002
        %2037 = vmatpush.bf16.msra.mxu0 %v998
        %2038 = vmatpush.bf16.msra.mxu0 %v994
        %2039 = vmatpush.bf16.msra.mxu0 %v990
        %2040 = vmatpush.bf16.msra.mxu0 %v986
        %2041 = vmatmul.bf16.gmra.mxu0 %v1990
        %v2042 = vpop.f32.mrf.mxu0
        %v2043 = vadd.f32 0.0, %v2042
        %v2044 = vpop.f32.mrf.mxu0
        %v2045 = vadd.f32 0.0, %v2044
        %2046 = vdwg.mxu0
        %v2047 = vadd.f32 %v1982, %v2001
        %v2048 = vadd.f32 %v1983, %v2015
        %v2049 = vadd.f32 %v1984, %v2029
        %v2050 = vadd.f32 %v1985, %v2043
        %v2051 = vadd.f32 %v1986, %v2003
        %v2052 = vadd.f32 %v1987, %v2017
        %v2053 = vadd.f32 %v1988, %v2031
        %v2054 = vadd.f32 %v1989, %v2045
        %v2055 = vxor.u32 %v2047, 2147483648
        %v2056 = vxor.u32 %v2051, 2147483648
        %v2057 = vmul.f32 %v2055, 1.442695
        %v2058 = vpow.pop %v2057
        %v2059 = vmul.f32 %v2056, 1.442695
        %v2060 = vpow.pop %v2059
        %v2061 = vadd.f32 %v2058, 1.0
        %v2062 = vadd.f32 %v2060, 1.0
        %v2063 = vrcp.pop %v2061
        %v2064 = vmul.f32 %v2061, %v2063
        %v2065 = vsub.f32 1.0, %v2064
        %v2066 = vmul.f32 %v2063, %v2065
        %v2067 = vadd.f32 %v2063, %v2066
        %vm2068 = vweird.f32 %v2061
        %vm2069 = vweird.f32 %v2063
        %vm2070 = vmor %vm2068, %vm2069
        %v2071 = vsel %vm2070, %v2063, %v2067
        %v2072 = vand.u32 2147483647, %v2061
        %vm2073 = vcmp.eq.f32.partialorder %v2072, 8.507059e+37
        %v2074 = vand.u32 %v2061, 2147483648
        %v2075 = vor.u32 1.1754944e-38, %v2074
        %v2076 = vsel %vm2073, %v2075, %v2071
        %v2077 = vmul.f32 1.0, %v2076
        %v2078 = vrcp.pop %v2062
        %v2079 = vmul.f32 %v2062, %v2078
        %v2080 = vsub.f32 1.0, %v2079
        %v2081 = vmul.f32 %v2078, %v2080
        %v2082 = vadd.f32 %v2078, %v2081
        %vm2083 = vweird.f32 %v2062
        %vm2084 = vweird.f32 %v2078
        %vm2085 = vmor %vm2083, %vm2084
        %v2086 = vsel %vm2085, %v2078, %v2082
        %v2087 = vand.u32 2147483647, %v2062
        %vm2088 = vcmp.eq.f32.partialorder %v2087, 8.507059e+37
        %v2089 = vand.u32 %v2062, 2147483648
        %v2090 = vor.u32 1.1754944e-38, %v2089
        %v2091 = vsel %vm2088, %v2090, %v2086
        %v2092 = vmul.f32 1.0, %v2091
        %v2093 = vxor.u32 %v2048, 2147483648
        %v2094 = vxor.u32 %v2052, 2147483648
        %v2095 = vmul.f32 %v2093, 1.442695
        %v2096 = vpow.pop %v2095
        %v2097 = vmul.f32 %v2094, 1.442695
        %v2098 = vpow.pop %v2097
        %v2099 = vadd.f32 %v2096, 1.0
        %v2100 = vadd.f32 %v2098, 1.0
        %v2101 = vrcp.pop %v2099
        %v2102 = vmul.f32 %v2099, %v2101
        %v2103 = vsub.f32 1.0, %v2102
        %v2104 = vmul.f32 %v2101, %v2103
        %v2105 = vadd.f32 %v2101, %v2104
        %vm2106 = vweird.f32 %v2099
        %vm2107 = vweird.f32 %v2101
        %vm2108 = vmor %vm2106, %vm2107
        %v2109 = vsel %vm2108, %v2101, %v2105
        %v2110 = vand.u32 2147483647, %v2099
        %vm2111 = vcmp.eq.f32.partialorder %v2110, 8.507059e+37
        %v2112 = vand.u32 %v2099, 2147483648
        %v2113 = vor.u32 1.1754944e-38, %v2112
        %v2114 = vsel %vm2111, %v2113, %v2109
        %v2115 = vmul.f32 1.0, %v2114
        %v2116 = vrcp.pop %v2100
        %v2117 = vmul.f32 %v2100, %v2116
        %v2118 = vsub.f32 1.0, %v2117
        %v2119 = vmul.f32 %v2116, %v2118
        %v2120 = vadd.f32 %v2116, %v2119
        %vm2121 = vweird.f32 %v2100
        %vm2122 = vweird.f32 %v2116
        %vm2123 = vmor %vm2121, %vm2122
        %v2124 = vsel %vm2123, %v2116, %v2120
        %v2125 = vand.u32 2147483647, %v2100
        %vm2126 = vcmp.eq.f32.partialorder %v2125, 8.507059e+37
        %v2127 = vand.u32 %v2100, 2147483648
        %v2128 = vor.u32 1.1754944e-38, %v2127
        %v2129 = vsel %vm2126, %v2128, %v2124
        %v2130 = vmul.f32 1.0, %v2129
        %v2131 = vtanh.pop %v2049
        %v2132 = vtanh.pop %v2053
        %v2133 = vxor.u32 %v2050, 2147483648
        %v2134 = vxor.u32 %v2054, 2147483648
        %v2135 = vmul.f32 %v2133, 1.442695
        %v2136 = vpow.pop %v2135
        %v2137 = vmul.f32 %v2134, 1.442695
        %v2138 = vpow.pop %v2137
        %v2139 = vadd.f32 %v2136, 1.0
        %v2140 = vadd.f32 %v2138, 1.0
        %v2141 = vrcp.pop %v2139
        %v2142 = vmul.f32 %v2139, %v2141
        %v2143 = vsub.f32 1.0, %v2142
        %v2144 = vmul.f32 %v2141, %v2143
        %v2145 = vadd.f32 %v2141, %v2144
        %vm2146 = vweird.f32 %v2139
        %vm2147 = vweird.f32 %v2141
        %vm2148 = vmor %vm2146, %vm2147
        %v2149 = vsel %vm2148, %v2141, %v2145
        %v2150 = vand.u32 2147483647, %v2139
        %vm2151 = vcmp.eq.f32.partialorder %v2150, 8.507059e+37
        %v2152 = vand.u32 %v2139, 2147483648
        %v2153 = vor.u32 1.1754944e-38, %v2152
        %v2154 = vsel %vm2151, %v2153, %v2149
        %v2155 = vmul.f32 1.0, %v2154
        %v2156 = vrcp.pop %v2140
        %v2157 = vmul.f32 %v2140, %v2156
        %v2158 = vsub.f32 1.0, %v2157
        %v2159 = vmul.f32 %v2156, %v2158
        %v2160 = vadd.f32 %v2156, %v2159
        %vm2161 = vweird.f32 %v2140
        %vm2162 = vweird.f32 %v2156
        %vm2163 = vmor %vm2161, %vm2162
        %v2164 = vsel %vm2163, %v2156, %v2160
        %v2165 = vand.u32 2147483647, %v2140
        %vm2166 = vcmp.eq.f32.partialorder %v2165, 8.507059e+37
        %v2167 = vand.u32 %v2140, 2147483648
        %v2168 = vor.u32 1.1754944e-38, %v2167
        %v2169 = vsel %vm2166, %v2168, %v2164
        %v2170 = vmul.f32 1.0, %v2169
        %v2171 = vmul.f32 %v2115, %v1967
        %v2172 = vmul.f32 %v2130, %v1968
        %v2173 = vmul.f32 %v2077, %v2131
        %v2174 = vmul.f32 %v2092, %v2132
        %v2175 = vadd.f32 %v2171, %v2173
        %v2176 = vadd.f32 %v2172, %v2174
        %v2177 = vtanh.pop %v2175
        %v2178 = vtanh.pop %v2176
        %v2179 = vmul.f32 %v2155, %v2177
        %v2180 = vmul.f32 %v2170, %v2178
        %vm2181 = vcmp.gt.s32.totalorder %v847, 4
        %vm2182 = vcmp.gt.s32.totalorder %v848, 4
        %v2183 = vsel %vm2181, 1, 0
        %v2184 = vsel %vm2182, 1, 0
        %2185 = vset.pattern.permute.xlu0 0
        %2186 = vperm.xlu0 %2185, %v2183
        %v2187 = vpop.permute.xlu0 %2186
        %2188 = vset.pattern.permute.xlu0 0
        %2189 = vperm.xlu0 %2188, %v2184
        %v2190 = vpop.permute.xlu0 %2189
        %vm2191 = vcmp.eq.s32.totalorder %v2187, 1
        %vm2192 = vcmp.eq.s32.totalorder %v2190, 1
        %v2193 = vsel %vm2191, %v2179, %v1965
        %v2194 = vsel %vm2192, %v2180, %v1966
        %2195 = vst [vmem:[#allocation3] sm:$0xff] %v2193
        %2196 = vst [vmem:[#allocation3 + $0x8] sm:$0xff] %v2194
        %v2197 = vsel %vm2191, %v2175, %v1967
        %v2198 = vsel %vm2192, %v2176, %v1968
        %2199 = vst [vmem:[#allocation4] sm:$0xff] %v2197
        %2200 = vst [vmem:[#allocation4 + $0x8] sm:$0xff] %v2198
        %v2201 = vld [vmem:[#allocation3] sm:$0xff]
        %v2202 = vld [vmem:[#allocation3 + $0x8] sm:$0xff]
        %v2203 = vld [vmem:[#allocation4] sm:$0xff]
        %v2204 = vld [vmem:[#allocation4 + $0x8] sm:$0xff]
        %s2205 = scalar_lea.vmem [#allocation2], 160
        %v2206 = vld [vmem:[%s2205] sm:$0xff]
        %v2207 = vld [vmem:[%s2205 + $0x8] sm:$0xff]
        %v2208 = vld [vmem:[%s2205 + $0x10] sm:$0xff]
        %v2209 = vld [vmem:[%s2205 + $0x18] sm:$0xff]
        %v2210 = vunpack.c.l.bf16 %v2206
        %v2211 = vunpack.c.h.bf16 %v2206
        %v2212 = vunpack.c.l.bf16 %v2207
        %v2213 = vunpack.c.h.bf16 %v2207
        %v2214 = vunpack.c.l.bf16 %v2208
        %v2215 = vunpack.c.h.bf16 %v2208
        %v2216 = vunpack.c.l.bf16 %v2209
        %v2217 = vunpack.c.h.bf16 %v2209
        %v2218 = vadd.f32 %v2210, %v870
        %v2219 = vadd.f32 %v2211, %v871
        %v2220 = vadd.f32 %v2212, %v872
        %v2221 = vadd.f32 %v2213, %v873
        %v2222 = vadd.f32 %v2214, %v870
        %v2223 = vadd.f32 %v2215, %v871
        %v2224 = vadd.f32 %v2216, %v872
        %v2225 = vadd.f32 %v2217, %v873
        %v2226 = vpack.c.bf16 %v2202, %v2201
        %2227 = vmatpush.bf16.msra.mxu0 %v1011
        %2228 = vmatpush.bf16.msra.mxu0 %v1007
        %2229 = vmatpush.bf16.msra.mxu0 %v1003
        %2230 = vmatpush.bf16.msra.mxu0 %v999
        %2231 = vmatpush.bf16.msra.mxu0 %v995
        %2232 = vmatpush.bf16.msra.mxu0 %v991
        %2233 = vmatpush.bf16.msra.mxu0 %v987
        %2234 = vmatpush.bf16.msra.mxu0 %v983
        %2235 = vmatmul.bf16.gmra.mxu0 %v2226
        %v2236 = vpop.f32.mrf.mxu0
        %v2237 = vadd.f32 0.0, %v2236
        %v2238 = vpop.f32.mrf.mxu0
        %v2239 = vadd.f32 0.0, %v2238
        %2240 = vdwg.mxu0
        %2241 = vmatpush.bf16.msra.mxu0 %v1012
        %2242 = vmatpush.bf16.msra.mxu0 %v1008
        %2243 = vmatpush.bf16.msra.mxu0 %v1004
        %2244 = vmatpush.bf16.msra.mxu0 %v1000
        %2245 = vmatpush.bf16.msra.mxu0 %v996
        %2246 = vmatpush.bf16.msra.mxu0 %v992
        %2247 = vmatpush.bf16.msra.mxu0 %v988
        %2248 = vmatpush.bf16.msra.mxu0 %v984
        %2249 = vmatmul.bf16.gmra.mxu0 %v2226
        %v2250 = vpop.f32.mrf.mxu0
        %v2251 = vadd.f32 0.0, %v2250
        %v2252 = vpop.f32.mrf.mxu0
        %v2253 = vadd.f32 0.0, %v2252
        %2254 = vdwg.mxu0
        %2255 = vmatpush.bf16.msra.mxu0 %v1013
        %2256 = vmatpush.bf16.msra.mxu0 %v1009
        %2257 = vmatpush.bf16.msra.mxu0 %v1005
        %2258 = vmatpush.bf16.msra.mxu0 %v1001
        %2259 = vmatpush.bf16.msra.mxu0 %v997
        %2260 = vmatpush.bf16.msra.mxu0 %v993
        %2261 = vmatpush.bf16.msra.mxu0 %v989
        %2262 = vmatpush.bf16.msra.mxu0 %v985
        %2263 = vmatmul.bf16.gmra.mxu0 %v2226
        %v2264 = vpop.f32.mrf.mxu0
        %v2265 = vadd.f32 0.0, %v2264
        %v2266 = vpop.f32.mrf.mxu0
        %v2267 = vadd.f32 0.0, %v2266
        %2268 = vdwg.mxu0
        %2269 = vmatpush.bf16.msra.mxu0 %v1014
        %2270 = vmatpush.bf16.msra.mxu0 %v1010
        %2271 = vmatpush.bf16.msra.mxu0 %v1006
        %2272 = vmatpush.bf16.msra.mxu0 %v1002
        %2273 = vmatpush.bf16.msra.mxu0 %v998
        %2274 = vmatpush.bf16.msra.mxu0 %v994
        %2275 = vmatpush.bf16.msra.mxu0 %v990
        %2276 = vmatpush.bf16.msra.mxu0 %v986
        %2277 = vmatmul.bf16.gmra.mxu0 %v2226
        %v2278 = vpop.f32.mrf.mxu0
        %v2279 = vadd.f32 0.0, %v2278
        %v2280 = vpop.f32.mrf.mxu0
        %v2281 = vadd.f32 0.0, %v2280
        %2282 = vdwg.mxu0
        %v2283 = vadd.f32 %v2218, %v2237
        %v2284 = vadd.f32 %v2219, %v2251
        %v2285 = vadd.f32 %v2220, %v2265
        %v2286 = vadd.f32 %v2221, %v2279
        %v2287 = vadd.f32 %v2222, %v2239
        %v2288 = vadd.f32 %v2223, %v2253
        %v2289 = vadd.f32 %v2224, %v2267
        %v2290 = vadd.f32 %v2225, %v2281
        %v2291 = vxor.u32 %v2283, 2147483648
        %v2292 = vxor.u32 %v2287, 2147483648
        %v2293 = vmul.f32 %v2291, 1.442695
        %v2294 = vpow.pop %v2293
        %v2295 = vmul.f32 %v2292, 1.442695
        %v2296 = vpow.pop %v2295
        %v2297 = vadd.f32 %v2294, 1.0
        %v2298 = vadd.f32 %v2296, 1.0
        %v2299 = vrcp.pop %v2297
        %v2300 = vmul.f32 %v2297, %v2299
        %v2301 = vsub.f32 1.0, %v2300
        %v2302 = vmul.f32 %v2299, %v2301
        %v2303 = vadd.f32 %v2299, %v2302
        %vm2304 = vweird.f32 %v2297
        %vm2305 = vweird.f32 %v2299
        %vm2306 = vmor %vm2304, %vm2305
        %v2307 = vsel %vm2306, %v2299, %v2303
        %v2308 = vand.u32 2147483647, %v2297
        %vm2309 = vcmp.eq.f32.partialorder %v2308, 8.507059e+37
        %v2310 = vand.u32 %v2297, 2147483648
        %v2311 = vor.u32 1.1754944e-38, %v2310
        %v2312 = vsel %vm2309, %v2311, %v2307
        %v2313 = vmul.f32 1.0, %v2312
        %v2314 = vrcp.pop %v2298
        %v2315 = vmul.f32 %v2298, %v2314
        %v2316 = vsub.f32 1.0, %v2315
        %v2317 = vmul.f32 %v2314, %v2316
        %v2318 = vadd.f32 %v2314, %v2317
        %vm2319 = vweird.f32 %v2298
        %vm2320 = vweird.f32 %v2314
        %vm2321 = vmor %vm2319, %vm2320
        %v2322 = vsel %vm2321, %v2314, %v2318
        %v2323 = vand.u32 2147483647, %v2298
        %vm2324 = vcmp.eq.f32.partialorder %v2323, 8.507059e+37
        %v2325 = vand.u32 %v2298, 2147483648
        %v2326 = vor.u32 1.1754944e-38, %v2325
        %v2327 = vsel %vm2324, %v2326, %v2322
        %v2328 = vmul.f32 1.0, %v2327
        %v2329 = vxor.u32 %v2284, 2147483648
        %v2330 = vxor.u32 %v2288, 2147483648
        %v2331 = vmul.f32 %v2329, 1.442695
        %v2332 = vpow.pop %v2331
        %v2333 = vmul.f32 %v2330, 1.442695
        %v2334 = vpow.pop %v2333
        %v2335 = vadd.f32 %v2332, 1.0
        %v2336 = vadd.f32 %v2334, 1.0
        %v2337 = vrcp.pop %v2335
        %v2338 = vmul.f32 %v2335, %v2337
        %v2339 = vsub.f32 1.0, %v2338
        %v2340 = vmul.f32 %v2337, %v2339
        %v2341 = vadd.f32 %v2337, %v2340
        %vm2342 = vweird.f32 %v2335
        %vm2343 = vweird.f32 %v2337
        %vm2344 = vmor %vm2342, %vm2343
        %v2345 = vsel %vm2344, %v2337, %v2341
        %v2346 = vand.u32 2147483647, %v2335
        %vm2347 = vcmp.eq.f32.partialorder %v2346, 8.507059e+37
        %v2348 = vand.u32 %v2335, 2147483648
        %v2349 = vor.u32 1.1754944e-38, %v2348
        %v2350 = vsel %vm2347, %v2349, %v2345
        %v2351 = vmul.f32 1.0, %v2350
        %v2352 = vrcp.pop %v2336
        %v2353 = vmul.f32 %v2336, %v2352
        %v2354 = vsub.f32 1.0, %v2353
        %v2355 = vmul.f32 %v2352, %v2354
        %v2356 = vadd.f32 %v2352, %v2355
        %vm2357 = vweird.f32 %v2336
        %vm2358 = vweird.f32 %v2352
        %vm2359 = vmor %vm2357, %vm2358
        %v2360 = vsel %vm2359, %v2352, %v2356
        %v2361 = vand.u32 2147483647, %v2336
        %vm2362 = vcmp.eq.f32.partialorder %v2361, 8.507059e+37
        %v2363 = vand.u32 %v2336, 2147483648
        %v2364 = vor.u32 1.1754944e-38, %v2363
        %v2365 = vsel %vm2362, %v2364, %v2360
        %v2366 = vmul.f32 1.0, %v2365
        %v2367 = vtanh.pop %v2285
        %v2368 = vtanh.pop %v2289
        %v2369 = vxor.u32 %v2286, 2147483648
        %v2370 = vxor.u32 %v2290, 2147483648
        %v2371 = vmul.f32 %v2369, 1.442695
        %v2372 = vpow.pop %v2371
        %v2373 = vmul.f32 %v2370, 1.442695
        %v2374 = vpow.pop %v2373
        %v2375 = vadd.f32 %v2372, 1.0
        %v2376 = vadd.f32 %v2374, 1.0
        %v2377 = vrcp.pop %v2375
        %v2378 = vmul.f32 %v2375, %v2377
        %v2379 = vsub.f32 1.0, %v2378
        %v2380 = vmul.f32 %v2377, %v2379
        %v2381 = vadd.f32 %v2377, %v2380
        %vm2382 = vweird.f32 %v2375
        %vm2383 = vweird.f32 %v2377
        %vm2384 = vmor %vm2382, %vm2383
        %v2385 = vsel %vm2384, %v2377, %v2381
        %v2386 = vand.u32 2147483647, %v2375
        %vm2387 = vcmp.eq.f32.partialorder %v2386, 8.507059e+37
        %v2388 = vand.u32 %v2375, 2147483648
        %v2389 = vor.u32 1.1754944e-38, %v2388
        %v2390 = vsel %vm2387, %v2389, %v2385
        %v2391 = vmul.f32 1.0, %v2390
        %v2392 = vrcp.pop %v2376
        %v2393 = vmul.f32 %v2376, %v2392
        %v2394 = vsub.f32 1.0, %v2393
        %v2395 = vmul.f32 %v2392, %v2394
        %v2396 = vadd.f32 %v2392, %v2395
        %vm2397 = vweird.f32 %v2376
        %vm2398 = vweird.f32 %v2392
        %vm2399 = vmor %vm2397, %vm2398
        %v2400 = vsel %vm2399, %v2392, %v2396
        %v2401 = vand.u32 2147483647, %v2376
        %vm2402 = vcmp.eq.f32.partialorder %v2401, 8.507059e+37
        %v2403 = vand.u32 %v2376, 2147483648
        %v2404 = vor.u32 1.1754944e-38, %v2403
        %v2405 = vsel %vm2402, %v2404, %v2400
        %v2406 = vmul.f32 1.0, %v2405
        %v2407 = vmul.f32 %v2351, %v2203
        %v2408 = vmul.f32 %v2366, %v2204
        %v2409 = vmul.f32 %v2313, %v2367
        %v2410 = vmul.f32 %v2328, %v2368
        %v2411 = vadd.f32 %v2407, %v2409
        %v2412 = vadd.f32 %v2408, %v2410
        %v2413 = vtanh.pop %v2411
        %v2414 = vtanh.pop %v2412
        %v2415 = vmul.f32 %v2391, %v2413
        %v2416 = vmul.f32 %v2406, %v2414
        %vm2417 = vcmp.gt.s32.totalorder %v847, 5
        %vm2418 = vcmp.gt.s32.totalorder %v848, 5
        %v2419 = vsel %vm2417, 1, 0
        %v2420 = vsel %vm2418, 1, 0
        %2421 = vset.pattern.permute.xlu0 0
        %2422 = vperm.xlu0 %2421, %v2419
        %v2423 = vpop.permute.xlu0 %2422
        %2424 = vset.pattern.permute.xlu0 0
        %2425 = vperm.xlu0 %2424, %v2420
        %v2426 = vpop.permute.xlu0 %2425
        %vm2427 = vcmp.eq.s32.totalorder %v2423, 1
        %vm2428 = vcmp.eq.s32.totalorder %v2426, 1
        %v2429 = vsel %vm2427, %v2415, %v2201
        %v2430 = vsel %vm2428, %v2416, %v2202
        %2431 = vst [vmem:[#allocation3] sm:$0xff] %v2429
        %2432 = vst [vmem:[#allocation3 + $0x8] sm:$0xff] %v2430
        %v2433 = vsel %vm2427, %v2411, %v2203
        %v2434 = vsel %vm2428, %v2412, %v2204
        %2435 = vst [vmem:[#allocation4] sm:$0xff] %v2433
        %2436 = vst [vmem:[#allocation4 + $0x8] sm:$0xff] %v2434
        %v2437 = vld [vmem:[#allocation3] sm:$0xff]
        %v2438 = vld [vmem:[#allocation3 + $0x8] sm:$0xff]
        %v2439 = vld [vmem:[#allocation4] sm:$0xff]
        %v2440 = vld [vmem:[#allocation4 + $0x8] sm:$0xff]
        %s2441 = scalar_lea.vmem [#allocation2], 192
        %v2442 = vld [vmem:[%s2441] sm:$0xff]
        %v2443 = vld [vmem:[%s2441 + $0x8] sm:$0xff]
        %v2444 = vld [vmem:[%s2441 + $0x10] sm:$0xff]
        %v2445 = vld [vmem:[%s2441 + $0x18] sm:$0xff]
        %v2446 = vunpack.c.l.bf16 %v2442
        %v2447 = vunpack.c.h.bf16 %v2442
        %v2448 = vunpack.c.l.bf16 %v2443
        %v2449 = vunpack.c.h.bf16 %v2443
        %v2450 = vunpack.c.l.bf16 %v2444
        %v2451 = vunpack.c.h.bf16 %v2444
        %v2452 = vunpack.c.l.bf16 %v2445
        %v2453 = vunpack.c.h.bf16 %v2445
        %v2454 = vadd.f32 %v2446, %v870
        %v2455 = vadd.f32 %v2447, %v871
        %v2456 = vadd.f32 %v2448, %v872
        %v2457 = vadd.f32 %v2449, %v873
        %v2458 = vadd.f32 %v2450, %v870
        %v2459 = vadd.f32 %v2451, %v871
        %v2460 = vadd.f32 %v2452, %v872
        %v2461 = vadd.f32 %v2453, %v873
        %v2462 = vpack.c.bf16 %v2438, %v2437
        %2463 = vmatpush.bf16.msra.mxu0 %v1011
        %2464 = vmatpush.bf16.msra.mxu0 %v1007
        %2465 = vmatpush.bf16.msra.mxu0 %v1003
        %2466 = vmatpush.bf16.msra.mxu0 %v999
        %2467 = vmatpush.bf16.msra.mxu0 %v995
        %2468 = vmatpush.bf16.msra.mxu0 %v991
        %2469 = vmatpush.bf16.msra.mxu0 %v987
        %2470 = vmatpush.bf16.msra.mxu0 %v983
        %2471 = vmatmul.bf16.gmra.mxu0 %v2462
        %v2472 = vpop.f32.mrf.mxu0
        %v2473 = vadd.f32 0.0, %v2472
        %v2474 = vpop.f32.mrf.mxu0
        %v2475 = vadd.f32 0.0, %v2474
        %2476 = vdwg.mxu0
        %2477 = vmatpush.bf16.msra.mxu0 %v1012
        %2478 = vmatpush.bf16.msra.mxu0 %v1008
        %2479 = vmatpush.bf16.msra.mxu0 %v1004
        %2480 = vmatpush.bf16.msra.mxu0 %v1000
        %2481 = vmatpush.bf16.msra.mxu0 %v996
        %2482 = vmatpush.bf16.msra.mxu0 %v992
        %2483 = vmatpush.bf16.msra.mxu0 %v988
        %2484 = vmatpush.bf16.msra.mxu0 %v984
        %2485 = vmatmul.bf16.gmra.mxu0 %v2462
        %v2486 = vpop.f32.mrf.mxu0
        %v2487 = vadd.f32 0.0, %v2486
        %v2488 = vpop.f32.mrf.mxu0
        %v2489 = vadd.f32 0.0, %v2488
        %2490 = vdwg.mxu0
        %2491 = vmatpush.bf16.msra.mxu0 %v1013
        %2492 = vmatpush.bf16.msra.mxu0 %v1009
        %2493 = vmatpush.bf16.msra.mxu0 %v1005
        %2494 = vmatpush.bf16.msra.mxu0 %v1001
        %2495 = vmatpush.bf16.msra.mxu0 %v997
        %2496 = vmatpush.bf16.msra.mxu0 %v993
        %2497 = vmatpush.bf16.msra.mxu0 %v989
        %2498 = vmatpush.bf16.msra.mxu0 %v985
        %2499 = vmatmul.bf16.gmra.mxu0 %v2462
        %v2500 = vpop.f32.mrf.mxu0
        %v2501 = vadd.f32 0.0, %v2500
        %v2502 = vpop.f32.mrf.mxu0
        %v2503 = vadd.f32 0.0, %v2502
        %2504 = vdwg.mxu0
        %2505 = vmatpush.bf16.msra.mxu0 %v1014
        %2506 = vmatpush.bf16.msra.mxu0 %v1010
        %2507 = vmatpush.bf16.msra.mxu0 %v1006
        %2508 = vmatpush.bf16.msra.mxu0 %v1002
        %2509 = vmatpush.bf16.msra.mxu0 %v998
        %2510 = vmatpush.bf16.msra.mxu0 %v994
        %2511 = vmatpush.bf16.msra.mxu0 %v990
        %2512 = vmatpush.bf16.msra.mxu0 %v986
        %2513 = vmatmul.bf16.gmra.mxu0 %v2462
        %v2514 = vpop.f32.mrf.mxu0
        %v2515 = vadd.f32 0.0, %v2514
        %v2516 = vpop.f32.mrf.mxu0
        %v2517 = vadd.f32 0.0, %v2516
        %2518 = vdwg.mxu0
        %v2519 = vadd.f32 %v2454, %v2473
        %v2520 = vadd.f32 %v2455, %v2487
        %v2521 = vadd.f32 %v2456, %v2501
        %v2522 = vadd.f32 %v2457, %v2515
        %v2523 = vadd.f32 %v2458, %v2475
        %v2524 = vadd.f32 %v2459, %v2489
        %v2525 = vadd.f32 %v2460, %v2503
        %v2526 = vadd.f32 %v2461, %v2517
        %v2527 = vxor.u32 %v2519, 2147483648
        %v2528 = vxor.u32 %v2523, 2147483648
        %v2529 = vmul.f32 %v2527, 1.442695
        %v2530 = vpow.pop %v2529
        %v2531 = vmul.f32 %v2528, 1.442695
        %v2532 = vpow.pop %v2531
        %v2533 = vadd.f32 %v2530, 1.0
        %v2534 = vadd.f32 %v2532, 1.0
        %v2535 = vrcp.pop %v2533
        %v2536 = vmul.f32 %v2533, %v2535
        %v2537 = vsub.f32 1.0, %v2536
        %v2538 = vmul.f32 %v2535, %v2537
        %v2539 = vadd.f32 %v2535, %v2538
        %vm2540 = vweird.f32 %v2533
        %vm2541 = vweird.f32 %v2535
        %vm2542 = vmor %vm2540, %vm2541
        %v2543 = vsel %vm2542, %v2535, %v2539
        %v2544 = vand.u32 2147483647, %v2533
        %vm2545 = vcmp.eq.f32.partialorder %v2544, 8.507059e+37
        %v2546 = vand.u32 %v2533, 2147483648
        %v2547 = vor.u32 1.1754944e-38, %v2546
        %v2548 = vsel %vm2545, %v2547, %v2543
        %v2549 = vmul.f32 1.0, %v2548
        %v2550 = vrcp.pop %v2534
        %v2551 = vmul.f32 %v2534, %v2550
        %v2552 = vsub.f32 1.0, %v2551
        %v2553 = vmul.f32 %v2550, %v2552
        %v2554 = vadd.f32 %v2550, %v2553
        %vm2555 = vweird.f32 %v2534
        %vm2556 = vweird.f32 %v2550
        %vm2557 = vmor %vm2555, %vm2556
        %v2558 = vsel %vm2557, %v2550, %v2554
        %v2559 = vand.u32 2147483647, %v2534
        %vm2560 = vcmp.eq.f32.partialorder %v2559, 8.507059e+37
        %v2561 = vand.u32 %v2534, 2147483648
        %v2562 = vor.u32 1.1754944e-38, %v2561
        %v2563 = vsel %vm2560, %v2562, %v2558
        %v2564 = vmul.f32 1.0, %v2563
        %v2565 = vxor.u32 %v2520, 2147483648
        %v2566 = vxor.u32 %v2524, 2147483648
        %v2567 = vmul.f32 %v2565, 1.442695
        %v2568 = vpow.pop %v2567
        %v2569 = vmul.f32 %v2566, 1.442695
        %v2570 = vpow.pop %v2569
        %v2571 = vadd.f32 %v2568, 1.0
        %v2572 = vadd.f32 %v2570, 1.0
        %v2573 = vrcp.pop %v2571
        %v2574 = vmul.f32 %v2571, %v2573
        %v2575 = vsub.f32 1.0, %v2574
        %v2576 = vmul.f32 %v2573, %v2575
        %v2577 = vadd.f32 %v2573, %v2576
        %vm2578 = vweird.f32 %v2571
        %vm2579 = vweird.f32 %v2573
        %vm2580 = vmor %vm2578, %vm2579
        %v2581 = vsel %vm2580, %v2573, %v2577
        %v2582 = vand.u32 2147483647, %v2571
        %vm2583 = vcmp.eq.f32.partialorder %v2582, 8.507059e+37
        %v2584 = vand.u32 %v2571, 2147483648
        %v2585 = vor.u32 1.1754944e-38, %v2584
        %v2586 = vsel %vm2583, %v2585, %v2581
        %v2587 = vmul.f32 1.0, %v2586
        %v2588 = vrcp.pop %v2572
        %v2589 = vmul.f32 %v2572, %v2588
        %v2590 = vsub.f32 1.0, %v2589
        %v2591 = vmul.f32 %v2588, %v2590
        %v2592 = vadd.f32 %v2588, %v2591
        %vm2593 = vweird.f32 %v2572
        %vm2594 = vweird.f32 %v2588
        %vm2595 = vmor %vm2593, %vm2594
        %v2596 = vsel %vm2595, %v2588, %v2592
        %v2597 = vand.u32 2147483647, %v2572
        %vm2598 = vcmp.eq.f32.partialorder %v2597, 8.507059e+37
        %v2599 = vand.u32 %v2572, 2147483648
        %v2600 = vor.u32 1.1754944e-38, %v2599
        %v2601 = vsel %vm2598, %v2600, %v2596
        %v2602 = vmul.f32 1.0, %v2601
        %v2603 = vtanh.pop %v2521
        %v2604 = vtanh.pop %v2525
        %v2605 = vxor.u32 %v2522, 2147483648
        %v2606 = vxor.u32 %v2526, 2147483648
        %v2607 = vmul.f32 %v2605, 1.442695
        %v2608 = vpow.pop %v2607
        %v2609 = vmul.f32 %v2606, 1.442695
        %v2610 = vpow.pop %v2609
        %v2611 = vadd.f32 %v2608, 1.0
        %v2612 = vadd.f32 %v2610, 1.0
        %v2613 = vrcp.pop %v2611
        %v2614 = vmul.f32 %v2611, %v2613
        %v2615 = vsub.f32 1.0, %v2614
        %v2616 = vmul.f32 %v2613, %v2615
        %v2617 = vadd.f32 %v2613, %v2616
        %vm2618 = vweird.f32 %v2611
        %vm2619 = vweird.f32 %v2613
        %vm2620 = vmor %vm2618, %vm2619
        %v2621 = vsel %vm2620, %v2613, %v2617
        %v2622 = vand.u32 2147483647, %v2611
        %vm2623 = vcmp.eq.f32.partialorder %v2622, 8.507059e+37
        %v2624 = vand.u32 %v2611, 2147483648
        %v2625 = vor.u32 1.1754944e-38, %v2624
        %v2626 = vsel %vm2623, %v2625, %v2621
        %v2627 = vmul.f32 1.0, %v2626
        %v2628 = vrcp.pop %v2612
        %v2629 = vmul.f32 %v2612, %v2628
        %v2630 = vsub.f32 1.0, %v2629
        %v2631 = vmul.f32 %v2628, %v2630
        %v2632 = vadd.f32 %v2628, %v2631
        %vm2633 = vweird.f32 %v2612
        %vm2634 = vweird.f32 %v2628
        %vm2635 = vmor %vm2633, %vm2634
        %v2636 = vsel %vm2635, %v2628, %v2632
        %v2637 = vand.u32 2147483647, %v2612
        %vm2638 = vcmp.eq.f32.partialorder %v2637, 8.507059e+37
        %v2639 = vand.u32 %v2612, 2147483648
        %v2640 = vor.u32 1.1754944e-38, %v2639
        %v2641 = vsel %vm2638, %v2640, %v2636
        %v2642 = vmul.f32 1.0, %v2641
        %v2643 = vmul.f32 %v2587, %v2439
        %v2644 = vmul.f32 %v2602, %v2440
        %v2645 = vmul.f32 %v2549, %v2603
        %v2646 = vmul.f32 %v2564, %v2604
        %v2647 = vadd.f32 %v2643, %v2645
        %v2648 = vadd.f32 %v2644, %v2646
        %v2649 = vtanh.pop %v2647
        %v2650 = vtanh.pop %v2648
        %v2651 = vmul.f32 %v2627, %v2649
        %v2652 = vmul.f32 %v2642, %v2650
        %vm2653 = vcmp.gt.s32.totalorder %v847, 6
        %vm2654 = vcmp.gt.s32.totalorder %v848, 6
        %v2655 = vsel %vm2653, 1, 0
        %v2656 = vsel %vm2654, 1, 0
        %2657 = vset.pattern.permute.xlu0 0
        %2658 = vperm.xlu0 %2657, %v2655
        %v2659 = vpop.permute.xlu0 %2658
        %2660 = vset.pattern.permute.xlu0 0
        %2661 = vperm.xlu0 %2660, %v2656
        %v2662 = vpop.permute.xlu0 %2661
        %vm2663 = vcmp.eq.s32.totalorder %v2659, 1
        %vm2664 = vcmp.eq.s32.totalorder %v2662, 1
        %v2665 = vsel %vm2663, %v2651, %v2437
        %v2666 = vsel %vm2664, %v2652, %v2438
        %2667 = vst [vmem:[#allocation3] sm:$0xff] %v2665
        %2668 = vst [vmem:[#allocation3 + $0x8] sm:$0xff] %v2666
        %v2669 = vsel %vm2663, %v2647, %v2439
        %v2670 = vsel %vm2664, %v2648, %v2440
        %2671 = vst [vmem:[#allocation4] sm:$0xff] %v2669
        %2672 = vst [vmem:[#allocation4 + $0x8] sm:$0xff] %v2670
        %v2673 = vld [vmem:[#allocation3] sm:$0xff]
        %v2674 = vld [vmem:[#allocation3 + $0x8] sm:$0xff]
        %v2675 = vld [vmem:[#allocation4] sm:$0xff]
        %v2676 = vld [vmem:[#allocation4 + $0x8] sm:$0xff]
        %s2677 = scalar_lea.vmem [#allocation2], 224
        %v2678 = vld [vmem:[%s2677] sm:$0xff]
        %v2679 = vld [vmem:[%s2677 + $0x8] sm:$0xff]
        %v2680 = vld [vmem:[%s2677 + $0x10] sm:$0xff]
        %v2681 = vld [vmem:[%s2677 + $0x18] sm:$0xff]
        %v2682 = vunpack.c.l.bf16 %v2678
        %v2683 = vunpack.c.h.bf16 %v2678
        %v2684 = vunpack.c.l.bf16 %v2679
        %v2685 = vunpack.c.h.bf16 %v2679
        %v2686 = vunpack.c.l.bf16 %v2680
        %v2687 = vunpack.c.h.bf16 %v2680
        %v2688 = vunpack.c.l.bf16 %v2681
        %v2689 = vunpack.c.h.bf16 %v2681
        %v2690 = vadd.f32 %v2682, %v870
        %v2691 = vadd.f32 %v2683, %v871
        %v2692 = vadd.f32 %v2684, %v872
        %v2693 = vadd.f32 %v2685, %v873
        %v2694 = vadd.f32 %v2686, %v870
        %v2695 = vadd.f32 %v2687, %v871
        %v2696 = vadd.f32 %v2688, %v872
        %v2697 = vadd.f32 %v2689, %v873
        %v2698 = vpack.c.bf16 %v2674, %v2673
        %2699 = vmatpush.bf16.msra.mxu0 %v1011
        %2700 = vmatpush.bf16.msra.mxu0 %v1007
        %2701 = vmatpush.bf16.msra.mxu0 %v1003
        %2702 = vmatpush.bf16.msra.mxu0 %v999
        %2703 = vmatpush.bf16.msra.mxu0 %v995
        %2704 = vmatpush.bf16.msra.mxu0 %v991
        %2705 = vmatpush.bf16.msra.mxu0 %v987
        %2706 = vmatpush.bf16.msra.mxu0 %v983
        %2707 = vmatmul.bf16.gmra.mxu0 %v2698
        %v2708 = vpop.f32.mrf.mxu0
        %v2709 = vadd.f32 0.0, %v2708
        %v2710 = vpop.f32.mrf.mxu0
        %v2711 = vadd.f32 0.0, %v2710
        %2712 = vdwg.mxu0
        %2713 = vmatpush.bf16.msra.mxu0 %v1012
        %2714 = vmatpush.bf16.msra.mxu0 %v1008
        %2715 = vmatpush.bf16.msra.mxu0 %v1004
        %2716 = vmatpush.bf16.msra.mxu0 %v1000
        %2717 = vmatpush.bf16.msra.mxu0 %v996
        %2718 = vmatpush.bf16.msra.mxu0 %v992
        %2719 = vmatpush.bf16.msra.mxu0 %v988
        %2720 = vmatpush.bf16.msra.mxu0 %v984
        %2721 = vmatmul.bf16.gmra.mxu0 %v2698
        %v2722 = vpop.f32.mrf.mxu0
        %v2723 = vadd.f32 0.0, %v2722
        %v2724 = vpop.f32.mrf.mxu0
        %v2725 = vadd.f32 0.0, %v2724
        %2726 = vdwg.mxu0
        %2727 = vmatpush.bf16.msra.mxu0 %v1013
        %2728 = vmatpush.bf16.msra.mxu0 %v1009
        %2729 = vmatpush.bf16.msra.mxu0 %v1005
        %2730 = vmatpush.bf16.msra.mxu0 %v1001
        %2731 = vmatpush.bf16.msra.mxu0 %v997
        %2732 = vmatpush.bf16.msra.mxu0 %v993
        %2733 = vmatpush.bf16.msra.mxu0 %v989
        %2734 = vmatpush.bf16.msra.mxu0 %v985
        %2735 = vmatmul.bf16.gmra.mxu0 %v2698
        %v2736 = vpop.f32.mrf.mxu0
        %v2737 = vadd.f32 0.0, %v2736
        %v2738 = vpop.f32.mrf.mxu0
        %v2739 = vadd.f32 0.0, %v2738
        %2740 = vdwg.mxu0
        %2741 = vmatpush.bf16.msra.mxu0 %v1014
        %2742 = vmatpush.bf16.msra.mxu0 %v1010
        %2743 = vmatpush.bf16.msra.mxu0 %v1006
        %2744 = vmatpush.bf16.msra.mxu0 %v1002
        %2745 = vmatpush.bf16.msra.mxu0 %v998
        %2746 = vmatpush.bf16.msra.mxu0 %v994
        %2747 = vmatpush.bf16.msra.mxu0 %v990
        %2748 = vmatpush.bf16.msra.mxu0 %v986
        %2749 = vmatmul.bf16.gmra.mxu0 %v2698
        %v2750 = vpop.f32.mrf.mxu0
        %v2751 = vadd.f32 0.0, %v2750
        %v2752 = vpop.f32.mrf.mxu0
        %v2753 = vadd.f32 0.0, %v2752
        %2754 = vdwg.mxu0
        %v2755 = vadd.f32 %v2690, %v2709
        %v2756 = vadd.f32 %v2691, %v2723
        %v2757 = vadd.f32 %v2692, %v2737
        %v2758 = vadd.f32 %v2693, %v2751
        %v2759 = vadd.f32 %v2694, %v2711
        %v2760 = vadd.f32 %v2695, %v2725
        %v2761 = vadd.f32 %v2696, %v2739
        %v2762 = vadd.f32 %v2697, %v2753
        %v2763 = vxor.u32 %v2755, 2147483648
        %v2764 = vxor.u32 %v2759, 2147483648
        %v2765 = vmul.f32 %v2763, 1.442695
        %v2766 = vpow.pop %v2765
        %v2767 = vmul.f32 %v2764, 1.442695
        %v2768 = vpow.pop %v2767
        %v2769 = vadd.f32 %v2766, 1.0
        %v2770 = vadd.f32 %v2768, 1.0
        %v2771 = vrcp.pop %v2769
        %v2772 = vmul.f32 %v2769, %v2771
        %v2773 = vsub.f32 1.0, %v2772
        %v2774 = vmul.f32 %v2771, %v2773
        %v2775 = vadd.f32 %v2771, %v2774
        %vm2776 = vweird.f32 %v2769
        %vm2777 = vweird.f32 %v2771
        %vm2778 = vmor %vm2776, %vm2777
        %v2779 = vsel %vm2778, %v2771, %v2775
        %v2780 = vand.u32 2147483647, %v2769
        %vm2781 = vcmp.eq.f32.partialorder %v2780, 8.507059e+37
        %v2782 = vand.u32 %v2769, 2147483648
        %v2783 = vor.u32 1.1754944e-38, %v2782
        %v2784 = vsel %vm2781, %v2783, %v2779
        %v2785 = vmul.f32 1.0, %v2784
        %v2786 = vrcp.pop %v2770
        %v2787 = vmul.f32 %v2770, %v2786
        %v2788 = vsub.f32 1.0, %v2787
        %v2789 = vmul.f32 %v2786, %v2788
        %v2790 = vadd.f32 %v2786, %v2789
        %vm2791 = vweird.f32 %v2770
        %vm2792 = vweird.f32 %v2786
        %vm2793 = vmor %vm2791, %vm2792
        %v2794 = vsel %vm2793, %v2786, %v2790
        %v2795 = vand.u32 2147483647, %v2770
        %vm2796 = vcmp.eq.f32.partialorder %v2795, 8.507059e+37
        %v2797 = vand.u32 %v2770, 2147483648
        %v2798 = vor.u32 1.1754944e-38, %v2797
        %v2799 = vsel %vm2796, %v2798, %v2794
        %v2800 = vmul.f32 1.0, %v2799
        %v2801 = vxor.u32 %v2756, 2147483648
        %v2802 = vxor.u32 %v2760, 2147483648
        %v2803 = vmul.f32 %v2801, 1.442695
        %v2804 = vpow.pop %v2803
        %v2805 = vmul.f32 %v2802, 1.442695
        %v2806 = vpow.pop %v2805
        %v2807 = vadd.f32 %v2804, 1.0
        %v2808 = vadd.f32 %v2806, 1.0
        %v2809 = vrcp.pop %v2807
        %v2810 = vmul.f32 %v2807, %v2809
        %v2811 = vsub.f32 1.0, %v2810
        %v2812 = vmul.f32 %v2809, %v2811
        %v2813 = vadd.f32 %v2809, %v2812
        %vm2814 = vweird.f32 %v2807
        %vm2815 = vweird.f32 %v2809
        %vm2816 = vmor %vm2814, %vm2815
        %v2817 = vsel %vm2816, %v2809, %v2813
        %v2818 = vand.u32 2147483647, %v2807
        %vm2819 = vcmp.eq.f32.partialorder %v2818, 8.507059e+37
        %v2820 = vand.u32 %v2807, 2147483648
        %v2821 = vor.u32 1.1754944e-38, %v2820
        %v2822 = vsel %vm2819, %v2821, %v2817
        %v2823 = vmul.f32 1.0, %v2822
        %v2824 = vrcp.pop %v2808
        %v2825 = vmul.f32 %v2808, %v2824
        %v2826 = vsub.f32 1.0, %v2825
        %v2827 = vmul.f32 %v2824, %v2826
        %v2828 = vadd.f32 %v2824, %v2827
        %vm2829 = vweird.f32 %v2808
        %vm2830 = vweird.f32 %v2824
        %vm2831 = vmor %vm2829, %vm2830
        %v2832 = vsel %vm2831, %v2824, %v2828
        %v2833 = vand.u32 2147483647, %v2808
        %vm2834 = vcmp.eq.f32.partialorder %v2833, 8.507059e+37
        %v2835 = vand.u32 %v2808, 2147483648
        %v2836 = vor.u32 1.1754944e-38, %v2835
        %v2837 = vsel %vm2834, %v2836, %v2832
        %v2838 = vmul.f32 1.0, %v2837
        %v2839 = vtanh.pop %v2757
        %v2840 = vtanh.pop %v2761
        %v2841 = vxor.u32 %v2758, 2147483648
        %v2842 = vxor.u32 %v2762, 2147483648
        %v2843 = vmul.f32 %v2841, 1.442695
        %v2844 = vpow.pop %v2843
        %v2845 = vmul.f32 %v2842, 1.442695
        %v2846 = vpow.pop %v2845
        %v2847 = vadd.f32 %v2844, 1.0
        %v2848 = vadd.f32 %v2846, 1.0
        %v2849 = vrcp.pop %v2847
        %v2850 = vmul.f32 %v2847, %v2849
        %v2851 = vsub.f32 1.0, %v2850
        %v2852 = vmul.f32 %v2849, %v2851
        %v2853 = vadd.f32 %v2849, %v2852
        %vm2854 = vweird.f32 %v2847
        %vm2855 = vweird.f32 %v2849
        %vm2856 = vmor %vm2854, %vm2855
        %v2857 = vsel %vm2856, %v2849, %v2853
        %v2858 = vand.u32 2147483647, %v2847
        %vm2859 = vcmp.eq.f32.partialorder %v2858, 8.507059e+37
        %v2860 = vand.u32 %v2847, 2147483648
        %v2861 = vor.u32 1.1754944e-38, %v2860
        %v2862 = vsel %vm2859, %v2861, %v2857
        %v2863 = vmul.f32 1.0, %v2862
        %v2864 = vrcp.pop %v2848
        %v2865 = vmul.f32 %v2848, %v2864
        %v2866 = vsub.f32 1.0, %v2865
        %v2867 = vmul.f32 %v2864, %v2866
        %v2868 = vadd.f32 %v2864, %v2867
        %vm2869 = vweird.f32 %v2848
        %vm2870 = vweird.f32 %v2864
        %vm2871 = vmor %vm2869, %vm2870
        %v2872 = vsel %vm2871, %v2864, %v2868
        %v2873 = vand.u32 2147483647, %v2848
        %vm2874 = vcmp.eq.f32.partialorder %v2873, 8.507059e+37
        %v2875 = vand.u32 %v2848, 2147483648
        %v2876 = vor.u32 1.1754944e-38, %v2875
        %v2877 = vsel %vm2874, %v2876, %v2872
        %v2878 = vmul.f32 1.0, %v2877
        %v2879 = vmul.f32 %v2823, %v2675
        %v2880 = vmul.f32 %v2838, %v2676
        %v2881 = vmul.f32 %v2785, %v2839
        %v2882 = vmul.f32 %v2800, %v2840
        %v2883 = vadd.f32 %v2879, %v2881
        %v2884 = vadd.f32 %v2880, %v2882
        %v2885 = vtanh.pop %v2883
        %v2886 = vtanh.pop %v2884
        %v2887 = vmul.f32 %v2863, %v2885
        %v2888 = vmul.f32 %v2878, %v2886
        %vm2889 = vcmp.gt.s32.totalorder %v847, 7
        %vm2890 = vcmp.gt.s32.totalorder %v848, 7
        %v2891 = vsel %vm2889, 1, 0
        %v2892 = vsel %vm2890, 1, 0
        %2893 = vset.pattern.permute.xlu0 0
        %2894 = vperm.xlu0 %2893, %v2891
        %v2895 = vpop.permute.xlu0 %2894
        %2896 = vset.pattern.permute.xlu0 0
        %2897 = vperm.xlu0 %2896, %v2892
        %v2898 = vpop.permute.xlu0 %2897
        %vm2899 = vcmp.eq.s32.totalorder %v2895, 1
        %vm2900 = vcmp.eq.s32.totalorder %v2898, 1
        %v2901 = vsel %vm2899, %v2887, %v2673
        %v2902 = vsel %vm2900, %v2888, %v2674
        %2903 = vst [vmem:[#allocation3] sm:$0xff] %v2901
        %2904 = vst [vmem:[#allocation3 + $0x8] sm:$0xff] %v2902
        %v2905 = vsel %vm2899, %v2883, %v2675
        %v2906 = vsel %vm2900, %v2884, %v2676
        %2907 = vst [vmem:[#allocation4] sm:$0xff] %v2905
        %2908 = vst [vmem:[#allocation4 + $0x8] sm:$0xff] %v2906
        %v2909 = vld [vmem:[#allocation3] sm:$0xff]
        %v2910 = vld [vmem:[#allocation3 + $0x8] sm:$0xff]
        %2911 = vst [vmem:[%s382] sm:$0xff] %v2909
        %2912 = vst [vmem:[%s382 + $0x8] sm:$0xff] %v2910
        %s2913 = sand.u32 %s181, 1
        %s2914 = scalar_lea.sflag [#allocation7], %s2913
        %s2915 = sand.u32 %s181, 1
        %s2916 = smul.addr %s2915, 16
        %s2917 = scalar_lea.vmem [#allocation11], %s2916
        // Predicated region
        $region53: #{tpu_custom_call.1} parent=39 // pred_check
          %p2918 = pneg %p191
        $region54: #{tpu_custom_call.1} parent=39 // pred_check_branch
          %2920 = sbr.rel (%p2918) target = $region56
        $region55: #{tpu_custom_call.1} parent=39 // pred_region
          %s2921 = smul.u32 2, %s30
          %2923 = vsyncadd %s2914, 0
          %s2924 = smul.addr %s29, 2
          %s2925 = sadd.s32 %s2921, %s2924
          %s2926 = smul.addr %s2925, 8
          %s2927 = scalar_lea.hbm %s5, %s2926
          %s2928 = sshll.u32 %s2917, 4
          %s2929 = int_to_ptr.vmem [resolvable:$true] %s2928
          %s2930 = sshll.u32 %s2927, 4
          %s2931 = int_to_ptr.hbm [resolvable:$true] %s2930
          %2936 = dma.vmem_to_hbm [thread:$0]  %s2929, 256, %s2931, %s2914, 128, 128, 8
        $region56: #{tpu_custom_call.1} parent=39 // pred_fallthru
          _
      $region40: #{tpu_custom_call.1} parent=5 // pred_fallthru
        _
      %p2937 = scmp.le.s32.totalorder 2, %s20
      // Predicated region
      $region57: #{tpu_custom_call.1} parent=5 // pred_check
        %p2938 = pneg %p2937
      $region58: #{tpu_custom_call.1} parent=5 // pred_check_branch
        %2940 = sbr.rel (%p2938) target = $region60
      $region59: #{tpu_custom_call.1} parent=5 // pred_region
        %s2941 = ssub.s32 %s20, 2
        // Predicated region
        $region61: #{tpu_custom_call.1} parent=59 // pred_check
          %p2942 = pneg %p197
        $region62: #{tpu_custom_call.1} parent=59 // pred_check_branch
          %2944 = sbr.rel (%p2942) target = $region64
        $region63: #{tpu_custom_call.1} parent=59 // pred_region
          %s2945 = sand.u32 %s182, 1
          %s2946 = scalar_lea.sflag [#allocation7], %s2945
          %s2947 = sand.u32 %s182, 1
          %s2948 = smul.addr %s2947, 16
          %s2949 = scalar_lea.vmem [#allocation11], %s2948
          %2951 = dma.done %s2946, 256
        $region64: #{tpu_custom_call.1} parent=59 // pred_fallthru
          _
      $region60: #{tpu_custom_call.1} parent=5 // pred_fallthru
        _
    $region6: #{tpu_custom_call.1} parent=1 // loop_footer
      %s24 = sadd.s32 1, %s20
    $region7: #{tpu_custom_call.1} parent=1 // loop_footer_branch
      %19 = sbr.rel target = $region3
    $region8: #{tpu_custom_call.1} parent=1 // loop_exit
      _
    %2952 = vsyncpa [#allocation6], 1
    %s2953 = scalar_lea.sflag [#allocation6], 1
    %2954 = vsyncpa %s2953, 1
    %2955 = vsyncpa [#allocation9], 1
    %s2956 = scalar_lea.sflag [#allocation9], 1
    %2957 = vsyncpa %s2956, 1
    %2958 = vsyncpa [#allocation7], 1
    %s2959 = scalar_lea.sflag [#allocation7], 1
    %2960 = vsyncpa %s2959, 1

</llo_original>
